<compile_context>
chip_gen: v7x
topology: tpu7x:2x2x1
jax: 0.10.0
libtpu: 0.0.40
codegen_flags: <defaults>
</compile_context>

<pallas_src>
import functools

import jax
import jax.numpy as jnp
import numpy as np
from jax import lax
from jax.experimental import pallas as pl
from jax.experimental.pallas import tpu as pltpu


# ---------------------------------------------------------------------------
# Kernel 1: tiled (M, K) @ (K, N) + bias  — layer-0 input projection
# ---------------------------------------------------------------------------
def _matmul_bias_kernel(x_ref, w_ref, b_ref, o_ref, acc_ref, *, tk):
    """grid = (N//tn, K//tk).  x is resident (full (M, K) block); the weight
    streams through VMEM in (tk, tn) tiles; bias is folded into the k==0
    accumulator init; the output tile is written once on the last K step."""
    k = pl.program_id(1)

    @pl.when(k == 0)
    def _():
        acc_ref[...] = jnp.broadcast_to(b_ref[...], acc_ref.shape)

    off = pl.multiple_of(k * tk, 128)
    xk = x_ref[:, pl.ds(off, tk)]
    acc_ref[...] += jnp.dot(
        xk.astype(jnp.bfloat16), w_ref[...], preferred_element_type=jnp.float32
    )

    @pl.when(k == pl.num_programs(1) - 1)
    def _():
        o_ref[...] = acc_ref[...].astype(o_ref.dtype)


def matmul_bias(x, w_t, b, *, tk=None, tn=None):
    """x: (M, K) f32, w_t: (K, N) bf16, b: (1, N) f32 -> (M, N) f32."""
    M, K = x.shape
    Kw, N = w_t.shape
    assert K == Kw
    tk = min(K, 4096) if tk is None else tk   # 8 MiB bf16 weight tile at tn=1024
    tn = min(N, 1024) if tn is None else tn   # keep N//tn >= 2 at real shapes
    assert K % tk == 0 and N % tn == 0

    kernel = functools.partial(_matmul_bias_kernel, tk=tk)
    return pl.pallas_call(
        kernel,
        out_shape=jax.ShapeDtypeStruct((M, N), jnp.float32),
        grid=(N // tn, K // tk),
        in_specs=[
            pl.BlockSpec((M, K), lambda j, k: (0, 0)),    # x resident in VMEM
            pl.BlockSpec((tk, tn), lambda j, k: (k, j)),  # streamed weight tile
            pl.BlockSpec((1, tn), lambda j, k: (0, j)),   # bias tile
        ],
        out_specs=pl.BlockSpec((M, tn), lambda j, k: (0, j)),
        scratch_shapes=[pltpu.VMEM((M, tn), jnp.float32)],
        compiler_params=pltpu.CompilerParams(
            dimension_semantics=("parallel", "arbitrary"),
            vmem_limit_bytes=48 * 1024 * 1024,  # fits v7x (64 MiB phys), needed on v5e
        ),
    )(x, w_t, b)


# ---------------------------------------------------------------------------
# Kernel 2: fused tail — layer-0 recurrence + layer-1 proj + recurrence + fc
# ---------------------------------------------------------------------------
def _lstm_tail_kernel(gx0_ref, whh0_ref, wih1_ref, b1_ref, whh1_ref,
                      fcw_ref, fcb_ref, out_ref):
    """All small weights resident in VMEM.  One fori_loop over the S steps,
    (h, c) for both layers carried as loop-carry values (vregs)."""
    S, B, _ = gx0_ref.shape
    H = whh0_ref.shape[0]

    def cell(gates, c_prev):
        i = jax.nn.sigmoid(gates[:, 0 * H:1 * H])
        f = jax.nn.sigmoid(gates[:, 1 * H:2 * H])
        g = jnp.tanh(gates[:, 2 * H:3 * H])
        o = jax.nn.sigmoid(gates[:, 3 * H:4 * H])
        c = f * c_prev + i * g
        return o * jnp.tanh(c), c

    def step(t, carry):
        h0, c0, h1, c1 = carry
        # Layer 0 recurrence (input projection precomputed in gx0).
        g0 = gx0_ref[t] + jnp.dot(
            h0.astype(jnp.bfloat16), whh0_ref[...],
            preferred_element_type=jnp.float32)
        h0, c0 = cell(g0, c0)
        # TODO(synk): inter-layer dropout(p=0.5) is training-only; identity here.
        # Layer 1: input projection + recurrence, weights resident in VMEM.
        g1 = (b1_ref[...]
              + jnp.dot(h0.astype(jnp.bfloat16), wih1_ref[...],
                        preferred_element_type=jnp.float32)
              + jnp.dot(h1.astype(jnp.bfloat16), whh1_ref[...],
                        preferred_element_type=jnp.float32))
        h1, c1 = cell(g1, c1)
        # FC head (lane-padded output columns).
        out_ref[t] = (jnp.dot(h1.astype(jnp.bfloat16), fcw_ref[...],
                              preferred_element_type=jnp.float32)
                      + fcb_ref[...]).astype(out_ref.dtype)
        return (h0, c0, h1, c1)

    z = jnp.zeros((B, H), jnp.float32)
    lax.fori_loop(0, S, step, (z, z, z, z), unroll=True)  # S is small (=4)


def lstm_tail(gx0, whh0, wih1, b1, whh1, fcw, fcb):
    """gx0: (S, B, 4H) f32 -> (S, B, OUT_PAD) f32."""
    S, B, G = gx0.shape
    H = whh0.shape[0]
    OUTP = fcw.shape[1]
    return pl.pallas_call(
        _lstm_tail_kernel,
        out_shape=jax.ShapeDtypeStruct((S, B, OUTP), jnp.float32),
        in_specs=[
            pl.BlockSpec((S, B, G), lambda: (0, 0, 0)),
            pl.BlockSpec((H, G), lambda: (0, 0)),
            pl.BlockSpec((H, G), lambda: (0, 0)),
            pl.BlockSpec((1, G), lambda: (0, 0)),
            pl.BlockSpec((H, G), lambda: (0, 0)),
            pl.BlockSpec((H, OUTP), lambda: (0, 0)),
            pl.BlockSpec((1, OUTP), lambda: (0, 0)),
        ],
        out_specs=pl.BlockSpec((S, B, OUTP), lambda: (0, 0, 0)),
        compiler_params=pltpu.CompilerParams(
            vmem_limit_bytes=32 * 1024 * 1024,
        ),
    )(gx0, whh0, wih1, b1, whh1, fcw, fcb)


# ---------------------------------------------------------------------------
# Forward pass (mirrors lstm.forward)
# ---------------------------------------------------------------------------
@functools.partial(jax.jit, static_argnames=("out_features",))
def lstm_forward(x, params, *, out_features):
    """x: (B, S, IN) -> (B, S, OUT)."""
    xt = jnp.transpose(x, (1, 0, 2))          # torch's x.permute(1, 0, 2)
    S, B, IN = xt.shape
    layers = params["lstm"]
    assert len(layers) == 2                    # module spec: num_layer=2
    l0, l1 = layers
    H = l0["whh_t"].shape[0]

    # Hoisted layer-0 input projection (bias folded in).
    gx0 = matmul_bias(xt.reshape(S * B, IN), l0["wih_t"], l0["b"])
    gx0 = gx0.reshape(S, B, 4 * H)

    # Fused tail: both recurrences + layer-1 projection + fc head.
    out = lstm_tail(gx0, l0["whh_t"], l1["wih_t"], l1["b"], l1["whh_t"],
                    params["fc_w_t"], params["fc_b"])

    out = out[:, :, :out_features]            # drop lane padding
    return jnp.transpose(out, (1, 0, 2))      # x.permute(1, 0, 2)


# ---------------------------------------------------------------------------
# Deterministic parameter construction (PyTorch-style uniform init)
# ---------------------------------------------------------------------------
def make_params(key, input_size, hidden_size, output_size, num_layers):
    k = 1.0 / np.sqrt(hidden_size)
    params = {"lstm": []}
    for layer in range(num_layers):
        in_sz = input_size if layer == 0 else hidden_size
        key, k1, k2, k3, k4 = jax.random.split(key, 5)
        w_ih = jax.random.uniform(k1, (4 * hidden_size, in_sz), jnp.float32, -k, k)
        w_hh = jax.random.uniform(k2, (4 * hidden_size, hidden_size), jnp.float32, -k, k)
        b_ih = jax.random.uniform(k3, (4 * hidden_size,), jnp.float32, -k, k)
        b_hh = jax.random.uniform(k4, (4 * hidden_size,), jnp.float32, -k, k)
        params["lstm"].append(
            dict(
                wih_t=w_ih.T.astype(jnp.bfloat16),   # (IN, 4H) bf16
                whh_t=w_hh.T.astype(jnp.bfloat16),   # (H, 4H)  bf16
                b=(b_ih + b_hh)[None, :],            # (1, 4H)  f32 combined bias
            )
        )
    key, k5, k6 = jax.random.split(key, 3)
    kf = 1.0 / np.sqrt(hidden_size)
    fc_w = jax.random.uniform(k5, (output_size, hidden_size), jnp.float32, -kf, kf)
    fc_b = jax.random.uniform(k6, (output_size,), jnp.float32, -kf, kf)
    out_pad = ((output_size + 127) // 128) * 128     # lane-dense head
    fc_w_t = jnp.zeros((hidden_size, out_pad), jnp.float32).at[:, :output_size].set(fc_w.T)
    fc_b_p = jnp.zeros((1, out_pad), jnp.float32).at[0, :output_size].set(fc_b)
    params["fc_w_t"] = fc_w_t.astype(jnp.bfloat16)
    params["fc_b"] = fc_b_p
    return params


# ---------------------------------------------------------------------------
# Pure-JAX reference with identical numerics (bf16 weights, f32 accumulation)
# ---------------------------------------------------------------------------
def reference_forward(x, params, out_features):
    xt = jnp.transpose(x, (1, 0, 2))
    S, B, IN = xt.shape
    l0, l1 = params["lstm"]
    H = l0["whh_t"].shape[0]
    gx0 = (
        jnp.dot(xt.reshape(S * B, IN).astype(jnp.bfloat16), l0["wih_t"],
                preferred_element_type=jnp.float32)
        + l0["b"]
    ).reshape(S, B, 4 * H)

    def cell(gates, c_prev):
        i = jax.nn.sigmoid(gates[:, 0 * H:1 * H])
        f = jax.nn.sigmoid(gates[:, 1 * H:2 * H])
        g = jnp.tanh(gates[:, 2 * H:3 * H])
        o = jax.nn.sigmoid(gates[:, 3 * H:4 * H])
        c = f * c_prev + i * g
        return o * jnp.tanh(c), c

    def step(carry, g0_t):
        h0, c0, h1, c1 = carry
        g0 = g0_t + jnp.dot(h0.astype(jnp.bfloat16), l0["whh_t"],
                            preferred_element_type=jnp.float32)
        h0, c0 = cell(g0, c0)
        g1 = (l1["b"]
              + jnp.dot(h0.astype(jnp.bfloat16), l1["wih_t"],
                        preferred_element_type=jnp.float32)
              + jnp.dot(h1.astype(jnp.bfloat16), l1["whh_t"],
                        preferred_element_type=jnp.float32))
        h1, c1 = cell(g1, c1)
        y = jnp.dot(h1.astype(jnp.bfloat16), params["fc_w_t"],
                    preferred_element_type=jnp.float32) + params["fc_b"]
        return (h0, c0, h1, c1), y

    z = jnp.zeros((B, H), jnp.float32)
    _, ys = lax.scan(step, (z, z, z, z), gx0)        # (S, B, OUT_PAD)
    ys = ys[:, :, :out_features]
    return jnp.transpose(ys, (1, 0, 2))


if __name__ == "__main__":
    # Small shapes consistent with the module (original: B=2, S=4, IN=16384,
    # H=512, OUT=100, 2 layers) — scaled down for a quick synthetic run.
    BATCH, SEQ = 2, 4
    INPUT_SIZE, HIDDEN_SIZE, OUTPUT_SIZE, NUM_LAYERS = 512, 128, 100, 2

    key = jax.random.PRNGKey(0)
    key, kx, kp = jax.random.split(key, 3)
    x = jax.random.normal(kx, (BATCH, SEQ, INPUT_SIZE), jnp.float32)
    params = make_params(kp, INPUT_SIZE, HIDDEN_SIZE, OUTPUT_SIZE, NUM_LAYERS)

    out = lstm_forward(x, params, out_features=OUTPUT_SIZE)
    jax.block_until_ready(out)
    assert out.shape == (BATCH, SEQ, OUTPUT_SIZE), out.shape

    ref = reference_forward(x, params, OUTPUT_SIZE)
    np.testing.assert_allclose(np.asarray(out), np.asarray(ref), rtol=2e-3, atol=2e-3)

    print("KERNEL_OK")
</pallas_src>

<mosaic_0001>
module attributes {stable_mosaic.version = 11 : i64} {
  func.func @_matmul_bias_kernel(%arg0: i32, %arg1: i32, %arg2: memref<8x512xf32, #tpu.memory_space<vmem>>, %arg3: memref<512x512xbf16, #tpu.memory_space<vmem>>, %arg4: memref<1x512xf32, #tpu.memory_space<vmem>>, %arg5: memref<8x512xf32, #tpu.memory_space<vmem>>, %arg6: memref<8x512xf32, #tpu.memory_space<vmem>>) attributes {dimension_semantics = [#tpu.dimension_semantics<parallel>, #tpu.dimension_semantics<arbitrary>], iteration_bounds = array<i64: 1, 1>, scalar_prefetch = 0 : i64, scratch_operands = 1 : i64, tpu.core_type = #tpu.core_type<tc>, window_params = [{pipeline_mode = #tpu.pipeline_mode<synchronous>, transform_indices = @transform_0, window_bounds = array<i64: 8, 512>}, {transform_indices = @transform_1, window_bounds = array<i64: 512, 512>}, {transform_indices = @transform_2, window_bounds = array<i64: 1, 512>}, {transform_indices = @transform_3, window_bounds = array<i64: 8, 512>}]} {
    %c0_i32 = arith.constant 0 : i32
    %0 = arith.cmpi eq, %arg1, %c0_i32 : i32
    %1 = arith.extui %0 : i1 to i32
    %c0_i32_0 = arith.constant 0 : i32
    %2 = arith.cmpi ne, %1, %c0_i32_0 : i32
    scf.if %2 {
      %c0_9 = arith.constant 0 : index
      %c0_10 = arith.constant 0 : index
      %16 = vector.load %arg4[%c0_9, %c0_10] : memref<1x512xf32, #tpu.memory_space<vmem>>, vector<1x512xf32>
      %17 = vector.shape_cast %16 : vector<1x512xf32> to vector<1x512xf32>
      %18 = vector.broadcast %17 : vector<1x512xf32> to vector<8x512xf32>
      %c0_11 = arith.constant 0 : index
      %c0_12 = arith.constant 0 : index
      %19 = vector.load %arg6[%c0_11, %c0_12] : memref<8x512xf32, #tpu.memory_space<vmem>>, vector<8x512xf32>
      tpu.vector_store %arg6[%c0_11, %c0_12], %18 {strides = array<i32>} : memref<8x512xf32, #tpu.memory_space<vmem>>, vector<8x512xf32>,
    } else {
    }
    %c512_i32 = arith.constant 512 : i32
    %3 = arith.muli %arg1, %c512_i32 : i32
    %4 = tpu.assume_multiple %3, 128 : i32
    %c0 = arith.constant 0 : index
    %5 = arith.index_cast %4 : i32 to index
    %6 = vector.load %arg2[%c0, %5] : memref<8x512xf32, #tpu.memory_space<vmem>>, vector<8x512xf32>
    %c0_1 = arith.constant 0 : index
    %c0_2 = arith.constant 0 : index
    %7 = vector.load %arg6[%c0_1, %c0_2] : memref<8x512xf32, #tpu.memory_space<vmem>>, vector<8x512xf32>
    %8 = arith.truncf %6 : vector<8x512xf32> to vector<8x512xbf16>
    %c0_3 = arith.constant 0 : index
    %c0_4 = arith.constant 0 : index
    %9 = vector.load %arg3[%c0_3, %c0_4] : memref<512x512xbf16, #tpu.memory_space<vmem>>, vector<512x512xbf16>
    %cst = arith.constant dense<0.000000e+00> : vector<8x512xf32>
    %10 = tpu.matmul %8, %9, %cst {dimension_numbers = #tpu.dot_dimension_numbers<[1], [0], [0], [1], [0, 0, 1, 1], [], []>} : vector<8x512xbf16>, vector<512x512xbf16>, vector<8x512xf32> -> vector<8x512xf32>
    %11 = arith.addf %7, %10 : vector<8x512xf32>
    %c0_5 = arith.constant 0 : index
    %c0_6 = arith.constant 0 : index
    %12 = vector.load %arg6[%c0_5, %c0_6] : memref<8x512xf32, #tpu.memory_space<vmem>>, vector<8x512xf32>
    tpu.vector_store %arg6[%c0_5, %c0_6], %11 {strides = array<i32>} : memref<8x512xf32, #tpu.memory_space<vmem>>, vector<8x512xf32>,
    %c0_i32_7 = arith.constant 0 : i32
    %13 = arith.cmpi eq, %arg1, %c0_i32_7 : i32
    %14 = arith.extui %13 : i1 to i32
    %c0_i32_8 = arith.constant 0 : i32
    %15 = arith.cmpi ne, %14, %c0_i32_8 : i32
    scf.if %15 {
      %c0_9 = arith.constant 0 : index
      %c0_10 = arith.constant 0 : index
      %16 = vector.load %arg6[%c0_9, %c0_10] : memref<8x512xf32, #tpu.memory_space<vmem>>, vector<8x512xf32>
      %c0_11 = arith.constant 0 : index
      %c0_12 = arith.constant 0 : index
      %17 = vector.load %arg5[%c0_11, %c0_12] : memref<8x512xf32, #tpu.memory_space<vmem>>, vector<8x512xf32>
      tpu.vector_store %arg5[%c0_11, %c0_12], %16 {strides = array<i32>} : memref<8x512xf32, #tpu.memory_space<vmem>>, vector<8x512xf32>,
    } else {
    }
    return
  }
  func.func @transform_0(%arg0: i32, %arg1: i32) -> (i32, i32) {
    %c0_i32 = arith.constant 0 : i32
    %c0_i32_0 = arith.constant 0 : i32
    %c0_i32_1 = arith.constant 0 : i32
    return %c0_i32, %c0_i32_0 : i32, i32
  }
  func.func @transform_1(%arg0: i32, %arg1: i32) -> (i32, i32) {
    %c0_i32 = arith.constant 0 : i32
    return %arg1, %arg0 : i32, i32
  }
  func.func @transform_2(%arg0: i32, %arg1: i32) -> (i32, i32) {
    %c0_i32 = arith.constant 0 : i32
    %c0_i32_0 = arith.constant 0 : i32
    return %c0_i32, %arg0 : i32, i32
  }
  func.func @transform_3(%arg0: i32, %arg1: i32) -> (i32, i32) {
    %c0_i32 = arith.constant 0 : i32
    %c0_i32_0 = arith.constant 0 : i32
    return %c0_i32, %arg0 : i32, i32
  }
}

module attributes {stable_mosaic.version = 11 : i64} {
  func.func @_lstm_tail_kernel(%arg0: memref<4x2x512xf32, #tpu.memory_space<vmem>>, %arg1: memref<128x512xbf16, #tpu.memory_space<vmem>>, %arg2: memref<128x512xbf16, #tpu.memory_space<vmem>>, %arg3: memref<1x512xf32, #tpu.memory_space<vmem>>, %arg4: memref<128x512xbf16, #tpu.memory_space<vmem>>, %arg5: memref<128x128xbf16, #tpu.memory_space<vmem>>, %arg6: memref<1x128xf32, #tpu.memory_space<vmem>>, %arg7: memref<4x2x128xf32, #tpu.memory_space<vmem>>) attributes {dimension_semantics = [], scalar_prefetch = 0 : i64, scratch_operands = 0 : i64, tpu.core_type = #tpu.core_type<tc>} {
    %cst = arith.constant 0.000000e+00 : f32
    %0 = vector.broadcast %cst : f32 to vector<2x128xf32>
    %c0_i32 = arith.constant 0 : i32
    %1 = arith.index_cast %c0_i32 : i32 to index
    %c0 = arith.constant 0 : index
    %c0_0 = arith.constant 0 : index
    %2 = vector.load %arg0[%1, %c0, %c0_0] : memref<4x2x512xf32, #tpu.memory_space<vmem>>, vector<1x2x512xf32>
    %3 = vector.shape_cast %2 : vector<1x2x512xf32> to vector<2x512xf32>
    %4 = arith.truncf %0 : vector<2x128xf32> to vector<2x128xbf16>
    %c0_1 = arith.constant 0 : index
    %c0_2 = arith.constant 0 : index
    %5 = vector.load %arg1[%c0_1, %c0_2] : memref<128x512xbf16, #tpu.memory_space<vmem>>, vector<128x512xbf16>
    %cst_3 = arith.constant dense<0.000000e+00> : vector<2x512xf32>
    %6 = tpu.matmul %4, %5, %cst_3 {dimension_numbers = #tpu.dot_dimension_numbers<[1], [0], [0], [1], [0, 0, 1, 1], [], []>} : vector<2x128xbf16>, vector<128x512xbf16>, vector<2x512xf32> -> vector<2x512xf32>
    %7 = arith.addf %3, %6 : vector<2x512xf32>
    %8 = vector.extract_strided_slice %7 {offsets = [0, 0], sizes = [2, 128], strides = [1, 1]} : vector<2x512xf32> to vector<2x128xf32>
    %9 = arith.negf %8 : vector<2x128xf32>
    %10 = math.exp %9 : vector<2x128xf32>
    %cst_4 = arith.constant 1.000000e+00 : f32
    %11 = vector.broadcast %cst_4 : f32 to vector<2x128xf32>
    %12 = arith.addf %11, %10 : vector<2x128xf32>
    %13 = arith.divf %11, %12 : vector<2x128xf32>
    %14 = vector.extract_strided_slice %7 {offsets = [0, 128], sizes = [2, 128], strides = [1, 1]} : vector<2x512xf32> to vector<2x128xf32>
    %15 = arith.negf %14 : vector<2x128xf32>
    %16 = math.exp %15 : vector<2x128xf32>
    %cst_5 = arith.constant 1.000000e+00 : f32
    %17 = vector.broadcast %cst_5 : f32 to vector<2x128xf32>
    %18 = arith.addf %17, %16 : vector<2x128xf32>
    %19 = arith.divf %17, %18 : vector<2x128xf32>
    %20 = vector.extract_strided_slice %7 {offsets = [0, 256], sizes = [2, 128], strides = [1, 1]} : vector<2x512xf32> to vector<2x128xf32>
    %21 = math.tanh %20 : vector<2x128xf32>
    %22 = vector.extract_strided_slice %7 {offsets = [0, 384], sizes = [2, 128], strides = [1, 1]} : vector<2x512xf32> to vector<2x128xf32>
    %23 = arith.negf %22 : vector<2x128xf32>
    %24 = math.exp %23 : vector<2x128xf32>
    %cst_6 = arith.constant 1.000000e+00 : f32
    %25 = vector.broadcast %cst_6 : f32 to vector<2x128xf32>
    %26 = arith.addf %25, %24 : vector<2x128xf32>
    %27 = arith.divf %25, %26 : vector<2x128xf32>
    %28 = arith.mulf %19, %0 : vector<2x128xf32>
    %29 = arith.mulf %13, %21 : vector<2x128xf32>
    %30 = arith.addf %28, %29 : vector<2x128xf32>
    %31 = math.tanh %30 : vector<2x128xf32>
    %32 = arith.mulf %27, %31 : vector<2x128xf32>
    %c0_7 = arith.constant 0 : index
    %c0_8 = arith.constant 0 : index
    %33 = vector.load %arg3[%c0_7, %c0_8] : memref<1x512xf32, #tpu.memory_space<vmem>>, vector<1x512xf32>
    %34 = arith.truncf %32 : vector<2x128xf32> to vector<2x128xbf16>
    %c0_9 = arith.constant 0 : index
    %c0_10 = arith.constant 0 : index
    %35 = vector.load %arg2[%c0_9, %c0_10] : memref<128x512xbf16, #tpu.memory_space<vmem>>, vector<128x512xbf16>
    %cst_11 = arith.constant dense<0.000000e+00> : vector<2x512xf32>
    %36 = tpu.matmul %34, %35, %cst_11 {dimension_numbers = #tpu.dot_dimension_numbers<[1], [0], [0], [1], [0, 0, 1, 1], [], []>} : vector<2x128xbf16>, vector<128x512xbf16>, vector<2x512xf32> -> vector<2x512xf32>
    %37 = vector.broadcast %33 : vector<1x512xf32> to vector<2x512xf32>
    %38 = arith.addf %37, %36 : vector<2x512xf32>
    %39 = arith.truncf %0 : vector<2x128xf32> to vector<2x128xbf16>
    %c0_12 = arith.constant 0 : index
    %c0_13 = arith.constant 0 : index
    %40 = vector.load %arg4[%c0_12, %c0_13] : memref<128x512xbf16, #tpu.memory_space<vmem>>, vector<128x512xbf16>
    %cst_14 = arith.constant dense<0.000000e+00> : vector<2x512xf32>
    %41 = tpu.matmul %39, %40, %cst_14 {dimension_numbers = #tpu.dot_dimension_numbers<[1], [0], [0], [1], [0, 0, 1, 1], [], []>} : vector<2x128xbf16>, vector<128x512xbf16>, vector<2x512xf32> -> vector<2x512xf32>
    %42 = arith.addf %38, %41 : vector<2x512xf32>
    %43 = vector.extract_strided_slice %42 {offsets = [0, 0], sizes = [2, 128], strides = [1, 1]} : vector<2x512xf32> to vector<2x128xf32>
    %44 = arith.negf %43 : vector<2x128xf32>
    %45 = math.exp %44 : vector<2x128xf32>
    %cst_15 = arith.constant 1.000000e+00 : f32
    %46 = vector.broadcast %cst_15 : f32 to vector<2x128xf32>
    %47 = arith.addf %46, %45 : vector<2x128xf32>
    %48 = arith.divf %46, %47 : vector<2x128xf32>
    %49 = vector.extract_strided_slice %42 {offsets = [0, 128], sizes = [2, 128], strides = [1, 1]} : vector<2x512xf32> to vector<2x128xf32>
    %50 = arith.negf %49 : vector<2x128xf32>
    %51 = math.exp %50 : vector<2x128xf32>
    %cst_16 = arith.constant 1.000000e+00 : f32
    %52 = vector.broadcast %cst_16 : f32 to vector<2x128xf32>
    %53 = arith.addf %52, %51 : vector<2x128xf32>
    %54 = arith.divf %52, %53 : vector<2x128xf32>
    %55 = vector.extract_strided_slice %42 {offsets = [0, 256], sizes = [2, 128], strides = [1, 1]} : vector<2x512xf32> to vector<2x128xf32>
    %56 = math.tanh %55 : vector<2x128xf32>
    %57 = vector.extract_strided_slice %42 {offsets = [0, 384], sizes = [2, 128], strides = [1, 1]} : vector<2x512xf32> to vector<2x128xf32>
    %58 = arith.negf %57 : vector<2x128xf32>
    %59 = math.exp %58 : vector<2x128xf32>
    %cst_17 = arith.constant 1.000000e+00 : f32
    %60 = vector.broadcast %cst_17 : f32 to vector<2x128xf32>
    %61 = arith.addf %60, %59 : vector<2x128xf32>
    %62 = arith.divf %60, %61 : vector<2x128xf32>
    %63 = arith.mulf %54, %0 : vector<2x128xf32>
    %64 = arith.mulf %48, %56 : vector<2x128xf32>
    %65 = arith.addf %63, %64 : vector<2x128xf32>
    %66 = math.tanh %65 : vector<2x128xf32>
    %67 = arith.mulf %62, %66 : vector<2x128xf32>
    %68 = arith.truncf %67 : vector<2x128xf32> to vector<2x128xbf16>
    %c0_18 = arith.constant 0 : index
    %c0_19 = arith.constant 0 : index
    %69 = vector.load %arg5[%c0_18, %c0_19] : memref<128x128xbf16, #tpu.memory_space<vmem>>, vector<128x128xbf16>
    %cst_20 = arith.constant dense<0.000000e+00> : vector<2x128xf32>
    %70 = tpu.matmul %68, %69, %cst_20 {dimension_numbers = #tpu.dot_dimension_numbers<[1], [0], [0], [1], [0, 0, 1, 1], [], []>} : vector<2x128xbf16>, vector<128x128xbf16>, vector<2x128xf32> -> vector<2x128xf32>
    %c0_21 = arith.constant 0 : index
    %c0_22 = arith.constant 0 : index
    %71 = vector.load %arg6[%c0_21, %c0_22] : memref<1x128xf32, #tpu.memory_space<vmem>>, vector<1x128xf32>
    %72 = vector.broadcast %71 : vector<1x128xf32> to vector<2x128xf32>
    %73 = arith.addf %70, %72 : vector<2x128xf32>
    %74 = arith.index_cast %c0_i32 : i32 to index
    %c0_23 = arith.constant 0 : index
    %c0_24 = arith.constant 0 : index
    %75 = vector.load %arg7[%74, %c0_23, %c0_24] : memref<4x2x128xf32, #tpu.memory_space<vmem>>, vector<1x2x128xf32>
    %76 = vector.shape_cast %75 : vector<1x2x128xf32> to vector<2x128xf32>
    %77 = vector.shape_cast %73 : vector<2x128xf32> to vector<1x2x128xf32>
    tpu.vector_store %arg7[%74, %c0_23, %c0_24], %77 {strides = array<i32>} : memref<4x2x128xf32, #tpu.memory_space<vmem>>, vector<1x2x128xf32>,
    %c1_i32 = arith.constant 1 : i32
    %78 = arith.index_cast %c1_i32 : i32 to index
    %c0_25 = arith.constant 0 : index
    %c0_26 = arith.constant 0 : index
    %79 = vector.load %arg0[%78, %c0_25, %c0_26] : memref<4x2x512xf32, #tpu.memory_space<vmem>>, vector<1x2x512xf32>
    %80 = vector.shape_cast %79 : vector<1x2x512xf32> to vector<2x512xf32>
    %81 = arith.truncf %32 : vector<2x128xf32> to vector<2x128xbf16>
    %c0_27 = arith.constant 0 : index
    %c0_28 = arith.constant 0 : index
    %82 = vector.load %arg1[%c0_27, %c0_28] : memref<128x512xbf16, #tpu.memory_space<vmem>>, vector<128x512xbf16>
    %cst_29 = arith.constant dense<0.000000e+00> : vector<2x512xf32>
    %83 = tpu.matmul %81, %82, %cst_29 {dimension_numbers = #tpu.dot_dimension_numbers<[1], [0], [0], [1], [0, 0, 1, 1], [], []>} : vector<2x128xbf16>, vector<128x512xbf16>, vector<2x512xf32> -> vector<2x512xf32>
    %84 = arith.addf %80, %83 : vector<2x512xf32>
    %85 = vector.extract_strided_slice %84 {offsets = [0, 0], sizes = [2, 128], strides = [1, 1]} : vector<2x512xf32> to vector<2x128xf32>
    %86 = arith.negf %85 : vector<2x128xf32>
    %87 = math.exp %86 : vector<2x128xf32>
    %cst_30 = arith.constant 1.000000e+00 : f32
    %88 = vector.broadcast %cst_30 : f32 to vector<2x128xf32>
    %89 = arith.addf %88, %87 : vector<2x128xf32>
    %90 = arith.divf %88, %89 : vector<2x128xf32>
    %91 = vector.extract_strided_slice %84 {offsets = [0, 128], sizes = [2, 128], strides = [1, 1]} : vector<2x512xf32> to vector<2x128xf32>
    %92 = arith.negf %91 : vector<2x128xf32>
    %93 = math.exp %92 : vector<2x128xf32>
    %cst_31 = arith.constant 1.000000e+00 : f32
    %94 = vector.broadcast %cst_31 : f32 to vector<2x128xf32>
    %95 = arith.addf %94, %93 : vector<2x128xf32>
    %96 = arith.divf %94, %95 : vector<2x128xf32>
    %97 = vector.extract_strided_slice %84 {offsets = [0, 256], sizes = [2, 128], strides = [1, 1]} : vector<2x512xf32> to vector<2x128xf32>
    %98 = math.tanh %97 : vector<2x128xf32>
    %99 = vector.extract_strided_slice %84 {offsets = [0, 384], sizes = [2, 128], strides = [1, 1]} : vector<2x512xf32> to vector<2x128xf32>
    %100 = arith.negf %99 : vector<2x128xf32>
    %101 = math.exp %100 : vector<2x128xf32>
    %cst_32 = arith.constant 1.000000e+00 : f32
    %102 = vector.broadcast %cst_32 : f32 to vector<2x128xf32>
    %103 = arith.addf %102, %101 : vector<2x128xf32>
    %104 = arith.divf %102, %103 : vector<2x128xf32>
    %105 = arith.mulf %96, %30 : vector<2x128xf32>
    %106 = arith.mulf %90, %98 : vector<2x128xf32>
    %107 = arith.addf %105, %106 : vector<2x128xf32>
    %108 = math.tanh %107 : vector<2x128xf32>
    %109 = arith.mulf %104, %108 : vector<2x128xf32>
    %c0_33 = arith.constant 0 : index
    %c0_34 = arith.constant 0 : index
    %110 = vector.load %arg3[%c0_33, %c0_34] : memref<1x512xf32, #tpu.memory_space<vmem>>, vector<1x512xf32>
    %111 = arith.truncf %109 : vector<2x128xf32> to vector<2x128xbf16>
    %c0_35 = arith.constant 0 : index
    %c0_36 = arith.constant 0 : index
    %112 = vector.load %arg2[%c0_35, %c0_36] : memref<128x512xbf16, #tpu.memory_space<vmem>>, vector<128x512xbf16>
    %cst_37 = arith.constant dense<0.000000e+00> : vector<2x512xf32>
    %113 = tpu.matmul %111, %112, %cst_37 {dimension_numbers = #tpu.dot_dimension_numbers<[1], [0], [0], [1], [0, 0, 1, 1], [], []>} : vector<2x128xbf16>, vector<128x512xbf16>, vector<2x512xf32> -> vector<2x512xf32>
    %114 = vector.broadcast %110 : vector<1x512xf32> to vector<2x512xf32>
    %115 = arith.addf %114, %113 : vector<2x512xf32>
    %116 = arith.truncf %67 : vector<2x128xf32> to vector<2x128xbf16>
    %c0_38 = arith.constant 0 : index
    %c0_39 = arith.constant 0 : index
    %117 = vector.load %arg4[%c0_38, %c0_39] : memref<128x512xbf16, #tpu.memory_space<vmem>>, vector<128x512xbf16>
    %cst_40 = arith.constant dense<0.000000e+00> : vector<2x512xf32>
    %118 = tpu.matmul %116, %117, %cst_40 {dimension_numbers = #tpu.dot_dimension_numbers<[1], [0], [0], [1], [0, 0, 1, 1], [], []>} : vector<2x128xbf16>, vector<128x512xbf16>, vector<2x512xf32> -> vector<2x512xf32>
    %119 = arith.addf %115, %118 : vector<2x512xf32>
    %120 = vector.extract_strided_slice %119 {offsets = [0, 0], sizes = [2, 128], strides = [1, 1]} : vector<2x512xf32> to vector<2x128xf32>
    %121 = arith.negf %120 : vector<2x128xf32>
    %122 = math.exp %121 : vector<2x128xf32>
    %cst_41 = arith.constant 1.000000e+00 : f32
    %123 = vector.broadcast %cst_41 : f32 to vector<2x128xf32>
    %124 = arith.addf %123, %122 : vector<2x128xf32>
    %125 = arith.divf %123, %124 : vector<2x128xf32>
    %126 = vector.extract_strided_slice %119 {offsets = [0, 128], sizes = [2, 128], strides = [1, 1]} : vector<2x512xf32> to vector<2x128xf32>
    %127 = arith.negf %126 : vector<2x128xf32>
    %128 = math.exp %127 : vector<2x128xf32>
    %cst_42 = arith.constant 1.000000e+00 : f32
    %129 = vector.broadcast %cst_42 : f32 to vector<2x128xf32>
    %130 = arith.addf %129, %128 : vector<2x128xf32>
    %131 = arith.divf %129, %130 : vector<2x128xf32>
    %132 = vector.extract_strided_slice %119 {offsets = [0, 256], sizes = [2, 128], strides = [1, 1]} : vector<2x512xf32> to vector<2x128xf32>
    %133 = math.tanh %132 : vector<2x128xf32>
    %134 = vector.extract_strided_slice %119 {offsets = [0, 384], sizes = [2, 128], strides = [1, 1]} : vector<2x512xf32> to vector<2x128xf32>
    %135 = arith.negf %134 : vector<2x128xf32>
    %136 = math.exp %135 : vector<2x128xf32>
    %cst_43 = arith.constant 1.000000e+00 : f32
    %137 = vector.broadcast %cst_43 : f32 to vector<2x128xf32>
    %138 = arith.addf %137, %136 : vector<2x128xf32>
    %139 = arith.divf %137, %138 : vector<2x128xf32>
    %140 = arith.mulf %131, %65 : vector<2x128xf32>
    %141 = arith.mulf %125, %133 : vector<2x128xf32>
    %142 = arith.addf %140, %141 : vector<2x128xf32>
    %143 = math.tanh %142 : vector<2x128xf32>
    %144 = arith.mulf %139, %143 : vector<2x128xf32>
    %145 = arith.truncf %144 : vector<2x128xf32> to vector<2x128xbf16>
    %c0_44 = arith.constant 0 : index
    %c0_45 = arith.constant 0 : index
    %146 = vector.load %arg5[%c0_44, %c0_45] : memref<128x128xbf16, #tpu.memory_space<vmem>>, vector<128x128xbf16>
    %cst_46 = arith.constant dense<0.000000e+00> : vector<2x128xf32>
    %147 = tpu.matmul %145, %146, %cst_46 {dimension_numbers = #tpu.dot_dimension_numbers<[1], [0], [0], [1], [0, 0, 1, 1], [], []>} : vector<2x128xbf16>, vector<128x128xbf16>, vector<2x128xf32> -> vector<2x128xf32>
    %c0_47 = arith.constant 0 : index
    %c0_48 = arith.constant 0 : index
    %148 = vector.load %arg6[%c0_47, %c0_48] : memref<1x128xf32, #tpu.memory_space<vmem>>, vector<1x128xf32>
    %149 = vector.broadcast %148 : vector<1x128xf32> to vector<2x128xf32>
    %150 = arith.addf %147, %149 : vector<2x128xf32>
    %151 = arith.index_cast %c1_i32 : i32 to index
    %c0_49 = arith.constant 0 : index
    %c0_50 = arith.constant 0 : index
    %152 = vector.load %arg7[%151, %c0_49, %c0_50] : memref<4x2x128xf32, #tpu.memory_space<vmem>>, vector<1x2x128xf32>
    %153 = vector.shape_cast %152 : vector<1x2x128xf32> to vector<2x128xf32>
    %154 = vector.shape_cast %150 : vector<2x128xf32> to vector<1x2x128xf32>
    tpu.vector_store %arg7[%151, %c0_49, %c0_50], %154 {strides = array<i32>} : memref<4x2x128xf32, #tpu.memory_space<vmem>>, vector<1x2x128xf32>,
    %c2_i32 = arith.constant 2 : i32
    %155 = arith.index_cast %c2_i32 : i32 to index
    %c0_51 = arith.constant 0 : index
    %c0_52 = arith.constant 0 : index
    %156 = vector.load %arg0[%155, %c0_51, %c0_52] : memref<4x2x512xf32, #tpu.memory_space<vmem>>, vector<1x2x512xf32>
    %157 = vector.shape_cast %156 : vector<1x2x512xf32> to vector<2x512xf32>
    %158 = arith.truncf %109 : vector<2x128xf32> to vector<2x128xbf16>
    %c0_53 = arith.constant 0 : index
    %c0_54 = arith.constant 0 : index
    %159 = vector.load %arg1[%c0_53, %c0_54] : memref<128x512xbf16, #tpu.memory_space<vmem>>, vector<128x512xbf16>
    %cst_55 = arith.constant dense<0.000000e+00> : vector<2x512xf32>
    %160 = tpu.matmul %158, %159, %cst_55 {dimension_numbers = #tpu.dot_dimension_numbers<[1], [0], [0], [1], [0, 0, 1, 1], [], []>} : vector<2x128xbf16>, vector<128x512xbf16>, vector<2x512xf32> -> vector<2x512xf32>
    %161 = arith.addf %157, %160 : vector<2x512xf32>
    %162 = vector.extract_strided_slice %161 {offsets = [0, 0], sizes = [2, 128], strides = [1, 1]} : vector<2x512xf32> to vector<2x128xf32>
    %163 = arith.negf %162 : vector<2x128xf32>
    %164 = math.exp %163 : vector<2x128xf32>
    %cst_56 = arith.constant 1.000000e+00 : f32
    %165 = vector.broadcast %cst_56 : f32 to vector<2x128xf32>
    %166 = arith.addf %165, %164 : vector<2x128xf32>
    %167 = arith.divf %165, %166 : vector<2x128xf32>
    %168 = vector.extract_strided_slice %161 {offsets = [0, 128], sizes = [2, 128], strides = [1, 1]} : vector<2x512xf32> to vector<2x128xf32>
    %169 = arith.negf %168 : vector<2x128xf32>
    %170 = math.exp %169 : vector<2x128xf32>
    %cst_57 = arith.constant 1.000000e+00 : f32
    %171 = vector.broadcast %cst_57 : f32 to vector<2x128xf32>
    %172 = arith.addf %171, %170 : vector<2x128xf32>
    %173 = arith.divf %171, %172 : vector<2x128xf32>
    %174 = vector.extract_strided_slice %161 {offsets = [0, 256], sizes = [2, 128], strides = [1, 1]} : vector<2x512xf32> to vector<2x128xf32>
    %175 = math.tanh %174 : vector<2x128xf32>
    %176 = vector.extract_strided_slice %161 {offsets = [0, 384], sizes = [2, 128], strides = [1, 1]} : vector<2x512xf32> to vector<2x128xf32>
    %177 = arith.negf %176 : vector<2x128xf32>
    %178 = math.exp %177 : vector<2x128xf32>
    %cst_58 = arith.constant 1.000000e+00 : f32
    %179 = vector.broadcast %cst_58 : f32 to vector<2x128xf32>
    %180 = arith.addf %179, %178 : vector<2x128xf32>
    %181 = arith.divf %179, %180 : vector<2x128xf32>
    %182 = arith.mulf %173, %107 : vector<2x128xf32>
    %183 = arith.mulf %167, %175 : vector<2x128xf32>
    %184 = arith.addf %182, %183 : vector<2x128xf32>
    %185 = math.tanh %184 : vector<2x128xf32>
    %186 = arith.mulf %181, %185 : vector<2x128xf32>
    %c0_59 = arith.constant 0 : index
    %c0_60 = arith.constant 0 : index
    %187 = vector.load %arg3[%c0_59, %c0_60] : memref<1x512xf32, #tpu.memory_space<vmem>>, vector<1x512xf32>
    %188 = arith.truncf %186 : vector<2x128xf32> to vector<2x128xbf16>
    %c0_61 = arith.constant 0 : index
    %c0_62 = arith.constant 0 : index
    %189 = vector.load %arg2[%c0_61, %c0_62] : memref<128x512xbf16, #tpu.memory_space<vmem>>, vector<128x512xbf16>
    %cst_63 = arith.constant dense<0.000000e+00> : vector<2x512xf32>
    %190 = tpu.matmul %188, %189, %cst_63 {dimension_numbers = #tpu.dot_dimension_numbers<[1], [0], [0], [1], [0, 0, 1, 1], [], []>} : vector<2x128xbf16>, vector<128x512xbf16>, vector<2x512xf32> -> vector<2x512xf32>
    %191 = vector.broadcast %187 : vector<1x512xf32> to vector<2x512xf32>
    %192 = arith.addf %191, %190 : vector<2x512xf32>
    %193 = arith.truncf %144 : vector<2x128xf32> to vector<2x128xbf16>
    %c0_64 = arith.constant 0 : index
    %c0_65 = arith.constant 0 : index
    %194 = vector.load %arg4[%c0_64, %c0_65] : memref<128x512xbf16, #tpu.memory_space<vmem>>, vector<128x512xbf16>
    %cst_66 = arith.constant dense<0.000000e+00> : vector<2x512xf32>
    %195 = tpu.matmul %193, %194, %cst_66 {dimension_numbers = #tpu.dot_dimension_numbers<[1], [0], [0], [1], [0, 0, 1, 1], [], []>} : vector<2x128xbf16>, vector<128x512xbf16>, vector<2x512xf32> -> vector<2x512xf32>
    %196 = arith.addf %192, %195 : vector<2x512xf32>
    %197 = vector.extract_strided_slice %196 {offsets = [0, 0], sizes = [2, 128], strides = [1, 1]} : vector<2x512xf32> to vector<2x128xf32>
    %198 = arith.negf %197 : vector<2x128xf32>
    %199 = math.exp %198 : vector<2x128xf32>
    %cst_67 = arith.constant 1.000000e+00 : f32
    %200 = vector.broadcast %cst_67 : f32 to vector<2x128xf32>
    %201 = arith.addf %200, %199 : vector<2x128xf32>
    %202 = arith.divf %200, %201 : vector<2x128xf32>
    %203 = vector.extract_strided_slice %196 {offsets = [0, 128], sizes = [2, 128], strides = [1, 1]} : vector<2x512xf32> to vector<2x128xf32>
    %204 = arith.negf %203 : vector<2x128xf32>
    %205 = math.exp %204 : vector<2x128xf32>
    %cst_68 = arith.constant 1.000000e+00 : f32
    %206 = vector.broadcast %cst_68 : f32 to vector<2x128xf32>
    %207 = arith.addf %206, %205 : vector<2x128xf32>
    %208 = arith.divf %206, %207 : vector<2x128xf32>
    %209 = vector.extract_strided_slice %196 {offsets = [0, 256], sizes = [2, 128], strides = [1, 1]} : vector<2x512xf32> to vector<2x128xf32>
    %210 = math.tanh %209 : vector<2x128xf32>
    %211 = vector.extract_strided_slice %196 {offsets = [0, 384], sizes = [2, 128], strides = [1, 1]} : vector<2x512xf32> to vector<2x128xf32>
    %212 = arith.negf %211 : vector<2x128xf32>
    %213 = math.exp %212 : vector<2x128xf32>
    %cst_69 = arith.constant 1.000000e+00 : f32
    %214 = vector.broadcast %cst_69 : f32 to vector<2x128xf32>
    %215 = arith.addf %214, %213 : vector<2x128xf32>
    %216 = arith.divf %214, %215 : vector<2x128xf32>
    %217 = arith.mulf %208, %142 : vector<2x128xf32>
    %218 = arith.mulf %202, %210 : vector<2x128xf32>
    %219 = arith.addf %217, %218 : vector<2x128xf32>
    %220 = math.tanh %219 : vector<2x128xf32>
    %221 = arith.mulf %216, %220 : vector<2x128xf32>
    %222 = arith.truncf %221 : vector<2x128xf32> to vector<2x128xbf16>
    %c0_70 = arith.constant 0 : index
    %c0_71 = arith.constant 0 : index
    %223 = vector.load %arg5[%c0_70, %c0_71] : memref<128x128xbf16, #tpu.memory_space<vmem>>, vector<128x128xbf16>
    %cst_72 = arith.constant dense<0.000000e+00> : vector<2x128xf32>
    %224 = tpu.matmul %222, %223, %cst_72 {dimension_numbers = #tpu.dot_dimension_numbers<[1], [0], [0], [1], [0, 0, 1, 1], [], []>} : vector<2x128xbf16>, vector<128x128xbf16>, vector<2x128xf32> -> vector<2x128xf32>
    %c0_73 = arith.constant 0 : index
    %c0_74 = arith.constant 0 : index
    %225 = vector.load %arg6[%c0_73, %c0_74] : memref<1x128xf32, #tpu.memory_space<vmem>>, vector<1x128xf32>
    %226 = vector.broadcast %225 : vector<1x128xf32> to vector<2x128xf32>
    %227 = arith.addf %224, %226 : vector<2x128xf32>
    %228 = arith.index_cast %c2_i32 : i32 to index
    %c0_75 = arith.constant 0 : index
    %c0_76 = arith.constant 0 : index
    %229 = vector.load %arg7[%228, %c0_75, %c0_76] : memref<4x2x128xf32, #tpu.memory_space<vmem>>, vector<1x2x128xf32>
    %230 = vector.shape_cast %229 : vector<1x2x128xf32> to vector<2x128xf32>
    %231 = vector.shape_cast %227 : vector<2x128xf32> to vector<1x2x128xf32>
    tpu.vector_store %arg7[%228, %c0_75, %c0_76], %231 {strides = array<i32>} : memref<4x2x128xf32, #tpu.memory_space<vmem>>, vector<1x2x128xf32>,
    %c3_i32 = arith.constant 3 : i32
    %232 = arith.index_cast %c3_i32 : i32 to index
    %c0_77 = arith.constant 0 : index
    %c0_78 = arith.constant 0 : index
    %233 = vector.load %arg0[%232, %c0_77, %c0_78] : memref<4x2x512xf32, #tpu.memory_space<vmem>>, vector<1x2x512xf32>
    %234 = vector.shape_cast %233 : vector<1x2x512xf32> to vector<2x512xf32>
    %235 = arith.truncf %186 : vector<2x128xf32> to vector<2x128xbf16>
    %c0_79 = arith.constant 0 : index
    %c0_80 = arith.constant 0 : index
    %236 = vector.load %arg1[%c0_79, %c0_80] : memref<128x512xbf16, #tpu.memory_space<vmem>>, vector<128x512xbf16>
    %cst_81 = arith.constant dense<0.000000e+00> : vector<2x512xf32>
    %237 = tpu.matmul %235, %236, %cst_81 {dimension_numbers = #tpu.dot_dimension_numbers<[1], [0], [0], [1], [0, 0, 1, 1], [], []>} : vector<2x128xbf16>, vector<128x512xbf16>, vector<2x512xf32> -> vector<2x512xf32>
    %238 = arith.addf %234, %237 : vector<2x512xf32>
    %239 = vector.extract_strided_slice %238 {offsets = [0, 0], sizes = [2, 128], strides = [1, 1]} : vector<2x512xf32> to vector<2x128xf32>
    %240 = arith.negf %239 : vector<2x128xf32>
    %241 = math.exp %240 : vector<2x128xf32>
    %cst_82 = arith.constant 1.000000e+00 : f32
    %242 = vector.broadcast %cst_82 : f32 to vector<2x128xf32>
    %243 = arith.addf %242, %241 : vector<2x128xf32>
    %244 = arith.divf %242, %243 : vector<2x128xf32>
    %245 = vector.extract_strided_slice %238 {offsets = [0, 128], sizes = [2, 128], strides = [1, 1]} : vector<2x512xf32> to vector<2x128xf32>
    %246 = arith.negf %245 : vector<2x128xf32>
    %247 = math.exp %246 : vector<2x128xf32>
    %cst_83 = arith.constant 1.000000e+00 : f32
    %248 = vector.broadcast %cst_83 : f32 to vector<2x128xf32>
    %249 = arith.addf %248, %247 : vector<2x128xf32>
    %250 = arith.divf %248, %249 : vector<2x128xf32>
    %251 = vector.extract_strided_slice %238 {offsets = [0, 256], sizes = [2, 128], strides = [1, 1]} : vector<2x512xf32> to vector<2x128xf32>
    %252 = math.tanh %251 : vector<2x128xf32>
    %253 = vector.extract_strided_slice %238 {offsets = [0, 384], sizes = [2, 128], strides = [1, 1]} : vector<2x512xf32> to vector<2x128xf32>
    %254 = arith.negf %253 : vector<2x128xf32>
    %255 = math.exp %254 : vector<2x128xf32>
    %cst_84 = arith.constant 1.000000e+00 : f32
    %256 = vector.broadcast %cst_84 : f32 to vector<2x128xf32>
    %257 = arith.addf %256, %255 : vector<2x128xf32>
    %258 = arith.divf %256, %257 : vector<2x128xf32>
    %259 = arith.mulf %250, %184 : vector<2x128xf32>
    %260 = arith.mulf %244, %252 : vector<2x128xf32>
    %261 = arith.addf %259, %260 : vector<2x128xf32>
    %262 = math.tanh %261 : vector<2x128xf32>
    %263 = arith.mulf %258, %262 : vector<2x128xf32>
    %c0_85 = arith.constant 0 : index
    %c0_86 = arith.constant 0 : index
    %264 = vector.load %arg3[%c0_85, %c0_86] : memref<1x512xf32, #tpu.memory_space<vmem>>, vector<1x512xf32>
    %265 = arith.truncf %263 : vector<2x128xf32> to vector<2x128xbf16>
    %c0_87 = arith.constant 0 : index
    %c0_88 = arith.constant 0 : index
    %266 = vector.load %arg2[%c0_87, %c0_88] : memref<128x512xbf16, #tpu.memory_space<vmem>>, vector<128x512xbf16>
    %cst_89 = arith.constant dense<0.000000e+00> : vector<2x512xf32>
    %267 = tpu.matmul %265, %266, %cst_89 {dimension_numbers = #tpu.dot_dimension_numbers<[1], [0], [0], [1], [0, 0, 1, 1], [], []>} : vector<2x128xbf16>, vector<128x512xbf16>, vector<2x512xf32> -> vector<2x512xf32>
    %268 = vector.broadcast %264 : vector<1x512xf32> to vector<2x512xf32>
    %269 = arith.addf %268, %267 : vector<2x512xf32>
    %270 = arith.truncf %221 : vector<2x128xf32> to vector<2x128xbf16>
    %c0_90 = arith.constant 0 : index
    %c0_91 = arith.constant 0 : index
    %271 = vector.load %arg4[%c0_90, %c0_91] : memref<128x512xbf16, #tpu.memory_space<vmem>>, vector<128x512xbf16>
    %cst_92 = arith.constant dense<0.000000e+00> : vector<2x512xf32>
    %272 = tpu.matmul %270, %271, %cst_92 {dimension_numbers = #tpu.dot_dimension_numbers<[1], [0], [0], [1], [0, 0, 1, 1], [], []>} : vector<2x128xbf16>, vector<128x512xbf16>, vector<2x512xf32> -> vector<2x512xf32>
    %273 = arith.addf %269, %272 : vector<2x512xf32>
    %274 = vector.extract_strided_slice %273 {offsets = [0, 0], sizes = [2, 128], strides = [1, 1]} : vector<2x512xf32> to vector<2x128xf32>
    %275 = arith.negf %274 : vector<2x128xf32>
    %276 = math.exp %275 : vector<2x128xf32>
    %cst_93 = arith.constant 1.000000e+00 : f32
    %277 = vector.broadcast %cst_93 : f32 to vector<2x128xf32>
    %278 = arith.addf %277, %276 : vector<2x128xf32>
    %279 = arith.divf %277, %278 : vector<2x128xf32>
    %280 = vector.extract_strided_slice %273 {offsets = [0, 128], sizes = [2, 128], strides = [1, 1]} : vector<2x512xf32> to vector<2x128xf32>
    %281 = arith.negf %280 : vector<2x128xf32>
    %282 = math.exp %281 : vector<2x128xf32>
    %cst_94 = arith.constant 1.000000e+00 : f32
    %283 = vector.broadcast %cst_94 : f32 to vector<2x128xf32>
    %284 = arith.addf %283, %282 : vector<2x128xf32>
    %285 = arith.divf %283, %284 : vector<2x128xf32>
    %286 = vector.extract_strided_slice %273 {offsets = [0, 256], sizes = [2, 128], strides = [1, 1]} : vector<2x512xf32> to vector<2x128xf32>
    %287 = math.tanh %286 : vector<2x128xf32>
    %288 = vector.extract_strided_slice %273 {offsets = [0, 384], sizes = [2, 128], strides = [1, 1]} : vector<2x512xf32> to vector<2x128xf32>
    %289 = arith.negf %288 : vector<2x128xf32>
    %290 = math.exp %289 : vector<2x128xf32>
    %cst_95 = arith.constant 1.000000e+00 : f32
    %291 = vector.broadcast %cst_95 : f32 to vector<2x128xf32>
    %292 = arith.addf %291, %290 : vector<2x128xf32>
    %293 = arith.divf %291, %292 : vector<2x128xf32>
    %294 = arith.mulf %285, %219 : vector<2x128xf32>
    %295 = arith.mulf %279, %287 : vector<2x128xf32>
    %296 = arith.addf %294, %295 : vector<2x128xf32>
    %297 = math.tanh %296 : vector<2x128xf32>
    %298 = arith.mulf %293, %297 : vector<2x128xf32>
    %299 = arith.truncf %298 : vector<2x128xf32> to vector<2x128xbf16>
    %c0_96 = arith.constant 0 : index
    %c0_97 = arith.constant 0 : index
    %300 = vector.load %arg5[%c0_96, %c0_97] : memref<128x128xbf16, #tpu.memory_space<vmem>>, vector<128x128xbf16>
    %cst_98 = arith.constant dense<0.000000e+00> : vector<2x128xf32>
    %301 = tpu.matmul %299, %300, %cst_98 {dimension_numbers = #tpu.dot_dimension_numbers<[1], [0], [0], [1], [0, 0, 1, 1], [], []>} : vector<2x128xbf16>, vector<128x128xbf16>, vector<2x128xf32> -> vector<2x128xf32>
    %c0_99 = arith.constant 0 : index
    %c0_100 = arith.constant 0 : index
    %302 = vector.load %arg6[%c0_99, %c0_100] : memref<1x128xf32, #tpu.memory_space<vmem>>, vector<1x128xf32>
    %303 = vector.broadcast %302 : vector<1x128xf32> to vector<2x128xf32>
    %304 = arith.addf %301, %303 : vector<2x128xf32>
    %305 = arith.index_cast %c3_i32 : i32 to index
    %c0_101 = arith.constant 0 : index
    %c0_102 = arith.constant 0 : index
    %306 = vector.load %arg7[%305, %c0_101, %c0_102] : memref<4x2x128xf32, #tpu.memory_space<vmem>>, vector<1x2x128xf32>
    %307 = vector.shape_cast %306 : vector<1x2x128xf32> to vector<2x128xf32>
    %308 = vector.shape_cast %304 : vector<2x128xf32> to vector<1x2x128xf32>
    tpu.vector_store %arg7[%305, %c0_101, %c0_102], %308 {strides = array<i32>} : memref<4x2x128xf32, #tpu.memory_space<vmem>>, vector<1x2x128xf32>,
    %c4_i32 = arith.constant 4 : i32
    return
  }
}

</mosaic_0001>

<llo_original>
// kernel: lstm_forward.2
$region0: #{lstm_forward.2}
  #allocation0 [shape = 'u32[]', space=smem, size = 0x4, offset = 0x4, fixed_abs, tag = 'smem constant byte address 0x4 - core index']
  #allocation1 [shape = 'u32[144,128]{1,0:T(1,128)}', space=vmem, size = 0x12000, scoped, tag = 'internal scratch']
  #allocation2 [shape = 'f32[8,512]{1,0:T(8,128)}', space=vmem, size = 0x4000, scoped, tag = 'scratch operand']
  %s0 = inlined_call_operand.vmem [shape: f32[8,512], index: 0, kind: input, shape index: {}]
  %s1 = inlined_call_operand.hbm [shape: bf16[512,512], index: 1, kind: input, shape index: {}]
  %s2 = inlined_call_operand.vmem [shape: f32[1,512], index: 2, kind: input, shape index: {}]
  %s3 = inlined_call_operand.vmem [shape: f32[8,512], index: 3, kind: output, shape index: {}]
  %s4 = sld [smem:[#allocation0]]
  $region34: #{lstm_forward.2} parent=0
    _
  %s6 = ssub.s32 1, %s4
  %s7 = scalar_select 0, %s6, %s4
  $region1: #{lstm_forward.2} parent=0
    #allocation3 [shape = 'u8[524288]{0}', space=vmem, size = 0x80000, scoped, tag = 'input window, operand 1, single buffered']
    #allocation4 [shape = 's32[1]{0}', space=sflag, size = 0x4, scoped, tag = 'scoped memory for lstm_forward.2']
    %8 = vsyncpa [#allocation4], 0
    // Predicated region
    $region2: #{lstm_forward.2} parent=1 // pred_check
      _
    $region3: #{lstm_forward.2} parent=1 // pred_check_branch
      %10 = sbr.rel (0) target = $region5
    $region4: #{lstm_forward.2} parent=1 // pred_region
      _
    $region5: #{lstm_forward.2} parent=1 // pred_fallthru
      _
    // Predicated region
    $region6: #{lstm_forward.2} parent=1 // pred_check
      _
    $region7: #{lstm_forward.2} parent=1 // pred_check_branch
      %12 = sbr.rel (0) target = $region9
    $region8: #{lstm_forward.2} parent=1 // pred_region
      %s14 = ssub.s32 16384, 16384
      %15 = vsyncadd [#allocation4], %s14
      %s16 = sshll.u32 [#allocation3], 4
      %s17 = int_to_ptr.vmem [resolvable:$true] %s16
      %22 = dma.hbm_to_vmem [thread:$0]  %s1, 16384, %s17, [#allocation4], 256, 256, 16
    $region9: #{lstm_forward.2} parent=1 // pred_fallthru
      _
    // Predicated region
    $region10: #{lstm_forward.2} parent=1 // pred_check
      _
    $region11: #{lstm_forward.2} parent=1 // pred_check_branch
      %24 = sbr.rel (0) target = $region13
    $region12: #{lstm_forward.2} parent=1 // pred_region
      _
    $region13: #{lstm_forward.2} parent=1 // pred_fallthru
      _
    // Predicated region
    $region14: #{lstm_forward.2} parent=1 // pred_check
      _
    $region15: #{lstm_forward.2} parent=1 // pred_check_branch
      %26 = sbr.rel (0) target = $region17
    $region16: #{lstm_forward.2} parent=1 // pred_region
      %27 = dma.done [#allocation4], 16384
    $region17: #{lstm_forward.2} parent=1 // pred_fallthru
      _
    %p28 = scmp.eq.s32.totalorder 0, 0
    // Predicated region
    $region18: #{lstm_forward.2} parent=1 // pred_check
      %p29 = pneg %p28
    $region19: #{lstm_forward.2} parent=1 // pred_check_branch
      %31 = sbr.rel (%p29) target = $region21
    $region20: #{lstm_forward.2} parent=1 // pred_region
      %v32 = vld [vmem:[%s2] sm:$0xf]
      %v34 = vlaneseq
      %v35 = vshrl.u32 %v34, 7
      %v36 = vsub.s32 0, %v35
      %v37 = vrot.slane %v32, %v36
      %v38 = vlaneseq
      %v39 = vshrl.u32 %v38, 7
      %v40 = vsub.s32 1, %v39
      %v41 = vrot.slane %v32, %v40
      %v42 = vlaneseq
      %v43 = vshrl.u32 %v42, 7
      %v44 = vsub.s32 2, %v43
      %v45 = vrot.slane %v32, %v44
      %v46 = vlaneseq
      %v47 = vshrl.u32 %v46, 7
      %v48 = vsub.s32 3, %v47
      %v49 = vrot.slane %v32, %v48
      %54 = vst [vmem:[#allocation2] sm:$0xff] %v37
      %55 = vst [vmem:[#allocation2 + $0x8] sm:$0xff] %v41
      %56 = vst [vmem:[#allocation2 + $0x10] sm:$0xff] %v45
      %57 = vst [vmem:[#allocation2 + $0x18] sm:$0xff] %v49
    $region21: #{lstm_forward.2} parent=1 // pred_fallthru
      _
    %s58 = smul.u32 0, 512
    %s59 = sshra.s32 %s58, 7
    %s60 = sand.u32 %s58, 127
    %s61 = smul.addr %s59, 8
    %s62 = scalar_lea.vmem %s0, %s61
    %v63 = vld [vmem:[%s62] sm:$0xff]
    %v64 = vld [vmem:[%s62 + $0x8] sm:$0xff]
    %v65 = vld [vmem:[%s62 + $0x10] sm:$0xff]
    %v66 = vld [vmem:[%s62 + $0x18] sm:$0xff]
    %v67 = vld [vmem:[#allocation2] sm:$0xff]
    %v68 = vld [vmem:[#allocation2 + $0x8] sm:$0xff]
    %v69 = vld [vmem:[#allocation2 + $0x10] sm:$0xff]
    %v70 = vld [vmem:[#allocation2 + $0x18] sm:$0xff]
    %v71 = vpack.c.bf16 %v63, %v63
    %v72 = vpack.c.bf16 %v64, %v64
    %v73 = vpack.c.bf16 %v65, %v65
    %v74 = vpack.c.bf16 %v66, %v66
    %v75 = vld [vmem:[#allocation3] sm:$0xff]
    %v76 = vld [vmem:[#allocation3 + $0x8] sm:$0xff]
    %v77 = vld [vmem:[#allocation3 + $0x10] sm:$0xff]
    %v78 = vld [vmem:[#allocation3 + $0x18] sm:$0xff]
    %v79 = vld [vmem:[#allocation3 + $0x20] sm:$0xff]
    %v80 = vld [vmem:[#allocation3 + $0x28] sm:$0xff]
    %v81 = vld [vmem:[#allocation3 + $0x30] sm:$0xff]
    %v82 = vld [vmem:[#allocation3 + $0x38] sm:$0xff]
    %v83 = vld [vmem:[#allocation3 + $0x40] sm:$0xff]
    %v84 = vld [vmem:[#allocation3 + $0x48] sm:$0xff]
    %v85 = vld [vmem:[#allocation3 + $0x50] sm:$0xff]
    %v86 = vld [vmem:[#allocation3 + $0x58] sm:$0xff]
    %v87 = vld [vmem:[#allocation3 + $0x60] sm:$0xff]
    %v88 = vld [vmem:[#allocation3 + $0x68] sm:$0xff]
    %v89 = vld [vmem:[#allocation3 + $0x70] sm:$0xff]
    %v90 = vld [vmem:[#allocation3 + $0x78] sm:$0xff]
    %v91 = vld [vmem:[#allocation3 + $0x80] sm:$0xff]
    %v92 = vld [vmem:[#allocation3 + $0x88] sm:$0xff]
    %v93 = vld [vmem:[#allocation3 + $0x90] sm:$0xff]
    %v94 = vld [vmem:[#allocation3 + $0x98] sm:$0xff]
    %v95 = vld [vmem:[#allocation3 + $0xa0] sm:$0xff]
    %v96 = vld [vmem:[#allocation3 + $0xa8] sm:$0xff]
    %v97 = vld [vmem:[#allocation3 + $0xb0] sm:$0xff]
    %v98 = vld [vmem:[#allocation3 + $0xb8] sm:$0xff]
    %v99 = vld [vmem:[#allocation3 + $0xc0] sm:$0xff]
    %v100 = vld [vmem:[#allocation3 + $0xc8] sm:$0xff]
    %v101 = vld [vmem:[#allocation3 + $0xd0] sm:$0xff]
    %v102 = vld [vmem:[#allocation3 + $0xd8] sm:$0xff]
    %v103 = vld [vmem:[#allocation3 + $0xe0] sm:$0xff]
    %v104 = vld [vmem:[#allocation3 + $0xe8] sm:$0xff]
    %v105 = vld [vmem:[#allocation3 + $0xf0] sm:$0xff]
    %v106 = vld [vmem:[#allocation3 + $0xf8] sm:$0xff]
    %v107 = vld [vmem:[#allocation3 + $0x100] sm:$0xff]
    %v108 = vld [vmem:[#allocation3 + $0x108] sm:$0xff]
    %v109 = vld [vmem:[#allocation3 + $0x110] sm:$0xff]
    %v110 = vld [vmem:[#allocation3 + $0x118] sm:$0xff]
    %v111 = vld [vmem:[#allocation3 + $0x120] sm:$0xff]
    %v112 = vld [vmem:[#allocation3 + $0x128] sm:$0xff]
    %v113 = vld [vmem:[#allocation3 + $0x130] sm:$0xff]
    %v114 = vld [vmem:[#allocation3 + $0x138] sm:$0xff]
    %v115 = vld [vmem:[#allocation3 + $0x140] sm:$0xff]
    %v116 = vld [vmem:[#allocation3 + $0x148] sm:$0xff]
    %v117 = vld [vmem:[#allocation3 + $0x150] sm:$0xff]
    %v118 = vld [vmem:[#allocation3 + $0x158] sm:$0xff]
    %v119 = vld [vmem:[#allocation3 + $0x160] sm:$0xff]
    %v120 = vld [vmem:[#allocation3 + $0x168] sm:$0xff]
    %v121 = vld [vmem:[#allocation3 + $0x170] sm:$0xff]
    %v122 = vld [vmem:[#allocation3 + $0x178] sm:$0xff]
    %v123 = vld [vmem:[#allocation3 + $0x180] sm:$0xff]
    %v124 = vld [vmem:[#allocation3 + $0x188] sm:$0xff]
    %v125 = vld [vmem:[#allocation3 + $0x190] sm:$0xff]
    %v126 = vld [vmem:[#allocation3 + $0x198] sm:$0xff]
    %v127 = vld [vmem:[#allocation3 + $0x1a0] sm:$0xff]
    %v128 = vld [vmem:[#allocation3 + $0x1a8] sm:$0xff]
    %v129 = vld [vmem:[#allocation3 + $0x1b0] sm:$0xff]
    %v130 = vld [vmem:[#allocation3 + $0x1b8] sm:$0xff]
    %v131 = vld [vmem:[#allocation3 + $0x1c0] sm:$0xff]
    %v132 = vld [vmem:[#allocation3 + $0x1c8] sm:$0xff]
    %v133 = vld [vmem:[#allocation3 + $0x1d0] sm:$0xff]
    %v134 = vld [vmem:[#allocation3 + $0x1d8] sm:$0xff]
    %v135 = vld [vmem:[#allocation3 + $0x1e0] sm:$0xff]
    %v136 = vld [vmem:[#allocation3 + $0x1e8] sm:$0xff]
    %v137 = vld [vmem:[#allocation3 + $0x1f0] sm:$0xff]
    %v138 = vld [vmem:[#allocation3 + $0x1f8] sm:$0xff]
    %v139 = vld [vmem:[#allocation3 + $0x200] sm:$0xff]
    %v140 = vld [vmem:[#allocation3 + $0x208] sm:$0xff]
    %v141 = vld [vmem:[#allocation3 + $0x210] sm:$0xff]
    %v142 = vld [vmem:[#allocation3 + $0x218] sm:$0xff]
    %v143 = vld [vmem:[#allocation3 + $0x220] sm:$0xff]
    %v144 = vld [vmem:[#allocation3 + $0x228] sm:$0xff]
    %v145 = vld [vmem:[#allocation3 + $0x230] sm:$0xff]
    %v146 = vld [vmem:[#allocation3 + $0x238] sm:$0xff]
    %v147 = vld [vmem:[#allocation3 + $0x240] sm:$0xff]
    %v148 = vld [vmem:[#allocation3 + $0x248] sm:$0xff]
    %v149 = vld [vmem:[#allocation3 + $0x250] sm:$0xff]
    %v150 = vld [vmem:[#allocation3 + $0x258] sm:$0xff]
    %v151 = vld [vmem:[#allocation3 + $0x260] sm:$0xff]
    %v152 = vld [vmem:[#allocation3 + $0x268] sm:$0xff]
    %v153 = vld [vmem:[#allocation3 + $0x270] sm:$0xff]
    %v154 = vld [vmem:[#allocation3 + $0x278] sm:$0xff]
    %v155 = vld [vmem:[#allocation3 + $0x280] sm:$0xff]
    %v156 = vld [vmem:[#allocation3 + $0x288] sm:$0xff]
    %v157 = vld [vmem:[#allocation3 + $0x290] sm:$0xff]
    %v158 = vld [vmem:[#allocation3 + $0x298] sm:$0xff]
    %v159 = vld [vmem:[#allocation3 + $0x2a0] sm:$0xff]
    %v160 = vld [vmem:[#allocation3 + $0x2a8] sm:$0xff]
    %v161 = vld [vmem:[#allocation3 + $0x2b0] sm:$0xff]
    %v162 = vld [vmem:[#allocation3 + $0x2b8] sm:$0xff]
    %v163 = vld [vmem:[#allocation3 + $0x2c0] sm:$0xff]
    %v164 = vld [vmem:[#allocation3 + $0x2c8] sm:$0xff]
    %v165 = vld [vmem:[#allocation3 + $0x2d0] sm:$0xff]
    %v166 = vld [vmem:[#allocation3 + $0x2d8] sm:$0xff]
    %v167 = vld [vmem:[#allocation3 + $0x2e0] sm:$0xff]
    %v168 = vld [vmem:[#allocation3 + $0x2e8] sm:$0xff]
    %v169 = vld [vmem:[#allocation3 + $0x2f0] sm:$0xff]
    %v170 = vld [vmem:[#allocation3 + $0x2f8] sm:$0xff]
    %v171 = vld [vmem:[#allocation3 + $0x300] sm:$0xff]
    %v172 = vld [vmem:[#allocation3 + $0x308] sm:$0xff]
    %v173 = vld [vmem:[#allocation3 + $0x310] sm:$0xff]
    %v174 = vld [vmem:[#allocation3 + $0x318] sm:$0xff]
    %v175 = vld [vmem:[#allocation3 + $0x320] sm:$0xff]
    %v176 = vld [vmem:[#allocation3 + $0x328] sm:$0xff]
    %v177 = vld [vmem:[#allocation3 + $0x330] sm:$0xff]
    %v178 = vld [vmem:[#allocation3 + $0x338] sm:$0xff]
    %v179 = vld [vmem:[#allocation3 + $0x340] sm:$0xff]
    %v180 = vld [vmem:[#allocation3 + $0x348] sm:$0xff]
    %v181 = vld [vmem:[#allocation3 + $0x350] sm:$0xff]
    %v182 = vld [vmem:[#allocation3 + $0x358] sm:$0xff]
    %v183 = vld [vmem:[#allocation3 + $0x360] sm:$0xff]
    %v184 = vld [vmem:[#allocation3 + $0x368] sm:$0xff]
    %v185 = vld [vmem:[#allocation3 + $0x370] sm:$0xff]
    %v186 = vld [vmem:[#allocation3 + $0x378] sm:$0xff]
    %v187 = vld [vmem:[#allocation3 + $0x380] sm:$0xff]
    %v188 = vld [vmem:[#allocation3 + $0x388] sm:$0xff]
    %v189 = vld [vmem:[#allocation3 + $0x390] sm:$0xff]
    %v190 = vld [vmem:[#allocation3 + $0x398] sm:$0xff]
    %v191 = vld [vmem:[#allocation3 + $0x3a0] sm:$0xff]
    %v192 = vld [vmem:[#allocation3 + $0x3a8] sm:$0xff]
    %v193 = vld [vmem:[#allocation3 + $0x3b0] sm:$0xff]
    %v194 = vld [vmem:[#allocation3 + $0x3b8] sm:$0xff]
    %v195 = vld [vmem:[#allocation3 + $0x3c0] sm:$0xff]
    %v196 = vld [vmem:[#allocation3 + $0x3c8] sm:$0xff]
    %v197 = vld [vmem:[#allocation3 + $0x3d0] sm:$0xff]
    %v198 = vld [vmem:[#allocation3 + $0x3d8] sm:$0xff]
    %v199 = vld [vmem:[#allocation3 + $0x3e0] sm:$0xff]
    %v200 = vld [vmem:[#allocation3 + $0x3e8] sm:$0xff]
    %v201 = vld [vmem:[#allocation3 + $0x3f0] sm:$0xff]
    %v202 = vld [vmem:[#allocation3 + $0x3f8] sm:$0xff]
    %v331 = vunpack.c.l.b16 %v75
    %v332 = vunpack.c.h.b16 %v75
    %v333 = vunpack.c.l.b16 %v76
    %v334 = vunpack.c.h.b16 %v76
    %v335 = vunpack.c.l.b16 %v77
    %v336 = vunpack.c.h.b16 %v77
    %v337 = vunpack.c.l.b16 %v78
    %v338 = vunpack.c.h.b16 %v78
    %v339 = vunpack.c.l.b16 %v79
    %v340 = vunpack.c.h.b16 %v79
    %v341 = vunpack.c.l.b16 %v80
    %v342 = vunpack.c.h.b16 %v80
    %v343 = vunpack.c.l.b16 %v81
    %v344 = vunpack.c.h.b16 %v81
    %v345 = vunpack.c.l.b16 %v82
    %v346 = vunpack.c.h.b16 %v82
    %v347 = vunpack.c.l.b16 %v83
    %v348 = vunpack.c.h.b16 %v83
    %v349 = vunpack.c.l.b16 %v84
    %v350 = vunpack.c.h.b16 %v84
    %v351 = vunpack.c.l.b16 %v85
    %v352 = vunpack.c.h.b16 %v85
    %v353 = vunpack.c.l.b16 %v86
    %v354 = vunpack.c.h.b16 %v86
    %v355 = vunpack.c.l.b16 %v87
    %v356 = vunpack.c.h.b16 %v87
    %v357 = vunpack.c.l.b16 %v88
    %v358 = vunpack.c.h.b16 %v88
    %v359 = vunpack.c.l.b16 %v89
    %v360 = vunpack.c.h.b16 %v89
    %v361 = vunpack.c.l.b16 %v90
    %v362 = vunpack.c.h.b16 %v90
    %v363 = vunpack.c.l.b16 %v91
    %v364 = vunpack.c.h.b16 %v91
    %v365 = vunpack.c.l.b16 %v92
    %v366 = vunpack.c.h.b16 %v92
    %v367 = vunpack.c.l.b16 %v93
    %v368 = vunpack.c.h.b16 %v93
    %v369 = vunpack.c.l.b16 %v94
    %v370 = vunpack.c.h.b16 %v94
    %v371 = vunpack.c.l.b16 %v95
    %v372 = vunpack.c.h.b16 %v95
    %v373 = vunpack.c.l.b16 %v96
    %v374 = vunpack.c.h.b16 %v96
    %v375 = vunpack.c.l.b16 %v97
    %v376 = vunpack.c.h.b16 %v97
    %v377 = vunpack.c.l.b16 %v98
    %v378 = vunpack.c.h.b16 %v98
    %v379 = vunpack.c.l.b16 %v99
    %v380 = vunpack.c.h.b16 %v99
    %v381 = vunpack.c.l.b16 %v100
    %v382 = vunpack.c.h.b16 %v100
    %v383 = vunpack.c.l.b16 %v101
    %v384 = vunpack.c.h.b16 %v101
    %v385 = vunpack.c.l.b16 %v102
    %v386 = vunpack.c.h.b16 %v102
    %v387 = vunpack.c.l.b16 %v103
    %v388 = vunpack.c.h.b16 %v103
    %v389 = vunpack.c.l.b16 %v104
    %v390 = vunpack.c.h.b16 %v104
    %v391 = vunpack.c.l.b16 %v105
    %v392 = vunpack.c.h.b16 %v105
    %v393 = vunpack.c.l.b16 %v106
    %v394 = vunpack.c.h.b16 %v106
    %v395 = vunpack.c.l.b16 %v107
    %v396 = vunpack.c.h.b16 %v107
    %v397 = vunpack.c.l.b16 %v108
    %v398 = vunpack.c.h.b16 %v108
    %v399 = vunpack.c.l.b16 %v109
    %v400 = vunpack.c.h.b16 %v109
    %v401 = vunpack.c.l.b16 %v110
    %v402 = vunpack.c.h.b16 %v110
    %v403 = vunpack.c.l.b16 %v111
    %v404 = vunpack.c.h.b16 %v111
    %v405 = vunpack.c.l.b16 %v112
    %v406 = vunpack.c.h.b16 %v112
    %v407 = vunpack.c.l.b16 %v113
    %v408 = vunpack.c.h.b16 %v113
    %v409 = vunpack.c.l.b16 %v114
    %v410 = vunpack.c.h.b16 %v114
    %v411 = vunpack.c.l.b16 %v115
    %v412 = vunpack.c.h.b16 %v115
    %v413 = vunpack.c.l.b16 %v116
    %v414 = vunpack.c.h.b16 %v116
    %v415 = vunpack.c.l.b16 %v117
    %v416 = vunpack.c.h.b16 %v117
    %v417 = vunpack.c.l.b16 %v118
    %v418 = vunpack.c.h.b16 %v118
    %v419 = vunpack.c.l.b16 %v119
    %v420 = vunpack.c.h.b16 %v119
    %v421 = vunpack.c.l.b16 %v120
    %v422 = vunpack.c.h.b16 %v120
    %v423 = vunpack.c.l.b16 %v121
    %v424 = vunpack.c.h.b16 %v121
    %v425 = vunpack.c.l.b16 %v122
    %v426 = vunpack.c.h.b16 %v122
    %v427 = vunpack.c.l.b16 %v123
    %v428 = vunpack.c.h.b16 %v123
    %v429 = vunpack.c.l.b16 %v124
    %v430 = vunpack.c.h.b16 %v124
    %v431 = vunpack.c.l.b16 %v125
    %v432 = vunpack.c.h.b16 %v125
    %v433 = vunpack.c.l.b16 %v126
    %v434 = vunpack.c.h.b16 %v126
    %v435 = vunpack.c.l.b16 %v127
    %v436 = vunpack.c.h.b16 %v127
    %v437 = vunpack.c.l.b16 %v128
    %v438 = vunpack.c.h.b16 %v128
    %v439 = vunpack.c.l.b16 %v129
    %v440 = vunpack.c.h.b16 %v129
    %v441 = vunpack.c.l.b16 %v130
    %v442 = vunpack.c.h.b16 %v130
    %v443 = vunpack.c.l.b16 %v131
    %v444 = vunpack.c.h.b16 %v131
    %v445 = vunpack.c.l.b16 %v132
    %v446 = vunpack.c.h.b16 %v132
    %v447 = vunpack.c.l.b16 %v133
    %v448 = vunpack.c.h.b16 %v133
    %v449 = vunpack.c.l.b16 %v134
    %v450 = vunpack.c.h.b16 %v134
    %v451 = vunpack.c.l.b16 %v135
    %v452 = vunpack.c.h.b16 %v135
    %v453 = vunpack.c.l.b16 %v136
    %v454 = vunpack.c.h.b16 %v136
    %v455 = vunpack.c.l.b16 %v137
    %v456 = vunpack.c.h.b16 %v137
    %v457 = vunpack.c.l.b16 %v138
    %v458 = vunpack.c.h.b16 %v138
    %v459 = vunpack.c.l.b16 %v139
    %v460 = vunpack.c.h.b16 %v139
    %v461 = vunpack.c.l.b16 %v140
    %v462 = vunpack.c.h.b16 %v140
    %v463 = vunpack.c.l.b16 %v141
    %v464 = vunpack.c.h.b16 %v141
    %v465 = vunpack.c.l.b16 %v142
    %v466 = vunpack.c.h.b16 %v142
    %v467 = vunpack.c.l.b16 %v143
    %v468 = vunpack.c.h.b16 %v143
    %v469 = vunpack.c.l.b16 %v144
    %v470 = vunpack.c.h.b16 %v144
    %v471 = vunpack.c.l.b16 %v145
    %v472 = vunpack.c.h.b16 %v145
    %v473 = vunpack.c.l.b16 %v146
    %v474 = vunpack.c.h.b16 %v146
    %v475 = vunpack.c.l.b16 %v147
    %v476 = vunpack.c.h.b16 %v147
    %v477 = vunpack.c.l.b16 %v148
    %v478 = vunpack.c.h.b16 %v148
    %v479 = vunpack.c.l.b16 %v149
    %v480 = vunpack.c.h.b16 %v149
    %v481 = vunpack.c.l.b16 %v150
    %v482 = vunpack.c.h.b16 %v150
    %v483 = vunpack.c.l.b16 %v151
    %v484 = vunpack.c.h.b16 %v151
    %v485 = vunpack.c.l.b16 %v152
    %v486 = vunpack.c.h.b16 %v152
    %v487 = vunpack.c.l.b16 %v153
    %v488 = vunpack.c.h.b16 %v153
    %v489 = vunpack.c.l.b16 %v154
    %v490 = vunpack.c.h.b16 %v154
    %v491 = vunpack.c.l.b16 %v155
    %v492 = vunpack.c.h.b16 %v155
    %v493 = vunpack.c.l.b16 %v156
    %v494 = vunpack.c.h.b16 %v156
    %v495 = vunpack.c.l.b16 %v157
    %v496 = vunpack.c.h.b16 %v157
    %v497 = vunpack.c.l.b16 %v158
    %v498 = vunpack.c.h.b16 %v158
    %v499 = vunpack.c.l.b16 %v159
    %v500 = vunpack.c.h.b16 %v159
    %v501 = vunpack.c.l.b16 %v160
    %v502 = vunpack.c.h.b16 %v160
    %v503 = vunpack.c.l.b16 %v161
    %v504 = vunpack.c.h.b16 %v161
    %v505 = vunpack.c.l.b16 %v162
    %v506 = vunpack.c.h.b16 %v162
    %v507 = vunpack.c.l.b16 %v163
    %v508 = vunpack.c.h.b16 %v163
    %v509 = vunpack.c.l.b16 %v164
    %v510 = vunpack.c.h.b16 %v164
    %v511 = vunpack.c.l.b16 %v165
    %v512 = vunpack.c.h.b16 %v165
    %v513 = vunpack.c.l.b16 %v166
    %v514 = vunpack.c.h.b16 %v166
    %v515 = vunpack.c.l.b16 %v167
    %v516 = vunpack.c.h.b16 %v167
    %v517 = vunpack.c.l.b16 %v168
    %v518 = vunpack.c.h.b16 %v168
    %v519 = vunpack.c.l.b16 %v169
    %v520 = vunpack.c.h.b16 %v169
    %v521 = vunpack.c.l.b16 %v170
    %v522 = vunpack.c.h.b16 %v170
    %v523 = vunpack.c.l.b16 %v171
    %v524 = vunpack.c.h.b16 %v171
    %v525 = vunpack.c.l.b16 %v172
    %v526 = vunpack.c.h.b16 %v172
    %v527 = vunpack.c.l.b16 %v173
    %v528 = vunpack.c.h.b16 %v173
    %v529 = vunpack.c.l.b16 %v174
    %v530 = vunpack.c.h.b16 %v174
    %v531 = vunpack.c.l.b16 %v175
    %v532 = vunpack.c.h.b16 %v175
    %v533 = vunpack.c.l.b16 %v176
    %v534 = vunpack.c.h.b16 %v176
    %v535 = vunpack.c.l.b16 %v177
    %v536 = vunpack.c.h.b16 %v177
    %v537 = vunpack.c.l.b16 %v178
    %v538 = vunpack.c.h.b16 %v178
    %v539 = vunpack.c.l.b16 %v179
    %v540 = vunpack.c.h.b16 %v179
    %v541 = vunpack.c.l.b16 %v180
    %v542 = vunpack.c.h.b16 %v180
    %v543 = vunpack.c.l.b16 %v181
    %v544 = vunpack.c.h.b16 %v181
    %v545 = vunpack.c.l.b16 %v182
    %v546 = vunpack.c.h.b16 %v182
    %v547 = vunpack.c.l.b16 %v183
    %v548 = vunpack.c.h.b16 %v183
    %v549 = vunpack.c.l.b16 %v184
    %v550 = vunpack.c.h.b16 %v184
    %v551 = vunpack.c.l.b16 %v185
    %v552 = vunpack.c.h.b16 %v185
    %v553 = vunpack.c.l.b16 %v186
    %v554 = vunpack.c.h.b16 %v186
    %v555 = vunpack.c.l.b16 %v187
    %v556 = vunpack.c.h.b16 %v187
    %v557 = vunpack.c.l.b16 %v188
    %v558 = vunpack.c.h.b16 %v188
    %v559 = vunpack.c.l.b16 %v189
    %v560 = vunpack.c.h.b16 %v189
    %v561 = vunpack.c.l.b16 %v190
    %v562 = vunpack.c.h.b16 %v190
    %v563 = vunpack.c.l.b16 %v191
    %v564 = vunpack.c.h.b16 %v191
    %v565 = vunpack.c.l.b16 %v192
    %v566 = vunpack.c.h.b16 %v192
    %v567 = vunpack.c.l.b16 %v193
    %v568 = vunpack.c.h.b16 %v193
    %v569 = vunpack.c.l.b16 %v194
    %v570 = vunpack.c.h.b16 %v194
    %v571 = vunpack.c.l.b16 %v195
    %v572 = vunpack.c.h.b16 %v195
    %v573 = vunpack.c.l.b16 %v196
    %v574 = vunpack.c.h.b16 %v196
    %v575 = vunpack.c.l.b16 %v197
    %v576 = vunpack.c.h.b16 %v197
    %v577 = vunpack.c.l.b16 %v198
    %v578 = vunpack.c.h.b16 %v198
    %v579 = vunpack.c.l.b16 %v199
    %v580 = vunpack.c.h.b16 %v199
    %v581 = vunpack.c.l.b16 %v200
    %v582 = vunpack.c.h.b16 %v200
    %v583 = vunpack.c.l.b16 %v201
    %v584 = vunpack.c.h.b16 %v201
    %v585 = vunpack.c.l.b16 %v202
    %v586 = vunpack.c.h.b16 %v202
    %v587 = vpack.c.b16 %v335, %v331
    %v588 = vpack.c.b16 %v336, %v332
    %v589 = vpack.c.b16 %v337, %v333
    %v590 = vpack.c.b16 %v338, %v334
    %v591 = vpack.c.b16 %v343, %v339
    %v592 = vpack.c.b16 %v344, %v340
    %v593 = vpack.c.b16 %v345, %v341
    %v594 = vpack.c.b16 %v346, %v342
    %v595 = vpack.c.b16 %v351, %v347
    %v596 = vpack.c.b16 %v352, %v348
    %v597 = vpack.c.b16 %v353, %v349
    %v598 = vpack.c.b16 %v354, %v350
    %v599 = vpack.c.b16 %v359, %v355
    %v600 = vpack.c.b16 %v360, %v356
    %v601 = vpack.c.b16 %v361, %v357
    %v602 = vpack.c.b16 %v362, %v358
    %v603 = vpack.c.b16 %v367, %v363
    %v604 = vpack.c.b16 %v368, %v364
    %v605 = vpack.c.b16 %v369, %v365
    %v606 = vpack.c.b16 %v370, %v366
    %v607 = vpack.c.b16 %v375, %v371
    %v608 = vpack.c.b16 %v376, %v372
    %v609 = vpack.c.b16 %v377, %v373
    %v610 = vpack.c.b16 %v378, %v374
    %v611 = vpack.c.b16 %v383, %v379
    %v612 = vpack.c.b16 %v384, %v380
    %v613 = vpack.c.b16 %v385, %v381
    %v614 = vpack.c.b16 %v386, %v382
    %v615 = vpack.c.b16 %v391, %v387
    %v616 = vpack.c.b16 %v392, %v388
    %v617 = vpack.c.b16 %v393, %v389
    %v618 = vpack.c.b16 %v394, %v390
    %v619 = vpack.c.b16 %v399, %v395
    %v620 = vpack.c.b16 %v400, %v396
    %v621 = vpack.c.b16 %v401, %v397
    %v622 = vpack.c.b16 %v402, %v398
    %v623 = vpack.c.b16 %v407, %v403
    %v624 = vpack.c.b16 %v408, %v404
    %v625 = vpack.c.b16 %v409, %v405
    %v626 = vpack.c.b16 %v410, %v406
    %v627 = vpack.c.b16 %v415, %v411
    %v628 = vpack.c.b16 %v416, %v412
    %v629 = vpack.c.b16 %v417, %v413
    %v630 = vpack.c.b16 %v418, %v414
    %v631 = vpack.c.b16 %v423, %v419
    %v632 = vpack.c.b16 %v424, %v420
    %v633 = vpack.c.b16 %v425, %v421
    %v634 = vpack.c.b16 %v426, %v422
    %v635 = vpack.c.b16 %v431, %v427
    %v636 = vpack.c.b16 %v432, %v428
    %v637 = vpack.c.b16 %v433, %v429
    %v638 = vpack.c.b16 %v434, %v430
    %v639 = vpack.c.b16 %v439, %v435
    %v640 = vpack.c.b16 %v440, %v436
    %v641 = vpack.c.b16 %v441, %v437
    %v642 = vpack.c.b16 %v442, %v438
    %v643 = vpack.c.b16 %v447, %v443
    %v644 = vpack.c.b16 %v448, %v444
    %v645 = vpack.c.b16 %v449, %v445
    %v646 = vpack.c.b16 %v450, %v446
    %v647 = vpack.c.b16 %v455, %v451
    %v648 = vpack.c.b16 %v456, %v452
    %v649 = vpack.c.b16 %v457, %v453
    %v650 = vpack.c.b16 %v458, %v454
    %v651 = vpack.c.b16 %v463, %v459
    %v652 = vpack.c.b16 %v464, %v460
    %v653 = vpack.c.b16 %v465, %v461
    %v654 = vpack.c.b16 %v466, %v462
    %v655 = vpack.c.b16 %v471, %v467
    %v656 = vpack.c.b16 %v472, %v468
    %v657 = vpack.c.b16 %v473, %v469
    %v658 = vpack.c.b16 %v474, %v470
    %v659 = vpack.c.b16 %v479, %v475
    %v660 = vpack.c.b16 %v480, %v476
    %v661 = vpack.c.b16 %v481, %v477
    %v662 = vpack.c.b16 %v482, %v478
    %v663 = vpack.c.b16 %v487, %v483
    %v664 = vpack.c.b16 %v488, %v484
    %v665 = vpack.c.b16 %v489, %v485
    %v666 = vpack.c.b16 %v490, %v486
    %v667 = vpack.c.b16 %v495, %v491
    %v668 = vpack.c.b16 %v496, %v492
    %v669 = vpack.c.b16 %v497, %v493
    %v670 = vpack.c.b16 %v498, %v494
    %v671 = vpack.c.b16 %v503, %v499
    %v672 = vpack.c.b16 %v504, %v500
    %v673 = vpack.c.b16 %v505, %v501
    %v674 = vpack.c.b16 %v506, %v502
    %v675 = vpack.c.b16 %v511, %v507
    %v676 = vpack.c.b16 %v512, %v508
    %v677 = vpack.c.b16 %v513, %v509
    %v678 = vpack.c.b16 %v514, %v510
    %v679 = vpack.c.b16 %v519, %v515
    %v680 = vpack.c.b16 %v520, %v516
    %v681 = vpack.c.b16 %v521, %v517
    %v682 = vpack.c.b16 %v522, %v518
    %v683 = vpack.c.b16 %v527, %v523
    %v684 = vpack.c.b16 %v528, %v524
    %v685 = vpack.c.b16 %v529, %v525
    %v686 = vpack.c.b16 %v530, %v526
    %v687 = vpack.c.b16 %v535, %v531
    %v688 = vpack.c.b16 %v536, %v532
    %v689 = vpack.c.b16 %v537, %v533
    %v690 = vpack.c.b16 %v538, %v534
    %v691 = vpack.c.b16 %v543, %v539
    %v692 = vpack.c.b16 %v544, %v540
    %v693 = vpack.c.b16 %v545, %v541
    %v694 = vpack.c.b16 %v546, %v542
    %v695 = vpack.c.b16 %v551, %v547
    %v696 = vpack.c.b16 %v552, %v548
    %v697 = vpack.c.b16 %v553, %v549
    %v698 = vpack.c.b16 %v554, %v550
    %v699 = vpack.c.b16 %v559, %v555
    %v700 = vpack.c.b16 %v560, %v556
    %v701 = vpack.c.b16 %v561, %v557
    %v702 = vpack.c.b16 %v562, %v558
    %v703 = vpack.c.b16 %v567, %v563
    %v704 = vpack.c.b16 %v568, %v564
    %v705 = vpack.c.b16 %v569, %v565
    %v706 = vpack.c.b16 %v570, %v566
    %v707 = vpack.c.b16 %v575, %v571
    %v708 = vpack.c.b16 %v576, %v572
    %v709 = vpack.c.b16 %v577, %v573
    %v710 = vpack.c.b16 %v578, %v574
    %v711 = vpack.c.b16 %v583, %v579
    %v712 = vpack.c.b16 %v584, %v580
    %v713 = vpack.c.b16 %v585, %v581
    %v714 = vpack.c.b16 %v586, %v582
    %843 = vmatprep.subr.bf16.mxu0 %v588
    %844 = vmatpush1.bf16.msra.mxu0 %v587
    %845 = vmatprep.subr.bf16.mxu0 %v592
    %846 = vmatpush1.bf16.msra.mxu0 %v591
    %847 = vmatprep.subr.bf16.mxu0 %v596
    %848 = vmatpush1.bf16.msra.mxu0 %v595
    %849 = vmatprep.subr.bf16.mxu0 %v600
    %850 = vmatpush1.bf16.msra.mxu0 %v599
    %851 = vmatprep.subr.bf16.mxu0 %v604
    %852 = vmatpush1.bf16.msra.mxu0 %v603
    %853 = vmatprep.subr.bf16.mxu0 %v608
    %854 = vmatpush1.bf16.msra.mxu0 %v607
    %855 = vmatprep.subr.bf16.mxu0 %v612
    %856 = vmatpush1.bf16.msra.mxu0 %v611
    %857 = vmatprep.subr.bf16.mxu0 %v616
    %858 = vmatpush1.bf16.msra.mxu0 %v615
    %859 = vmatprep.subr.bf16.mxu0 %v620
    %860 = vmatpush1.bf16.msra.mxu0 %v619
    %861 = vmatprep.subr.bf16.mxu0 %v624
    %862 = vmatpush1.bf16.msra.mxu0 %v623
    %863 = vmatprep.subr.bf16.mxu0 %v628
    %864 = vmatpush1.bf16.msra.mxu0 %v627
    %865 = vmatprep.subr.bf16.mxu0 %v632
    %866 = vmatpush1.bf16.msra.mxu0 %v631
    %867 = vmatprep.subr.bf16.mxu0 %v636
    %868 = vmatpush1.bf16.msra.mxu0 %v635
    %869 = vmatprep.subr.bf16.mxu0 %v640
    %870 = vmatpush1.bf16.msra.mxu0 %v639
    %871 = vmatprep.subr.bf16.mxu0 %v644
    %872 = vmatpush1.bf16.msra.mxu0 %v643
    %873 = vmatprep.subr.bf16.mxu0 %v648
    %874 = vmatpush1.bf16.msra.mxu0 %v647
    %875 = vmatprep.mubr.bf16.mxu0 %v72
    %876 = vmatmul.mubr.bf16.gmra.mrb[0].mxu0 %v71
    %v877 = vpop.f32.mrb[0].mxu0
    %v878 = vadd.f32 0.0, %v877
    %v879 = vpop.f32.mrb[0].mxu0
    %v880 = vadd.f32 0.0, %v879
    %v881 = vpop.f32.mrb[0].mxu0
    %v882 = vpop.f32.mrb[0].mxu0
    %883 = vdwg.mxu0
    %884 = vmatprep.subr.bf16.mxu0 %v652
    %885 = vmatpush1.bf16.msra.mxu0 %v651
    %886 = vmatprep.subr.bf16.mxu0 %v656
    %887 = vmatpush1.bf16.msra.mxu0 %v655
    %888 = vmatprep.subr.bf16.mxu0 %v660
    %889 = vmatpush1.bf16.msra.mxu0 %v659
    %890 = vmatprep.subr.bf16.mxu0 %v664
    %891 = vmatpush1.bf16.msra.mxu0 %v663
    %892 = vmatprep.subr.bf16.mxu0 %v668
    %893 = vmatpush1.bf16.msra.mxu0 %v667
    %894 = vmatprep.subr.bf16.mxu0 %v672
    %895 = vmatpush1.bf16.msra.mxu0 %v671
    %896 = vmatprep.subr.bf16.mxu0 %v676
    %897 = vmatpush1.bf16.msra.mxu0 %v675
    %898 = vmatprep.subr.bf16.mxu0 %v680
    %899 = vmatpush1.bf16.msra.mxu0 %v679
    %900 = vmatprep.subr.bf16.mxu0 %v684
    %901 = vmatpush1.bf16.msra.mxu0 %v683
    %902 = vmatprep.subr.bf16.mxu0 %v688
    %903 = vmatpush1.bf16.msra.mxu0 %v687
    %904 = vmatprep.subr.bf16.mxu0 %v692
    %905 = vmatpush1.bf16.msra.mxu0 %v691
    %906 = vmatprep.subr.bf16.mxu0 %v696
    %907 = vmatpush1.bf16.msra.mxu0 %v695
    %908 = vmatprep.subr.bf16.mxu0 %v700
    %909 = vmatpush1.bf16.msra.mxu0 %v699
    %910 = vmatprep.subr.bf16.mxu0 %v704
    %911 = vmatpush1.bf16.msra.mxu0 %v703
    %912 = vmatprep.subr.bf16.mxu0 %v708
    %913 = vmatpush1.bf16.msra.mxu0 %v707
    %914 = vmatprep.subr.bf16.mxu0 %v712
    %915 = vmatpush1.bf16.msra.mxu0 %v711
    %916 = vmatprep.mubr.bf16.mxu0 %v74
    %917 = vmatmul.mubr.bf16.gmra.mrb[0].mxu0 %v73
    %v918 = vpop.f32.mrb[0].mxu0
    %v919 = vadd.f32 %v878, %v918
    %v920 = vpop.f32.mrb[0].mxu0
    %v921 = vadd.f32 %v880, %v920
    %v922 = vpop.f32.mrb[0].mxu0
    %v923 = vpop.f32.mrb[0].mxu0
    %924 = vdwg.mxu0
    %925 = vmatprep.subr.bf16.mxu0 %v590
    %926 = vmatpush1.bf16.msra.mxu0 %v589
    %927 = vmatprep.subr.bf16.mxu0 %v594
    %928 = vmatpush1.bf16.msra.mxu0 %v593
    %929 = vmatprep.subr.bf16.mxu0 %v598
    %930 = vmatpush1.bf16.msra.mxu0 %v597
    %931 = vmatprep.subr.bf16.mxu0 %v602
    %932 = vmatpush1.bf16.msra.mxu0 %v601
    %933 = vmatprep.subr.bf16.mxu0 %v606
    %934 = vmatpush1.bf16.msra.mxu0 %v605
    %935 = vmatprep.subr.bf16.mxu0 %v610
    %936 = vmatpush1.bf16.msra.mxu0 %v609
    %937 = vmatprep.subr.bf16.mxu0 %v614
    %938 = vmatpush1.bf16.msra.mxu0 %v613
    %939 = vmatprep.subr.bf16.mxu0 %v618
    %940 = vmatpush1.bf16.msra.mxu0 %v617
    %941 = vmatprep.subr.bf16.mxu0 %v622
    %942 = vmatpush1.bf16.msra.mxu0 %v621
    %943 = vmatprep.subr.bf16.mxu0 %v626
    %944 = vmatpush1.bf16.msra.mxu0 %v625
    %945 = vmatprep.subr.bf16.mxu0 %v630
    %946 = vmatpush1.bf16.msra.mxu0 %v629
    %947 = vmatprep.subr.bf16.mxu0 %v634
    %948 = vmatpush1.bf16.msra.mxu0 %v633
    %949 = vmatprep.subr.bf16.mxu0 %v638
    %950 = vmatpush1.bf16.msra.mxu0 %v637
    %951 = vmatprep.subr.bf16.mxu0 %v642
    %952 = vmatpush1.bf16.msra.mxu0 %v641
    %953 = vmatprep.subr.bf16.mxu0 %v646
    %954 = vmatpush1.bf16.msra.mxu0 %v645
    %955 = vmatprep.subr.bf16.mxu0 %v650
    %956 = vmatpush1.bf16.msra.mxu0 %v649
    %957 = vmatprep.mubr.bf16.mxu0 %v72
    %958 = vmatmul.mubr.bf16.gmra.mrb[0].mxu0 %v71
    %v959 = vpop.f32.mrb[0].mxu0
    %v960 = vadd.f32 0.0, %v959
    %v961 = vpop.f32.mrb[0].mxu0
    %v962 = vadd.f32 0.0, %v961
    %v963 = vpop.f32.mrb[0].mxu0
    %v964 = vpop.f32.mrb[0].mxu0
    %965 = vdwg.mxu0
    %966 = vmatprep.subr.bf16.mxu0 %v654
    %967 = vmatpush1.bf16.msra.mxu0 %v653
    %968 = vmatprep.subr.bf16.mxu0 %v658
    %969 = vmatpush1.bf16.msra.mxu0 %v657
    %970 = vmatprep.subr.bf16.mxu0 %v662
    %971 = vmatpush1.bf16.msra.mxu0 %v661
    %972 = vmatprep.subr.bf16.mxu0 %v666
    %973 = vmatpush1.bf16.msra.mxu0 %v665
    %974 = vmatprep.subr.bf16.mxu0 %v670
    %975 = vmatpush1.bf16.msra.mxu0 %v669
    %976 = vmatprep.subr.bf16.mxu0 %v674
    %977 = vmatpush1.bf16.msra.mxu0 %v673
    %978 = vmatprep.subr.bf16.mxu0 %v678
    %979 = vmatpush1.bf16.msra.mxu0 %v677
    %980 = vmatprep.subr.bf16.mxu0 %v682
    %981 = vmatpush1.bf16.msra.mxu0 %v681
    %982 = vmatprep.subr.bf16.mxu0 %v686
    %983 = vmatpush1.bf16.msra.mxu0 %v685
    %984 = vmatprep.subr.bf16.mxu0 %v690
    %985 = vmatpush1.bf16.msra.mxu0 %v689
    %986 = vmatprep.subr.bf16.mxu0 %v694
    %987 = vmatpush1.bf16.msra.mxu0 %v693
    %988 = vmatprep.subr.bf16.mxu0 %v698
    %989 = vmatpush1.bf16.msra.mxu0 %v697
    %990 = vmatprep.subr.bf16.mxu0 %v702
    %991 = vmatpush1.bf16.msra.mxu0 %v701
    %992 = vmatprep.subr.bf16.mxu0 %v706
    %993 = vmatpush1.bf16.msra.mxu0 %v705
    %994 = vmatprep.subr.bf16.mxu0 %v710
    %995 = vmatpush1.bf16.msra.mxu0 %v709
    %996 = vmatprep.subr.bf16.mxu0 %v714
    %997 = vmatpush1.bf16.msra.mxu0 %v713
    %998 = vmatprep.mubr.bf16.mxu0 %v74
    %999 = vmatmul.mubr.bf16.gmra.mrb[0].mxu0 %v73
    %v1000 = vpop.f32.mrb[0].mxu0
    %v1001 = vadd.f32 %v960, %v1000
    %v1002 = vpop.f32.mrb[0].mxu0
    %v1003 = vadd.f32 %v962, %v1002
    %v1004 = vpop.f32.mrb[0].mxu0
    %v1005 = vpop.f32.mrb[0].mxu0
    %1006 = vdwg.mxu0
    %v1007 = vadd.f32 %v67, %v919
    %v1008 = vadd.f32 %v68, %v921
    %v1009 = vadd.f32 %v69, %v1001
    %v1010 = vadd.f32 %v70, %v1003
    %1011 = vst [vmem:[#allocation2] sm:$0xff] %v1007
    %1012 = vst [vmem:[#allocation2 + $0x8] sm:$0xff] %v1008
    %1013 = vst [vmem:[#allocation2 + $0x10] sm:$0xff] %v1009
    %1014 = vst [vmem:[#allocation2 + $0x18] sm:$0xff] %v1010
    // Predicated region
    $region22: #{lstm_forward.2} parent=1 // pred_check
      %p1015 = pneg %p28
    $region23: #{lstm_forward.2} parent=1 // pred_check_branch
      %1017 = sbr.rel (%p1015) target = $region25
    $region24: #{lstm_forward.2} parent=1 // pred_region
      %v1018 = vld [vmem:[#allocation2] sm:$0xff]
      %v1019 = vld [vmem:[#allocation2 + $0x8] sm:$0xff]
      %v1020 = vld [vmem:[#allocation2 + $0x10] sm:$0xff]
      %v1021 = vld [vmem:[#allocation2 + $0x18] sm:$0xff]
      %1022 = vst [vmem:[%s3] sm:$0xff] %v1018
      %1023 = vst [vmem:[%s3 + $0x8] sm:$0xff] %v1019
      %1024 = vst [vmem:[%s3 + $0x10] sm:$0xff] %v1020
      %1025 = vst [vmem:[%s3 + $0x18] sm:$0xff] %v1021
    $region25: #{lstm_forward.2} parent=1 // pred_fallthru
      _
    // Predicated region
    $region26: #{lstm_forward.2} parent=1 // pred_check
      _
    $region27: #{lstm_forward.2} parent=1 // pred_check_branch
      %1027 = sbr.rel (0) target = $region29
    $region28: #{lstm_forward.2} parent=1 // pred_region
      _
    $region29: #{lstm_forward.2} parent=1 // pred_fallthru
      _
    // Predicated region
    $region30: #{lstm_forward.2} parent=1 // pred_check
      _
    $region31: #{lstm_forward.2} parent=1 // pred_check_branch
      %1029 = sbr.rel (0) target = $region33
    $region32: #{lstm_forward.2} parent=1 // pred_region
      _
    $region33: #{lstm_forward.2} parent=1 // pred_fallthru
      _
    %1030 = vsyncpa [#allocation4], 1

// kernel: lstm_forward.3
$region0: #{lstm_forward.3}
  #allocation0 [shape = 'u32[]', space=smem, size = 0x4, offset = 0x4, fixed_abs, tag = 'smem constant byte address 0x4 - core index']
  #allocation1 [shape = 'u32[144,128]{1,0:T(1,128)}', space=vmem, size = 0x12000, scoped, tag = 'internal scratch']
  %s0 = inlined_call_operand.vmem [shape: f32[4,2,512], index: 0, kind: input, shape index: {}]
  %s1 = inlined_call_operand.vmem [shape: bf16[128,512], index: 1, kind: input, shape index: {}]
  %s2 = inlined_call_operand.vmem [shape: bf16[128,512], index: 2, kind: input, shape index: {}]
  %s3 = inlined_call_operand.vmem [shape: f32[1,512], index: 3, kind: input, shape index: {}]
  %s4 = inlined_call_operand.vmem [shape: bf16[128,512], index: 4, kind: input, shape index: {}]
  %s5 = inlined_call_operand.vmem [shape: bf16[128,128], index: 5, kind: input, shape index: {}]
  %s6 = inlined_call_operand.vmem [shape: f32[1,128], index: 6, kind: input, shape index: {}]
  %s7 = inlined_call_operand.vmem [shape: f32[4,2,128], index: 7, kind: output, shape index: {}]
  %s8 = sld [smem:[#allocation0]]
  $region38: #{lstm_forward.3} parent=0
    _
  %s10 = ssub.s32 1, %s8
  %s11 = scalar_select 0, %s10, %s8
  // Predicated region
  $region2: #{lstm_forward.3} parent=0 // pred_check
    _
  $region3: #{lstm_forward.3} parent=0 // pred_check_branch
    %13 = sbr.rel (0) target = $region5
  $region4: #{lstm_forward.3} parent=0 // pred_region
    _
  $region5: #{lstm_forward.3} parent=0 // pred_fallthru
    _
  // Predicated region
  $region6: #{lstm_forward.3} parent=0 // pred_check
    _
  $region7: #{lstm_forward.3} parent=0 // pred_check_branch
    %15 = sbr.rel (0) target = $region9
  $region8: #{lstm_forward.3} parent=0 // pred_region
    _
  $region9: #{lstm_forward.3} parent=0 // pred_fallthru
    _
  // Predicated region
  $region10: #{lstm_forward.3} parent=0 // pred_check
    _
  $region11: #{lstm_forward.3} parent=0 // pred_check_branch
    %17 = sbr.rel (0) target = $region13
  $region12: #{lstm_forward.3} parent=0 // pred_region
    _
  $region13: #{lstm_forward.3} parent=0 // pred_fallthru
    _
  // Predicated region
  $region14: #{lstm_forward.3} parent=0 // pred_check
    _
  $region15: #{lstm_forward.3} parent=0 // pred_check_branch
    %19 = sbr.rel (0) target = $region17
  $region16: #{lstm_forward.3} parent=0 // pred_region
    _
  $region17: #{lstm_forward.3} parent=0 // pred_fallthru
    _
  // Predicated region
  $region18: #{lstm_forward.3} parent=0 // pred_check
    _
  $region19: #{lstm_forward.3} parent=0 // pred_check_branch
    %21 = sbr.rel (0) target = $region21
  $region20: #{lstm_forward.3} parent=0 // pred_region
    _
  $region21: #{lstm_forward.3} parent=0 // pred_fallthru
    _
  // Predicated region
  $region22: #{lstm_forward.3} parent=0 // pred_check
    _
  $region23: #{lstm_forward.3} parent=0 // pred_check_branch
    %23 = sbr.rel (0) target = $region25
  $region24: #{lstm_forward.3} parent=0 // pred_region
    _
  $region25: #{lstm_forward.3} parent=0 // pred_fallthru
    _
  // Predicated region
  $region26: #{lstm_forward.3} parent=0 // pred_check
    _
  $region27: #{lstm_forward.3} parent=0 // pred_check_branch
    %25 = sbr.rel (0) target = $region29
  $region28: #{lstm_forward.3} parent=0 // pred_region
    _
  $region29: #{lstm_forward.3} parent=0 // pred_fallthru
    _
  %v27 = vld [vmem:[%s0] sm:$0xff]
  %v28 = vld [vmem:[%s1] sm:$0xff]
  %v29 = vld [vmem:[%s1 + $0x8] sm:$0xff]
  %v30 = vld [vmem:[%s1 + $0x10] sm:$0xff]
  %v31 = vld [vmem:[%s1 + $0x18] sm:$0xff]
  %v32 = vld [vmem:[%s1 + $0x20] sm:$0xff]
  %v33 = vld [vmem:[%s1 + $0x28] sm:$0xff]
  %v34 = vld [vmem:[%s1 + $0x30] sm:$0xff]
  %v35 = vld [vmem:[%s1 + $0x38] sm:$0xff]
  %v36 = vld [vmem:[%s1 + $0x40] sm:$0xff]
  %v37 = vld [vmem:[%s1 + $0x48] sm:$0xff]
  %v38 = vld [vmem:[%s1 + $0x50] sm:$0xff]
  %v39 = vld [vmem:[%s1 + $0x58] sm:$0xff]
  %v40 = vld [vmem:[%s1 + $0x60] sm:$0xff]
  %v41 = vld [vmem:[%s1 + $0x68] sm:$0xff]
  %v42 = vld [vmem:[%s1 + $0x70] sm:$0xff]
  %v43 = vld [vmem:[%s1 + $0x78] sm:$0xff]
  %v44 = vld [vmem:[%s1 + $0x80] sm:$0xff]
  %v45 = vld [vmem:[%s1 + $0x88] sm:$0xff]
  %v46 = vld [vmem:[%s1 + $0x90] sm:$0xff]
  %v47 = vld [vmem:[%s1 + $0x98] sm:$0xff]
  %v48 = vld [vmem:[%s1 + $0xa0] sm:$0xff]
  %v49 = vld [vmem:[%s1 + $0xa8] sm:$0xff]
  %v50 = vld [vmem:[%s1 + $0xb0] sm:$0xff]
  %v51 = vld [vmem:[%s1 + $0xb8] sm:$0xff]
  %v52 = vld [vmem:[%s1 + $0xc0] sm:$0xff]
  %v53 = vld [vmem:[%s1 + $0xc8] sm:$0xff]
  %v54 = vld [vmem:[%s1 + $0xd0] sm:$0xff]
  %v55 = vld [vmem:[%s1 + $0xd8] sm:$0xff]
  %v56 = vld [vmem:[%s1 + $0xe0] sm:$0xff]
  %v57 = vld [vmem:[%s1 + $0xe8] sm:$0xff]
  %v58 = vld [vmem:[%s1 + $0xf0] sm:$0xff]
  %v59 = vld [vmem:[%s1 + $0xf8] sm:$0xff]
  %v92 = vunpack.c.l.b16 %v28
  %v93 = vunpack.c.h.b16 %v28
  %v94 = vunpack.c.l.b16 %v29
  %v95 = vunpack.c.h.b16 %v29
  %v96 = vunpack.c.l.b16 %v30
  %v97 = vunpack.c.h.b16 %v30
  %v98 = vunpack.c.l.b16 %v31
  %v99 = vunpack.c.h.b16 %v31
  %v100 = vunpack.c.l.b16 %v32
  %v101 = vunpack.c.h.b16 %v32
  %v102 = vunpack.c.l.b16 %v33
  %v103 = vunpack.c.h.b16 %v33
  %v104 = vunpack.c.l.b16 %v34
  %v105 = vunpack.c.h.b16 %v34
  %v106 = vunpack.c.l.b16 %v35
  %v107 = vunpack.c.h.b16 %v35
  %v108 = vunpack.c.l.b16 %v36
  %v109 = vunpack.c.h.b16 %v36
  %v110 = vunpack.c.l.b16 %v37
  %v111 = vunpack.c.h.b16 %v37
  %v112 = vunpack.c.l.b16 %v38
  %v113 = vunpack.c.h.b16 %v38
  %v114 = vunpack.c.l.b16 %v39
  %v115 = vunpack.c.h.b16 %v39
  %v116 = vunpack.c.l.b16 %v40
  %v117 = vunpack.c.h.b16 %v40
  %v118 = vunpack.c.l.b16 %v41
  %v119 = vunpack.c.h.b16 %v41
  %v120 = vunpack.c.l.b16 %v42
  %v121 = vunpack.c.h.b16 %v42
  %v122 = vunpack.c.l.b16 %v43
  %v123 = vunpack.c.h.b16 %v43
  %v124 = vunpack.c.l.b16 %v44
  %v125 = vunpack.c.h.b16 %v44
  %v126 = vunpack.c.l.b16 %v45
  %v127 = vunpack.c.h.b16 %v45
  %v128 = vunpack.c.l.b16 %v46
  %v129 = vunpack.c.h.b16 %v46
  %v130 = vunpack.c.l.b16 %v47
  %v131 = vunpack.c.h.b16 %v47
  %v132 = vunpack.c.l.b16 %v48
  %v133 = vunpack.c.h.b16 %v48
  %v134 = vunpack.c.l.b16 %v49
  %v135 = vunpack.c.h.b16 %v49
  %v136 = vunpack.c.l.b16 %v50
  %v137 = vunpack.c.h.b16 %v50
  %v138 = vunpack.c.l.b16 %v51
  %v139 = vunpack.c.h.b16 %v51
  %v140 = vunpack.c.l.b16 %v52
  %v141 = vunpack.c.h.b16 %v52
  %v142 = vunpack.c.l.b16 %v53
  %v143 = vunpack.c.h.b16 %v53
  %v144 = vunpack.c.l.b16 %v54
  %v145 = vunpack.c.h.b16 %v54
  %v146 = vunpack.c.l.b16 %v55
  %v147 = vunpack.c.h.b16 %v55
  %v148 = vunpack.c.l.b16 %v56
  %v149 = vunpack.c.h.b16 %v56
  %v150 = vunpack.c.l.b16 %v57
  %v151 = vunpack.c.h.b16 %v57
  %v152 = vunpack.c.l.b16 %v58
  %v153 = vunpack.c.h.b16 %v58
  %v154 = vunpack.c.l.b16 %v59
  %v155 = vunpack.c.h.b16 %v59
  %v156 = vpack.c.b16 %v96, %v92
  %v157 = vpack.c.b16 %v97, %v93
  %v158 = vpack.c.b16 %v98, %v94
  %v159 = vpack.c.b16 %v99, %v95
  %v160 = vpack.c.b16 %v104, %v100
  %v161 = vpack.c.b16 %v105, %v101
  %v162 = vpack.c.b16 %v106, %v102
  %v163 = vpack.c.b16 %v107, %v103
  %v164 = vpack.c.b16 %v112, %v108
  %v165 = vpack.c.b16 %v113, %v109
  %v166 = vpack.c.b16 %v114, %v110
  %v167 = vpack.c.b16 %v115, %v111
  %v168 = vpack.c.b16 %v120, %v116
  %v169 = vpack.c.b16 %v121, %v117
  %v170 = vpack.c.b16 %v122, %v118
  %v171 = vpack.c.b16 %v123, %v119
  %v172 = vpack.c.b16 %v128, %v124
  %v173 = vpack.c.b16 %v129, %v125
  %v174 = vpack.c.b16 %v130, %v126
  %v175 = vpack.c.b16 %v131, %v127
  %v176 = vpack.c.b16 %v136, %v132
  %v177 = vpack.c.b16 %v137, %v133
  %v178 = vpack.c.b16 %v138, %v134
  %v179 = vpack.c.b16 %v139, %v135
  %v180 = vpack.c.b16 %v144, %v140
  %v181 = vpack.c.b16 %v145, %v141
  %v182 = vpack.c.b16 %v146, %v142
  %v183 = vpack.c.b16 %v147, %v143
  %v184 = vpack.c.b16 %v152, %v148
  %v185 = vpack.c.b16 %v153, %v149
  %v186 = vpack.c.b16 %v154, %v150
  %v187 = vpack.c.b16 %v155, %v151
  %220 = vmatprep.subr.bf16.mxu0 %v157
  %221 = vmatpush1.bf16.msra.mxu0 %v156
  %222 = vmatprep.subr.bf16.mxu0 %v161
  %223 = vmatpush1.bf16.msra.mxu0 %v160
  %224 = vmatprep.subr.bf16.mxu0 %v165
  %225 = vmatpush1.bf16.msra.mxu0 %v164
  %226 = vmatprep.subr.bf16.mxu0 %v169
  %227 = vmatpush1.bf16.msra.mxu0 %v168
  %228 = vmatprep.subr.bf16.mxu0 %v173
  %229 = vmatpush1.bf16.msra.mxu0 %v172
  %230 = vmatprep.subr.bf16.mxu0 %v177
  %231 = vmatpush1.bf16.msra.mxu0 %v176
  %232 = vmatprep.subr.bf16.mxu0 %v181
  %233 = vmatpush1.bf16.msra.mxu0 %v180
  %234 = vmatprep.subr.bf16.mxu0 %v185
  %235 = vmatpush1.bf16.msra.mxu0 %v184
  %236 = vmatprep.subr.bf16.mxu0 0
  %237 = vmatpush1.bf16.msra.mxu0 0
  %238 = vmatprep.subr.bf16.mxu0 0
  %239 = vmatpush1.bf16.msra.mxu0 0
  %240 = vmatprep.subr.bf16.mxu0 0
  %241 = vmatpush1.bf16.msra.mxu0 0
  %242 = vmatprep.subr.bf16.mxu0 0
  %243 = vmatpush1.bf16.msra.mxu0 0
  %244 = vmatprep.subr.bf16.mxu0 0
  %245 = vmatpush1.bf16.msra.mxu0 0
  %246 = vmatprep.subr.bf16.mxu0 0
  %247 = vmatpush1.bf16.msra.mxu0 0
  %248 = vmatprep.subr.bf16.mxu0 0
  %249 = vmatpush1.bf16.msra.mxu0 0
  %250 = vmatprep.subr.bf16.mxu0 0
  %251 = vmatpush1.bf16.msra.mxu0 0
  %252 = vmatprep.mubr.bf16.mxu0 0
  %253 = vmatmul.mubr.bf16.gmra.mrb[0].mxu0 0
  %v254 = vpop.f32.mrb[0].mxu0
  %v255 = vadd.f32 0.0, %v254
  %v256 = vpop.f32.mrb[0].mxu0
  %v257 = vadd.f32 0.0, %v256
  %v258 = vpop.f32.mrb[0].mxu0
  %v259 = vpop.f32.mrb[0].mxu0
  %260 = vdwg.mxu0
  %261 = vmatprep.subr.bf16.mxu0 %v159
  %262 = vmatpush1.bf16.msra.mxu0 %v158
  %263 = vmatprep.subr.bf16.mxu0 %v163
  %264 = vmatpush1.bf16.msra.mxu0 %v162
  %265 = vmatprep.subr.bf16.mxu0 %v167
  %266 = vmatpush1.bf16.msra.mxu0 %v166
  %267 = vmatprep.subr.bf16.mxu0 %v171
  %268 = vmatpush1.bf16.msra.mxu0 %v170
  %269 = vmatprep.subr.bf16.mxu0 %v175
  %270 = vmatpush1.bf16.msra.mxu0 %v174
  %271 = vmatprep.subr.bf16.mxu0 %v179
  %272 = vmatpush1.bf16.msra.mxu0 %v178
  %273 = vmatprep.subr.bf16.mxu0 %v183
  %274 = vmatpush1.bf16.msra.mxu0 %v182
  %275 = vmatprep.subr.bf16.mxu0 %v187
  %276 = vmatpush1.bf16.msra.mxu0 %v186
  %277 = vmatprep.subr.bf16.mxu0 0
  %278 = vmatpush1.bf16.msra.mxu0 0
  %279 = vmatprep.subr.bf16.mxu0 0
  %280 = vmatpush1.bf16.msra.mxu0 0
  %281 = vmatprep.subr.bf16.mxu0 0
  %282 = vmatpush1.bf16.msra.mxu0 0
  %283 = vmatprep.subr.bf16.mxu0 0
  %284 = vmatpush1.bf16.msra.mxu0 0
  %285 = vmatprep.subr.bf16.mxu0 0
  %286 = vmatpush1.bf16.msra.mxu0 0
  %287 = vmatprep.subr.bf16.mxu0 0
  %288 = vmatpush1.bf16.msra.mxu0 0
  %289 = vmatprep.subr.bf16.mxu0 0
  %290 = vmatpush1.bf16.msra.mxu0 0
  %291 = vmatprep.subr.bf16.mxu0 0
  %292 = vmatpush1.bf16.msra.mxu0 0
  %293 = vmatprep.mubr.bf16.mxu0 0
  %294 = vmatmul.mubr.bf16.gmra.mrb[0].mxu0 0
  %v295 = vpop.f32.mrb[0].mxu0
  %v296 = vadd.f32 0.0, %v295
  %v297 = vpop.f32.mrb[0].mxu0
  %v298 = vadd.f32 0.0, %v297
  %v299 = vpop.f32.mrb[0].mxu0
  %v300 = vpop.f32.mrb[0].mxu0
  %301 = vdwg.mxu0
  %v306 = vcombine.low %v255, %v257
  %v307 = vcombine.low %v296, %v298
  %v309 = vunpack.c.l.s4 1983009808
  %v310 = vunpack.c.0.s8 %v309
  %v311 = vlaneseq
  %v312 = vshrl.u32 %v311, 7
  %v313 = vsub.s32 %v310, %v312
  %v314 = vrot.slane %v306, %v313
  %v316 = vunpack.c.l.s4 1983009808
  %v317 = vunpack.c.0.s8 %v316
  %v318 = vlaneseq
  %v319 = vshrl.u32 %v318, 7
  %v320 = vsub.s32 %v317, %v319
  %v321 = vrot.slane %v307, %v320
  %v322 = vcombine.low %v314, %v321
  %v324 = vadd.f32 %v27, %v322
  %v325 = vxor.u32 %v324, 2147483648
  %v326 = vmul.f32 %v325, 1.442695
  %v327 = vpow.pop %v326
  %v328 = vadd.f32 %v327, 1.0
  %v329 = vrcp.pop %v328
  %v330 = vmul.f32 1.0, %v329
  %v332 = vrot.slane %v324, 2
  %v334 = vxor.u32 %v332, 2147483648
  %v335 = vmul.f32 %v334, 1.442695
  %v336 = vpow.pop %v335
  %v337 = vadd.f32 %v336, 1.0
  %v338 = vrcp.pop %v337
  %v339 = vmul.f32 1.0, %v338
  %v340 = vrot.slane %v324, 4
  %v342 = vtanh.pop %v340
  %v343 = vrot.slane %v324, 6
  %v345 = vxor.u32 %v343, 2147483648
  %v346 = vmul.f32 %v345, 1.442695
  %v347 = vpow.pop %v346
  %v348 = vadd.f32 %v347, 1.0
  %v349 = vrcp.pop %v348
  %v350 = vmul.f32 1.0, %v349
  %v351 = vmul.f32 %v339, 0.0
  %v352 = vmul.f32 %v330, %v342
  %v353 = vadd.f32 %v351, %v352
  %v354 = vtanh.pop %v353
  %v355 = vmul.f32 %v350, %v354
  %v356 = vld [vmem:[%s3] sm:$0xf]
  %v357 = vpack.c.bf16 %v355, %v355
  %v358 = vld [vmem:[%s2] sm:$0xff]
  %v359 = vld [vmem:[%s2 + $0x8] sm:$0xff]
  %v360 = vld [vmem:[%s2 + $0x10] sm:$0xff]
  %v361 = vld [vmem:[%s2 + $0x18] sm:$0xff]
  %v362 = vld [vmem:[%s2 + $0x20] sm:$0xff]
  %v363 = vld [vmem:[%s2 + $0x28] sm:$0xff]
  %v364 = vld [vmem:[%s2 + $0x30] sm:$0xff]
  %v365 = vld [vmem:[%s2 + $0x38] sm:$0xff]
  %v366 = vld [vmem:[%s2 + $0x40] sm:$0xff]
  %v367 = vld [vmem:[%s2 + $0x48] sm:$0xff]
  %v368 = vld [vmem:[%s2 + $0x50] sm:$0xff]
  %v369 = vld [vmem:[%s2 + $0x58] sm:$0xff]
  %v370 = vld [vmem:[%s2 + $0x60] sm:$0xff]
  %v371 = vld [vmem:[%s2 + $0x68] sm:$0xff]
  %v372 = vld [vmem:[%s2 + $0x70] sm:$0xff]
  %v373 = vld [vmem:[%s2 + $0x78] sm:$0xff]
  %v374 = vld [vmem:[%s2 + $0x80] sm:$0xff]
  %v375 = vld [vmem:[%s2 + $0x88] sm:$0xff]
  %v376 = vld [vmem:[%s2 + $0x90] sm:$0xff]
  %v377 = vld [vmem:[%s2 + $0x98] sm:$0xff]
  %v378 = vld [vmem:[%s2 + $0xa0] sm:$0xff]
  %v379 = vld [vmem:[%s2 + $0xa8] sm:$0xff]
  %v380 = vld [vmem:[%s2 + $0xb0] sm:$0xff]
  %v381 = vld [vmem:[%s2 + $0xb8] sm:$0xff]
  %v382 = vld [vmem:[%s2 + $0xc0] sm:$0xff]
  %v383 = vld [vmem:[%s2 + $0xc8] sm:$0xff]
  %v384 = vld [vmem:[%s2 + $0xd0] sm:$0xff]
  %v385 = vld [vmem:[%s2 + $0xd8] sm:$0xff]
  %v386 = vld [vmem:[%s2 + $0xe0] sm:$0xff]
  %v387 = vld [vmem:[%s2 + $0xe8] sm:$0xff]
  %v388 = vld [vmem:[%s2 + $0xf0] sm:$0xff]
  %v389 = vld [vmem:[%s2 + $0xf8] sm:$0xff]
  %v422 = vunpack.c.l.b16 %v358
  %v423 = vunpack.c.h.b16 %v358
  %v424 = vunpack.c.l.b16 %v359
  %v425 = vunpack.c.h.b16 %v359
  %v426 = vunpack.c.l.b16 %v360
  %v427 = vunpack.c.h.b16 %v360
  %v428 = vunpack.c.l.b16 %v361
  %v429 = vunpack.c.h.b16 %v361
  %v430 = vunpack.c.l.b16 %v362
  %v431 = vunpack.c.h.b16 %v362
  %v432 = vunpack.c.l.b16 %v363
  %v433 = vunpack.c.h.b16 %v363
  %v434 = vunpack.c.l.b16 %v364
  %v435 = vunpack.c.h.b16 %v364
  %v436 = vunpack.c.l.b16 %v365
  %v437 = vunpack.c.h.b16 %v365
  %v438 = vunpack.c.l.b16 %v366
  %v439 = vunpack.c.h.b16 %v366
  %v440 = vunpack.c.l.b16 %v367
  %v441 = vunpack.c.h.b16 %v367
  %v442 = vunpack.c.l.b16 %v368
  %v443 = vunpack.c.h.b16 %v368
  %v444 = vunpack.c.l.b16 %v369
  %v445 = vunpack.c.h.b16 %v369
  %v446 = vunpack.c.l.b16 %v370
  %v447 = vunpack.c.h.b16 %v370
  %v448 = vunpack.c.l.b16 %v371
  %v449 = vunpack.c.h.b16 %v371
  %v450 = vunpack.c.l.b16 %v372
  %v451 = vunpack.c.h.b16 %v372
  %v452 = vunpack.c.l.b16 %v373
  %v453 = vunpack.c.h.b16 %v373
  %v454 = vunpack.c.l.b16 %v374
  %v455 = vunpack.c.h.b16 %v374
  %v456 = vunpack.c.l.b16 %v375
  %v457 = vunpack.c.h.b16 %v375
  %v458 = vunpack.c.l.b16 %v376
  %v459 = vunpack.c.h.b16 %v376
  %v460 = vunpack.c.l.b16 %v377
  %v461 = vunpack.c.h.b16 %v377
  %v462 = vunpack.c.l.b16 %v378
  %v463 = vunpack.c.h.b16 %v378
  %v464 = vunpack.c.l.b16 %v379
  %v465 = vunpack.c.h.b16 %v379
  %v466 = vunpack.c.l.b16 %v380
  %v467 = vunpack.c.h.b16 %v380
  %v468 = vunpack.c.l.b16 %v381
  %v469 = vunpack.c.h.b16 %v381
  %v470 = vunpack.c.l.b16 %v382
  %v471 = vunpack.c.h.b16 %v382
  %v472 = vunpack.c.l.b16 %v383
  %v473 = vunpack.c.h.b16 %v383
  %v474 = vunpack.c.l.b16 %v384
  %v475 = vunpack.c.h.b16 %v384
  %v476 = vunpack.c.l.b16 %v385
  %v477 = vunpack.c.h.b16 %v385
  %v478 = vunpack.c.l.b16 %v386
  %v479 = vunpack.c.h.b16 %v386
  %v480 = vunpack.c.l.b16 %v387
  %v481 = vunpack.c.h.b16 %v387
  %v482 = vunpack.c.l.b16 %v388
  %v483 = vunpack.c.h.b16 %v388
  %v484 = vunpack.c.l.b16 %v389
  %v485 = vunpack.c.h.b16 %v389
  %v486 = vpack.c.b16 %v426, %v422
  %v487 = vpack.c.b16 %v427, %v423
  %v488 = vpack.c.b16 %v428, %v424
  %v489 = vpack.c.b16 %v429, %v425
  %v490 = vpack.c.b16 %v434, %v430
  %v491 = vpack.c.b16 %v435, %v431
  %v492 = vpack.c.b16 %v436, %v432
  %v493 = vpack.c.b16 %v437, %v433
  %v494 = vpack.c.b16 %v442, %v438
  %v495 = vpack.c.b16 %v443, %v439
  %v496 = vpack.c.b16 %v444, %v440
  %v497 = vpack.c.b16 %v445, %v441
  %v498 = vpack.c.b16 %v450, %v446
  %v499 = vpack.c.b16 %v451, %v447
  %v500 = vpack.c.b16 %v452, %v448
  %v501 = vpack.c.b16 %v453, %v449
  %v502 = vpack.c.b16 %v458, %v454
  %v503 = vpack.c.b16 %v459, %v455
  %v504 = vpack.c.b16 %v460, %v456
  %v505 = vpack.c.b16 %v461, %v457
  %v506 = vpack.c.b16 %v466, %v462
  %v507 = vpack.c.b16 %v467, %v463
  %v508 = vpack.c.b16 %v468, %v464
  %v509 = vpack.c.b16 %v469, %v465
  %v510 = vpack.c.b16 %v474, %v470
  %v511 = vpack.c.b16 %v475, %v471
  %v512 = vpack.c.b16 %v476, %v472
  %v513 = vpack.c.b16 %v477, %v473
  %v514 = vpack.c.b16 %v482, %v478
  %v515 = vpack.c.b16 %v483, %v479
  %v516 = vpack.c.b16 %v484, %v480
  %v517 = vpack.c.b16 %v485, %v481
  %550 = vmatprep.subr.bf16.mxu0 %v487
  %551 = vmatpush1.bf16.msra.mxu0 %v486
  %552 = vmatprep.subr.bf16.mxu0 %v491
  %553 = vmatpush1.bf16.msra.mxu0 %v490
  %554 = vmatprep.subr.bf16.mxu0 %v495
  %555 = vmatpush1.bf16.msra.mxu0 %v494
  %556 = vmatprep.subr.bf16.mxu0 %v499
  %557 = vmatpush1.bf16.msra.mxu0 %v498
  %558 = vmatprep.subr.bf16.mxu0 %v503
  %559 = vmatpush1.bf16.msra.mxu0 %v502
  %560 = vmatprep.subr.bf16.mxu0 %v507
  %561 = vmatpush1.bf16.msra.mxu0 %v506
  %562 = vmatprep.subr.bf16.mxu0 %v511
  %563 = vmatpush1.bf16.msra.mxu0 %v510
  %564 = vmatprep.subr.bf16.mxu0 %v515
  %565 = vmatpush1.bf16.msra.mxu0 %v514
  %566 = vmatprep.subr.bf16.mxu0 0
  %567 = vmatpush1.bf16.msra.mxu0 0
  %568 = vmatprep.subr.bf16.mxu0 0
  %569 = vmatpush1.bf16.msra.mxu0 0
  %570 = vmatprep.subr.bf16.mxu0 0
  %571 = vmatpush1.bf16.msra.mxu0 0
  %572 = vmatprep.subr.bf16.mxu0 0
  %573 = vmatpush1.bf16.msra.mxu0 0
  %574 = vmatprep.subr.bf16.mxu0 0
  %575 = vmatpush1.bf16.msra.mxu0 0
  %576 = vmatprep.subr.bf16.mxu0 0
  %577 = vmatpush1.bf16.msra.mxu0 0
  %578 = vmatprep.subr.bf16.mxu0 0
  %579 = vmatpush1.bf16.msra.mxu0 0
  %580 = vmatprep.subr.bf16.mxu0 0
  %581 = vmatpush1.bf16.msra.mxu0 0
  %582 = vmatprep.mubr.bf16.mxu0 0
  %583 = vmatmul.mubr.bf16.gmra.mrb[0].mxu0 %v357
  %v584 = vpop.f32.mrb[0].mxu0
  %v585 = vadd.f32 0.0, %v584
  %v586 = vpop.f32.mrb[0].mxu0
  %v587 = vadd.f32 0.0, %v586
  %v588 = vpop.f32.mrb[0].mxu0
  %v589 = vpop.f32.mrb[0].mxu0
  %590 = vdwg.mxu0
  %591 = vmatprep.subr.bf16.mxu0 %v489
  %592 = vmatpush1.bf16.msra.mxu0 %v488
  %593 = vmatprep.subr.bf16.mxu0 %v493
  %594 = vmatpush1.bf16.msra.mxu0 %v492
  %595 = vmatprep.subr.bf16.mxu0 %v497
  %596 = vmatpush1.bf16.msra.mxu0 %v496
  %597 = vmatprep.subr.bf16.mxu0 %v501
  %598 = vmatpush1.bf16.msra.mxu0 %v500
  %599 = vmatprep.subr.bf16.mxu0 %v505
  %600 = vmatpush1.bf16.msra.mxu0 %v504
  %601 = vmatprep.subr.bf16.mxu0 %v509
  %602 = vmatpush1.bf16.msra.mxu0 %v508
  %603 = vmatprep.subr.bf16.mxu0 %v513
  %604 = vmatpush1.bf16.msra.mxu0 %v512
  %605 = vmatprep.subr.bf16.mxu0 %v517
  %606 = vmatpush1.bf16.msra.mxu0 %v516
  %607 = vmatprep.subr.bf16.mxu0 0
  %608 = vmatpush1.bf16.msra.mxu0 0
  %609 = vmatprep.subr.bf16.mxu0 0
  %610 = vmatpush1.bf16.msra.mxu0 0
  %611 = vmatprep.subr.bf16.mxu0 0
  %612 = vmatpush1.bf16.msra.mxu0 0
  %613 = vmatprep.subr.bf16.mxu0 0
  %614 = vmatpush1.bf16.msra.mxu0 0
  %615 = vmatprep.subr.bf16.mxu0 0
  %616 = vmatpush1.bf16.msra.mxu0 0
  %617 = vmatprep.subr.bf16.mxu0 0
  %618 = vmatpush1.bf16.msra.mxu0 0
  %619 = vmatprep.subr.bf16.mxu0 0
  %620 = vmatpush1.bf16.msra.mxu0 0
  %621 = vmatprep.subr.bf16.mxu0 0
  %622 = vmatpush1.bf16.msra.mxu0 0
  %623 = vmatprep.mubr.bf16.mxu0 0
  %624 = vmatmul.mubr.bf16.gmra.mrb[0].mxu0 %v357
  %v625 = vpop.f32.mrb[0].mxu0
  %v626 = vadd.f32 0.0, %v625
  %v627 = vpop.f32.mrb[0].mxu0
  %v628 = vadd.f32 0.0, %v627
  %v629 = vpop.f32.mrb[0].mxu0
  %v630 = vpop.f32.mrb[0].mxu0
  %631 = vdwg.mxu0
  %v633 = vlaneseq
  %v634 = vshrl.u32 %v633, 7
  %v635 = vsub.s32 0, %v634
  %v636 = vrot.slane %v356, %v635
  %v637 = vlaneseq
  %v638 = vshrl.u32 %v637, 7
  %v639 = vsub.s32 1, %v638
  %v640 = vrot.slane %v356, %v639
  %v641 = vlaneseq
  %v642 = vshrl.u32 %v641, 7
  %v643 = vsub.s32 2, %v642
  %v644 = vrot.slane %v356, %v643
  %v645 = vlaneseq
  %v646 = vshrl.u32 %v645, 7
  %v647 = vsub.s32 3, %v646
  %v648 = vrot.slane %v356, %v647
  %v653 = vadd.f32 %v636, %v585
  %v654 = vadd.f32 %v640, %v587
  %v655 = vadd.f32 %v644, %v626
  %v656 = vadd.f32 %v648, %v628
  %v657 = vld [vmem:[%s4] sm:$0xff]
  %v658 = vld [vmem:[%s4 + $0x8] sm:$0xff]
  %v659 = vld [vmem:[%s4 + $0x10] sm:$0xff]
  %v660 = vld [vmem:[%s4 + $0x18] sm:$0xff]
  %v661 = vld [vmem:[%s4 + $0x20] sm:$0xff]
  %v662 = vld [vmem:[%s4 + $0x28] sm:$0xff]
  %v663 = vld [vmem:[%s4 + $0x30] sm:$0xff]
  %v664 = vld [vmem:[%s4 + $0x38] sm:$0xff]
  %v665 = vld [vmem:[%s4 + $0x40] sm:$0xff]
  %v666 = vld [vmem:[%s4 + $0x48] sm:$0xff]
  %v667 = vld [vmem:[%s4 + $0x50] sm:$0xff]
  %v668 = vld [vmem:[%s4 + $0x58] sm:$0xff]
  %v669 = vld [vmem:[%s4 + $0x60] sm:$0xff]
  %v670 = vld [vmem:[%s4 + $0x68] sm:$0xff]
  %v671 = vld [vmem:[%s4 + $0x70] sm:$0xff]
  %v672 = vld [vmem:[%s4 + $0x78] sm:$0xff]
  %v673 = vld [vmem:[%s4 + $0x80] sm:$0xff]
  %v674 = vld [vmem:[%s4 + $0x88] sm:$0xff]
  %v675 = vld [vmem:[%s4 + $0x90] sm:$0xff]
  %v676 = vld [vmem:[%s4 + $0x98] sm:$0xff]
  %v677 = vld [vmem:[%s4 + $0xa0] sm:$0xff]
  %v678 = vld [vmem:[%s4 + $0xa8] sm:$0xff]
  %v679 = vld [vmem:[%s4 + $0xb0] sm:$0xff]
  %v680 = vld [vmem:[%s4 + $0xb8] sm:$0xff]
  %v681 = vld [vmem:[%s4 + $0xc0] sm:$0xff]
  %v682 = vld [vmem:[%s4 + $0xc8] sm:$0xff]
  %v683 = vld [vmem:[%s4 + $0xd0] sm:$0xff]
  %v684 = vld [vmem:[%s4 + $0xd8] sm:$0xff]
  %v685 = vld [vmem:[%s4 + $0xe0] sm:$0xff]
  %v686 = vld [vmem:[%s4 + $0xe8] sm:$0xff]
  %v687 = vld [vmem:[%s4 + $0xf0] sm:$0xff]
  %v688 = vld [vmem:[%s4 + $0xf8] sm:$0xff]
  %v721 = vunpack.c.l.b16 %v657
  %v722 = vunpack.c.h.b16 %v657
  %v723 = vunpack.c.l.b16 %v658
  %v724 = vunpack.c.h.b16 %v658
  %v725 = vunpack.c.l.b16 %v659
  %v726 = vunpack.c.h.b16 %v659
  %v727 = vunpack.c.l.b16 %v660
  %v728 = vunpack.c.h.b16 %v660
  %v729 = vunpack.c.l.b16 %v661
  %v730 = vunpack.c.h.b16 %v661
  %v731 = vunpack.c.l.b16 %v662
  %v732 = vunpack.c.h.b16 %v662
  %v733 = vunpack.c.l.b16 %v663
  %v734 = vunpack.c.h.b16 %v663
  %v735 = vunpack.c.l.b16 %v664
  %v736 = vunpack.c.h.b16 %v664
  %v737 = vunpack.c.l.b16 %v665
  %v738 = vunpack.c.h.b16 %v665
  %v739 = vunpack.c.l.b16 %v666
  %v740 = vunpack.c.h.b16 %v666
  %v741 = vunpack.c.l.b16 %v667
  %v742 = vunpack.c.h.b16 %v667
  %v743 = vunpack.c.l.b16 %v668
  %v744 = vunpack.c.h.b16 %v668
  %v745 = vunpack.c.l.b16 %v669
  %v746 = vunpack.c.h.b16 %v669
  %v747 = vunpack.c.l.b16 %v670
  %v748 = vunpack.c.h.b16 %v670
  %v749 = vunpack.c.l.b16 %v671
  %v750 = vunpack.c.h.b16 %v671
  %v751 = vunpack.c.l.b16 %v672
  %v752 = vunpack.c.h.b16 %v672
  %v753 = vunpack.c.l.b16 %v673
  %v754 = vunpack.c.h.b16 %v673
  %v755 = vunpack.c.l.b16 %v674
  %v756 = vunpack.c.h.b16 %v674
  %v757 = vunpack.c.l.b16 %v675
  %v758 = vunpack.c.h.b16 %v675
  %v759 = vunpack.c.l.b16 %v676
  %v760 = vunpack.c.h.b16 %v676
  %v761 = vunpack.c.l.b16 %v677
  %v762 = vunpack.c.h.b16 %v677
  %v763 = vunpack.c.l.b16 %v678
  %v764 = vunpack.c.h.b16 %v678
  %v765 = vunpack.c.l.b16 %v679
  %v766 = vunpack.c.h.b16 %v679
  %v767 = vunpack.c.l.b16 %v680
  %v768 = vunpack.c.h.b16 %v680
  %v769 = vunpack.c.l.b16 %v681
  %v770 = vunpack.c.h.b16 %v681
  %v771 = vunpack.c.l.b16 %v682
  %v772 = vunpack.c.h.b16 %v682
  %v773 = vunpack.c.l.b16 %v683
  %v774 = vunpack.c.h.b16 %v683
  %v775 = vunpack.c.l.b16 %v684
  %v776 = vunpack.c.h.b16 %v684
  %v777 = vunpack.c.l.b16 %v685
  %v778 = vunpack.c.h.b16 %v685
  %v779 = vunpack.c.l.b16 %v686
  %v780 = vunpack.c.h.b16 %v686
  %v781 = vunpack.c.l.b16 %v687
  %v782 = vunpack.c.h.b16 %v687
  %v783 = vunpack.c.l.b16 %v688
  %v784 = vunpack.c.h.b16 %v688
  %v785 = vpack.c.b16 %v725, %v721
  %v786 = vpack.c.b16 %v726, %v722
  %v787 = vpack.c.b16 %v727, %v723
  %v788 = vpack.c.b16 %v728, %v724
  %v789 = vpack.c.b16 %v733, %v729
  %v790 = vpack.c.b16 %v734, %v730
  %v791 = vpack.c.b16 %v735, %v731
  %v792 = vpack.c.b16 %v736, %v732
  %v793 = vpack.c.b16 %v741, %v737
  %v794 = vpack.c.b16 %v742, %v738
  %v795 = vpack.c.b16 %v743, %v739
  %v796 = vpack.c.b16 %v744, %v740
  %v797 = vpack.c.b16 %v749, %v745
  %v798 = vpack.c.b16 %v750, %v746
  %v799 = vpack.c.b16 %v751, %v747
  %v800 = vpack.c.b16 %v752, %v748
  %v801 = vpack.c.b16 %v757, %v753
  %v802 = vpack.c.b16 %v758, %v754
  %v803 = vpack.c.b16 %v759, %v755
  %v804 = vpack.c.b16 %v760, %v756
  %v805 = vpack.c.b16 %v765, %v761
  %v806 = vpack.c.b16 %v766, %v762
  %v807 = vpack.c.b16 %v767, %v763
  %v808 = vpack.c.b16 %v768, %v764
  %v809 = vpack.c.b16 %v773, %v769
  %v810 = vpack.c.b16 %v774, %v770
  %v811 = vpack.c.b16 %v775, %v771
  %v812 = vpack.c.b16 %v776, %v772
  %v813 = vpack.c.b16 %v781, %v777
  %v814 = vpack.c.b16 %v782, %v778
  %v815 = vpack.c.b16 %v783, %v779
  %v816 = vpack.c.b16 %v784, %v780
  %849 = vmatprep.subr.bf16.mxu0 %v786
  %850 = vmatpush1.bf16.msra.mxu0 %v785
  %851 = vmatprep.subr.bf16.mxu0 %v790
  %852 = vmatpush1.bf16.msra.mxu0 %v789
  %853 = vmatprep.subr.bf16.mxu0 %v794
  %854 = vmatpush1.bf16.msra.mxu0 %v793
  %855 = vmatprep.subr.bf16.mxu0 %v798
  %856 = vmatpush1.bf16.msra.mxu0 %v797
  %857 = vmatprep.subr.bf16.mxu0 %v802
  %858 = vmatpush1.bf16.msra.mxu0 %v801
  %859 = vmatprep.subr.bf16.mxu0 %v806
  %860 = vmatpush1.bf16.msra.mxu0 %v805
  %861 = vmatprep.subr.bf16.mxu0 %v810
  %862 = vmatpush1.bf16.msra.mxu0 %v809
  %863 = vmatprep.subr.bf16.mxu0 %v814
  %864 = vmatpush1.bf16.msra.mxu0 %v813
  %865 = vmatprep.subr.bf16.mxu0 0
  %866 = vmatpush1.bf16.msra.mxu0 0
  %867 = vmatprep.subr.bf16.mxu0 0
  %868 = vmatpush1.bf16.msra.mxu0 0
  %869 = vmatprep.subr.bf16.mxu0 0
  %870 = vmatpush1.bf16.msra.mxu0 0
  %871 = vmatprep.subr.bf16.mxu0 0
  %872 = vmatpush1.bf16.msra.mxu0 0
  %873 = vmatprep.subr.bf16.mxu0 0
  %874 = vmatpush1.bf16.msra.mxu0 0
  %875 = vmatprep.subr.bf16.mxu0 0
  %876 = vmatpush1.bf16.msra.mxu0 0
  %877 = vmatprep.subr.bf16.mxu0 0
  %878 = vmatpush1.bf16.msra.mxu0 0
  %879 = vmatprep.subr.bf16.mxu0 0
  %880 = vmatpush1.bf16.msra.mxu0 0
  %881 = vmatprep.mubr.bf16.mxu0 0
  %882 = vmatmul.mubr.bf16.gmra.mrb[0].mxu0 0
  %v883 = vpop.f32.mrb[0].mxu0
  %v884 = vadd.f32 0.0, %v883
  %v885 = vpop.f32.mrb[0].mxu0
  %v886 = vadd.f32 0.0, %v885
  %v887 = vpop.f32.mrb[0].mxu0
  %v888 = vpop.f32.mrb[0].mxu0
  %889 = vdwg.mxu0
  %890 = vmatprep.subr.bf16.mxu0 %v788
  %891 = vmatpush1.bf16.msra.mxu0 %v787
  %892 = vmatprep.subr.bf16.mxu0 %v792
  %893 = vmatpush1.bf16.msra.mxu0 %v791
  %894 = vmatprep.subr.bf16.mxu0 %v796
  %895 = vmatpush1.bf16.msra.mxu0 %v795
  %896 = vmatprep.subr.bf16.mxu0 %v800
  %897 = vmatpush1.bf16.msra.mxu0 %v799
  %898 = vmatprep.subr.bf16.mxu0 %v804
  %899 = vmatpush1.bf16.msra.mxu0 %v803
  %900 = vmatprep.subr.bf16.mxu0 %v808
  %901 = vmatpush1.bf16.msra.mxu0 %v807
  %902 = vmatprep.subr.bf16.mxu0 %v812
  %903 = vmatpush1.bf16.msra.mxu0 %v811
  %904 = vmatprep.subr.bf16.mxu0 %v816
  %905 = vmatpush1.bf16.msra.mxu0 %v815
  %906 = vmatprep.subr.bf16.mxu0 0
  %907 = vmatpush1.bf16.msra.mxu0 0
  %908 = vmatprep.subr.bf16.mxu0 0
  %909 = vmatpush1.bf16.msra.mxu0 0
  %910 = vmatprep.subr.bf16.mxu0 0
  %911 = vmatpush1.bf16.msra.mxu0 0
  %912 = vmatprep.subr.bf16.mxu0 0
  %913 = vmatpush1.bf16.msra.mxu0 0
  %914 = vmatprep.subr.bf16.mxu0 0
  %915 = vmatpush1.bf16.msra.mxu0 0
  %916 = vmatprep.subr.bf16.mxu0 0
  %917 = vmatpush1.bf16.msra.mxu0 0
  %918 = vmatprep.subr.bf16.mxu0 0
  %919 = vmatpush1.bf16.msra.mxu0 0
  %920 = vmatprep.subr.bf16.mxu0 0
  %921 = vmatpush1.bf16.msra.mxu0 0
  %922 = vmatprep.mubr.bf16.mxu0 0
  %923 = vmatmul.mubr.bf16.gmra.mrb[0].mxu0 0
  %v924 = vpop.f32.mrb[0].mxu0
  %v925 = vadd.f32 0.0, %v924
  %v926 = vpop.f32.mrb[0].mxu0
  %v927 = vadd.f32 0.0, %v926
  %v928 = vpop.f32.mrb[0].mxu0
  %v929 = vpop.f32.mrb[0].mxu0
  %930 = vdwg.mxu0
  %v931 = vadd.f32 %v653, %v884
  %v932 = vadd.f32 %v654, %v886
  %v933 = vadd.f32 %v655, %v925
  %v934 = vadd.f32 %v656, %v927
  %v935 = vxor.u32 %v931, 2147483648
  %v936 = vmul.f32 %v935, 1.442695
  %v937 = vpow.pop %v936
  %v938 = vadd.f32 %v937, 1.0
  %v939 = vrcp.pop %v938
  %v940 = vmul.f32 1.0, %v939
  %v941 = vxor.u32 %v932, 2147483648
  %v942 = vmul.f32 %v941, 1.442695
  %v943 = vpow.pop %v942
  %v944 = vadd.f32 %v943, 1.0
  %v945 = vrcp.pop %v944
  %v946 = vmul.f32 1.0, %v945
  %v947 = vtanh.pop %v933
  %v948 = vxor.u32 %v934, 2147483648
  %v949 = vmul.f32 %v948, 1.442695
  %v950 = vpow.pop %v949
  %v951 = vadd.f32 %v950, 1.0
  %v952 = vrcp.pop %v951
  %v953 = vmul.f32 1.0, %v952
  %v954 = vmul.f32 %v946, 0.0
  %v955 = vmul.f32 %v940, %v947
  %v956 = vadd.f32 %v954, %v955
  %v957 = vtanh.pop %v956
  %v958 = vmul.f32 %v953, %v957
  %v959 = vpack.c.bf16 %v958, %v958
  %v960 = vld [vmem:[%s5] sm:$0xf]
  %v961 = vld [vmem:[%s5 + $0x4] sm:$0xf]
  %v962 = vld [vmem:[%s5 + $0x8] sm:$0xf]
  %v963 = vld [vmem:[%s5 + $0xc] sm:$0xf]
  %v964 = vld [vmem:[%s5 + $0x10] sm:$0xf]
  %v965 = vld [vmem:[%s5 + $0x14] sm:$0xf]
  %v966 = vld [vmem:[%s5 + $0x18] sm:$0xf]
  %v967 = vld [vmem:[%s5 + $0x1c] sm:$0xf]
  %v968 = vld [vmem:[%s5 + $0x20] sm:$0xf]
  %v969 = vld [vmem:[%s5 + $0x24] sm:$0xf]
  %v970 = vld [vmem:[%s5 + $0x28] sm:$0xf]
  %v971 = vld [vmem:[%s5 + $0x2c] sm:$0xf]
  %v972 = vld [vmem:[%s5 + $0x30] sm:$0xf]
  %v973 = vld [vmem:[%s5 + $0x34] sm:$0xf]
  %v974 = vld [vmem:[%s5 + $0x38] sm:$0xf]
  %v975 = vld [vmem:[%s5 + $0x3c] sm:$0xf]
  %v976 = vld [vmem:[%s6] sm:$0x1]
  %v978 = vlaneseq
  %v979 = vshrl.u32 %v978, 7
  %v980 = vsub.s32 0, %v979
  %v981 = vrot.slane %v976, %v980
  %v999 = vunpack.c.l.b16 %v960
  %v1000 = vunpack.c.l.b16 %v961
  %v1001 = vunpack.c.l.b16 %v962
  %v1002 = vunpack.c.l.b16 %v963
  %v1003 = vunpack.c.l.b16 %v964
  %v1004 = vunpack.c.l.b16 %v965
  %v1005 = vunpack.c.l.b16 %v966
  %v1006 = vunpack.c.l.b16 %v967
  %v1007 = vunpack.c.l.b16 %v968
  %v1008 = vunpack.c.l.b16 %v969
  %v1009 = vunpack.c.l.b16 %v970
  %v1010 = vunpack.c.l.b16 %v971
  %v1011 = vunpack.c.l.b16 %v972
  %v1012 = vunpack.c.l.b16 %v973
  %v1013 = vunpack.c.l.b16 %v974
  %v1014 = vunpack.c.l.b16 %v975
  %v1015 = vpack.c.b16 %v1000, %v999
  %v1016 = vpack.c.b16 %v1002, %v1001
  %v1017 = vpack.c.b16 %v1004, %v1003
  %v1018 = vpack.c.b16 %v1006, %v1005
  %v1019 = vpack.c.b16 %v1008, %v1007
  %v1020 = vpack.c.b16 %v1010, %v1009
  %v1021 = vpack.c.b16 %v1012, %v1011
  %v1022 = vpack.c.b16 %v1014, %v1013
  %1031 = vmatprep.subr.bf16.mxu0 0
  %1032 = vmatpush1.bf16.msra.mxu0 %v1015
  %1033 = vmatprep.subr.bf16.mxu0 0
  %1034 = vmatpush1.bf16.msra.mxu0 %v1016
  %1035 = vmatprep.subr.bf16.mxu0 0
  %1036 = vmatpush1.bf16.msra.mxu0 %v1017
  %1037 = vmatprep.subr.bf16.mxu0 0
  %1038 = vmatpush1.bf16.msra.mxu0 %v1018
  %1039 = vmatprep.subr.bf16.mxu0 0
  %1040 = vmatpush1.bf16.msra.mxu0 %v1019
  %1041 = vmatprep.subr.bf16.mxu0 0
  %1042 = vmatpush1.bf16.msra.mxu0 %v1020
  %1043 = vmatprep.subr.bf16.mxu0 0
  %1044 = vmatpush1.bf16.msra.mxu0 %v1021
  %1045 = vmatprep.subr.bf16.mxu0 0
  %1046 = vmatpush1.bf16.msra.mxu0 %v1022
  %1047 = vmatprep.subr.bf16.mxu0 0
  %1048 = vmatpush1.bf16.msra.mxu0 0
  %1049 = vmatprep.subr.bf16.mxu0 0
  %1050 = vmatpush1.bf16.msra.mxu0 0
  %1051 = vmatprep.subr.bf16.mxu0 0
  %1052 = vmatpush1.bf16.msra.mxu0 0
  %1053 = vmatprep.subr.bf16.mxu0 0
  %1054 = vmatpush1.bf16.msra.mxu0 0
  %1055 = vmatprep.subr.bf16.mxu0 0
  %1056 = vmatpush1.bf16.msra.mxu0 0
  %1057 = vmatprep.subr.bf16.mxu0 0
  %1058 = vmatpush1.bf16.msra.mxu0 0
  %1059 = vmatprep.subr.bf16.mxu0 0
  %1060 = vmatpush1.bf16.msra.mxu0 0
  %1061 = vmatprep.subr.bf16.mxu0 0
  %1062 = vmatpush1.bf16.msra.mxu0 0
  %1063 = vmatprep.mubr.bf16.mxu0 0
  %1064 = vmatmul.mubr.bf16.gmra.mrb[0].mxu0 %v959
  %v1065 = vpop.f32.mrb[0].mxu0
  %v1066 = vadd.f32 %v981, %v1065
  %v1067 = vpop.f32.mrb[0].mxu0
  %v1068 = vpop.f32.mrb[0].mxu0
  %v1069 = vpop.f32.mrb[0].mxu0
  %1070 = vdwg.mxu0
  %1071 = vst [vmem:[%s7] sm:$0x3] %v1066
  %s1072 = scalar_lea.vmem %s0, 8
  %v1073 = vld [vmem:[%s1072] sm:$0xff]
  %v1074 = vld [vmem:[%s1] sm:$0xff]
  %v1075 = vld [vmem:[%s1 + $0x8] sm:$0xff]
  %v1076 = vld [vmem:[%s1 + $0x10] sm:$0xff]
  %v1077 = vld [vmem:[%s1 + $0x18] sm:$0xff]
  %v1078 = vld [vmem:[%s1 + $0x20] sm:$0xff]
  %v1079 = vld [vmem:[%s1 + $0x28] sm:$0xff]
  %v1080 = vld [vmem:[%s1 + $0x30] sm:$0xff]
  %v1081 = vld [vmem:[%s1 + $0x38] sm:$0xff]
  %v1082 = vld [vmem:[%s1 + $0x40] sm:$0xff]
  %v1083 = vld [vmem:[%s1 + $0x48] sm:$0xff]
  %v1084 = vld [vmem:[%s1 + $0x50] sm:$0xff]
  %v1085 = vld [vmem:[%s1 + $0x58] sm:$0xff]
  %v1086 = vld [vmem:[%s1 + $0x60] sm:$0xff]
  %v1087 = vld [vmem:[%s1 + $0x68] sm:$0xff]
  %v1088 = vld [vmem:[%s1 + $0x70] sm:$0xff]
  %v1089 = vld [vmem:[%s1 + $0x78] sm:$0xff]
  %v1090 = vld [vmem:[%s1 + $0x80] sm:$0xff]
  %v1091 = vld [vmem:[%s1 + $0x88] sm:$0xff]
  %v1092 = vld [vmem:[%s1 + $0x90] sm:$0xff]
  %v1093 = vld [vmem:[%s1 + $0x98] sm:$0xff]
  %v1094 = vld [vmem:[%s1 + $0xa0] sm:$0xff]
  %v1095 = vld [vmem:[%s1 + $0xa8] sm:$0xff]
  %v1096 = vld [vmem:[%s1 + $0xb0] sm:$0xff]
  %v1097 = vld [vmem:[%s1 + $0xb8] sm:$0xff]
  %v1098 = vld [vmem:[%s1 + $0xc0] sm:$0xff]
  %v1099 = vld [vmem:[%s1 + $0xc8] sm:$0xff]
  %v1100 = vld [vmem:[%s1 + $0xd0] sm:$0xff]
  %v1101 = vld [vmem:[%s1 + $0xd8] sm:$0xff]
  %v1102 = vld [vmem:[%s1 + $0xe0] sm:$0xff]
  %v1103 = vld [vmem:[%s1 + $0xe8] sm:$0xff]
  %v1104 = vld [vmem:[%s1 + $0xf0] sm:$0xff]
  %v1105 = vld [vmem:[%s1 + $0xf8] sm:$0xff]
  %v1138 = vunpack.c.l.b16 %v1074
  %v1139 = vunpack.c.h.b16 %v1074
  %v1140 = vunpack.c.l.b16 %v1075
  %v1141 = vunpack.c.h.b16 %v1075
  %v1142 = vunpack.c.l.b16 %v1076
  %v1143 = vunpack.c.h.b16 %v1076
  %v1144 = vunpack.c.l.b16 %v1077
  %v1145 = vunpack.c.h.b16 %v1077
  %v1146 = vunpack.c.l.b16 %v1078
  %v1147 = vunpack.c.h.b16 %v1078
  %v1148 = vunpack.c.l.b16 %v1079
  %v1149 = vunpack.c.h.b16 %v1079
  %v1150 = vunpack.c.l.b16 %v1080
  %v1151 = vunpack.c.h.b16 %v1080
  %v1152 = vunpack.c.l.b16 %v1081
  %v1153 = vunpack.c.h.b16 %v1081
  %v1154 = vunpack.c.l.b16 %v1082
  %v1155 = vunpack.c.h.b16 %v1082
  %v1156 = vunpack.c.l.b16 %v1083
  %v1157 = vunpack.c.h.b16 %v1083
  %v1158 = vunpack.c.l.b16 %v1084
  %v1159 = vunpack.c.h.b16 %v1084
  %v1160 = vunpack.c.l.b16 %v1085
  %v1161 = vunpack.c.h.b16 %v1085
  %v1162 = vunpack.c.l.b16 %v1086
  %v1163 = vunpack.c.h.b16 %v1086
  %v1164 = vunpack.c.l.b16 %v1087
  %v1165 = vunpack.c.h.b16 %v1087
  %v1166 = vunpack.c.l.b16 %v1088
  %v1167 = vunpack.c.h.b16 %v1088
  %v1168 = vunpack.c.l.b16 %v1089
  %v1169 = vunpack.c.h.b16 %v1089
  %v1170 = vunpack.c.l.b16 %v1090
  %v1171 = vunpack.c.h.b16 %v1090
  %v1172 = vunpack.c.l.b16 %v1091
  %v1173 = vunpack.c.h.b16 %v1091
  %v1174 = vunpack.c.l.b16 %v1092
  %v1175 = vunpack.c.h.b16 %v1092
  %v1176 = vunpack.c.l.b16 %v1093
  %v1177 = vunpack.c.h.b16 %v1093
  %v1178 = vunpack.c.l.b16 %v1094
  %v1179 = vunpack.c.h.b16 %v1094
  %v1180 = vunpack.c.l.b16 %v1095
  %v1181 = vunpack.c.h.b16 %v1095
  %v1182 = vunpack.c.l.b16 %v1096
  %v1183 = vunpack.c.h.b16 %v1096
  %v1184 = vunpack.c.l.b16 %v1097
  %v1185 = vunpack.c.h.b16 %v1097
  %v1186 = vunpack.c.l.b16 %v1098
  %v1187 = vunpack.c.h.b16 %v1098
  %v1188 = vunpack.c.l.b16 %v1099
  %v1189 = vunpack.c.h.b16 %v1099
  %v1190 = vunpack.c.l.b16 %v1100
  %v1191 = vunpack.c.h.b16 %v1100
  %v1192 = vunpack.c.l.b16 %v1101
  %v1193 = vunpack.c.h.b16 %v1101
  %v1194 = vunpack.c.l.b16 %v1102
  %v1195 = vunpack.c.h.b16 %v1102
  %v1196 = vunpack.c.l.b16 %v1103
  %v1197 = vunpack.c.h.b16 %v1103
  %v1198 = vunpack.c.l.b16 %v1104
  %v1199 = vunpack.c.h.b16 %v1104
  %v1200 = vunpack.c.l.b16 %v1105
  %v1201 = vunpack.c.h.b16 %v1105
  %v1202 = vpack.c.b16 %v1142, %v1138
  %v1203 = vpack.c.b16 %v1143, %v1139
  %v1204 = vpack.c.b16 %v1144, %v1140
  %v1205 = vpack.c.b16 %v1145, %v1141
  %v1206 = vpack.c.b16 %v1150, %v1146
  %v1207 = vpack.c.b16 %v1151, %v1147
  %v1208 = vpack.c.b16 %v1152, %v1148
  %v1209 = vpack.c.b16 %v1153, %v1149
  %v1210 = vpack.c.b16 %v1158, %v1154
  %v1211 = vpack.c.b16 %v1159, %v1155
  %v1212 = vpack.c.b16 %v1160, %v1156
  %v1213 = vpack.c.b16 %v1161, %v1157
  %v1214 = vpack.c.b16 %v1166, %v1162
  %v1215 = vpack.c.b16 %v1167, %v1163
  %v1216 = vpack.c.b16 %v1168, %v1164
  %v1217 = vpack.c.b16 %v1169, %v1165
  %v1218 = vpack.c.b16 %v1174, %v1170
  %v1219 = vpack.c.b16 %v1175, %v1171
  %v1220 = vpack.c.b16 %v1176, %v1172
  %v1221 = vpack.c.b16 %v1177, %v1173
  %v1222 = vpack.c.b16 %v1182, %v1178
  %v1223 = vpack.c.b16 %v1183, %v1179
  %v1224 = vpack.c.b16 %v1184, %v1180
  %v1225 = vpack.c.b16 %v1185, %v1181
  %v1226 = vpack.c.b16 %v1190, %v1186
  %v1227 = vpack.c.b16 %v1191, %v1187
  %v1228 = vpack.c.b16 %v1192, %v1188
  %v1229 = vpack.c.b16 %v1193, %v1189
  %v1230 = vpack.c.b16 %v1198, %v1194
  %v1231 = vpack.c.b16 %v1199, %v1195
  %v1232 = vpack.c.b16 %v1200, %v1196
  %v1233 = vpack.c.b16 %v1201, %v1197
  %1266 = vmatprep.subr.bf16.mxu0 %v1203
  %1267 = vmatpush1.bf16.msra.mxu0 %v1202
  %1268 = vmatprep.subr.bf16.mxu0 %v1207
  %1269 = vmatpush1.bf16.msra.mxu0 %v1206
  %1270 = vmatprep.subr.bf16.mxu0 %v1211
  %1271 = vmatpush1.bf16.msra.mxu0 %v1210
  %1272 = vmatprep.subr.bf16.mxu0 %v1215
  %1273 = vmatpush1.bf16.msra.mxu0 %v1214
  %1274 = vmatprep.subr.bf16.mxu0 %v1219
  %1275 = vmatpush1.bf16.msra.mxu0 %v1218
  %1276 = vmatprep.subr.bf16.mxu0 %v1223
  %1277 = vmatpush1.bf16.msra.mxu0 %v1222
  %1278 = vmatprep.subr.bf16.mxu0 %v1227
  %1279 = vmatpush1.bf16.msra.mxu0 %v1226
  %1280 = vmatprep.subr.bf16.mxu0 %v1231
  %1281 = vmatpush1.bf16.msra.mxu0 %v1230
  %1282 = vmatprep.subr.bf16.mxu0 0
  %1283 = vmatpush1.bf16.msra.mxu0 0
  %1284 = vmatprep.subr.bf16.mxu0 0
  %1285 = vmatpush1.bf16.msra.mxu0 0
  %1286 = vmatprep.subr.bf16.mxu0 0
  %1287 = vmatpush1.bf16.msra.mxu0 0
  %1288 = vmatprep.subr.bf16.mxu0 0
  %1289 = vmatpush1.bf16.msra.mxu0 0
  %1290 = vmatprep.subr.bf16.mxu0 0
  %1291 = vmatpush1.bf16.msra.mxu0 0
  %1292 = vmatprep.subr.bf16.mxu0 0
  %1293 = vmatpush1.bf16.msra.mxu0 0
  %1294 = vmatprep.subr.bf16.mxu0 0
  %1295 = vmatpush1.bf16.msra.mxu0 0
  %1296 = vmatprep.subr.bf16.mxu0 0
  %1297 = vmatpush1.bf16.msra.mxu0 0
  %1298 = vmatprep.mubr.bf16.mxu0 0
  %1299 = vmatmul.mubr.bf16.gmra.mrb[0].mxu0 %v357
  %v1300 = vpop.f32.mrb[0].mxu0
  %v1301 = vadd.f32 0.0, %v1300
  %v1302 = vpop.f32.mrb[0].mxu0
  %v1303 = vadd.f32 0.0, %v1302
  %v1304 = vpop.f32.mrb[0].mxu0
  %v1305 = vpop.f32.mrb[0].mxu0
  %1306 = vdwg.mxu0
  %1307 = vmatprep.subr.bf16.mxu0 %v1205
  %1308 = vmatpush1.bf16.msra.mxu0 %v1204
  %1309 = vmatprep.subr.bf16.mxu0 %v1209
  %1310 = vmatpush1.bf16.msra.mxu0 %v1208
  %1311 = vmatprep.subr.bf16.mxu0 %v1213
  %1312 = vmatpush1.bf16.msra.mxu0 %v1212
  %1313 = vmatprep.subr.bf16.mxu0 %v1217
  %1314 = vmatpush1.bf16.msra.mxu0 %v1216
  %1315 = vmatprep.subr.bf16.mxu0 %v1221
  %1316 = vmatpush1.bf16.msra.mxu0 %v1220
  %1317 = vmatprep.subr.bf16.mxu0 %v1225
  %1318 = vmatpush1.bf16.msra.mxu0 %v1224
  %1319 = vmatprep.subr.bf16.mxu0 %v1229
  %1320 = vmatpush1.bf16.msra.mxu0 %v1228
  %1321 = vmatprep.subr.bf16.mxu0 %v1233
  %1322 = vmatpush1.bf16.msra.mxu0 %v1232
  %1323 = vmatprep.subr.bf16.mxu0 0
  %1324 = vmatpush1.bf16.msra.mxu0 0
  %1325 = vmatprep.subr.bf16.mxu0 0
  %1326 = vmatpush1.bf16.msra.mxu0 0
  %1327 = vmatprep.subr.bf16.mxu0 0
  %1328 = vmatpush1.bf16.msra.mxu0 0
  %1329 = vmatprep.subr.bf16.mxu0 0
  %1330 = vmatpush1.bf16.msra.mxu0 0
  %1331 = vmatprep.subr.bf16.mxu0 0
  %1332 = vmatpush1.bf16.msra.mxu0 0
  %1333 = vmatprep.subr.bf16.mxu0 0
  %1334 = vmatpush1.bf16.msra.mxu0 0
  %1335 = vmatprep.subr.bf16.mxu0 0
  %1336 = vmatpush1.bf16.msra.mxu0 0
  %1337 = vmatprep.subr.bf16.mxu0 0
  %1338 = vmatpush1.bf16.msra.mxu0 0
  %1339 = vmatprep.mubr.bf16.mxu0 0
  %1340 = vmatmul.mubr.bf16.gmra.mrb[0].mxu0 %v357
  %v1341 = vpop.f32.mrb[0].mxu0
  %v1342 = vadd.f32 0.0, %v1341
  %v1343 = vpop.f32.mrb[0].mxu0
  %v1344 = vadd.f32 0.0, %v1343
  %v1345 = vpop.f32.mrb[0].mxu0
  %v1346 = vpop.f32.mrb[0].mxu0
  %1347 = vdwg.mxu0
  %v1352 = vcombine.low %v1301, %v1303
  %v1353 = vcombine.low %v1342, %v1344
  %v1355 = vunpack.c.l.s4 1983009808
  %v1356 = vunpack.c.0.s8 %v1355
  %v1357 = vlaneseq
  %v1358 = vshrl.u32 %v1357, 7
  %v1359 = vsub.s32 %v1356, %v1358
  %v1360 = vrot.slane %v1352, %v1359
  %v1362 = vunpack.c.l.s4 1983009808
  %v1363 = vunpack.c.0.s8 %v1362
  %v1364 = vlaneseq
  %v1365 = vshrl.u32 %v1364, 7
  %v1366 = vsub.s32 %v1363, %v1365
  %v1367 = vrot.slane %v1353, %v1366
  %v1368 = vcombine.low %v1360, %v1367
  %v1370 = vadd.f32 %v1073, %v1368
  %v1371 = vxor.u32 %v1370, 2147483648
  %v1372 = vmul.f32 %v1371, 1.442695
  %v1373 = vpow.pop %v1372
  %v1374 = vadd.f32 %v1373, 1.0
  %v1375 = vrcp.pop %v1374
  %v1376 = vmul.f32 1.0, %v1375
  %v1378 = vrot.slane %v1370, 2
  %v1380 = vxor.u32 %v1378, 2147483648
  %v1381 = vmul.f32 %v1380, 1.442695
  %v1382 = vpow.pop %v1381
  %v1383 = vadd.f32 %v1382, 1.0
  %v1384 = vrcp.pop %v1383
  %v1385 = vmul.f32 1.0, %v1384
  %v1386 = vrot.slane %v1370, 4
  %v1388 = vtanh.pop %v1386
  %v1389 = vrot.slane %v1370, 6
  %v1391 = vxor.u32 %v1389, 2147483648
  %v1392 = vmul.f32 %v1391, 1.442695
  %v1393 = vpow.pop %v1392
  %v1394 = vadd.f32 %v1393, 1.0
  %v1395 = vrcp.pop %v1394
  %v1396 = vmul.f32 1.0, %v1395
  %v1397 = vmul.f32 %v1385, %v353
  %v1398 = vmul.f32 %v1376, %v1388
  %v1399 = vadd.f32 %v1397, %v1398
  %v1400 = vtanh.pop %v1399
  %v1401 = vmul.f32 %v1396, %v1400
  %v1402 = vld [vmem:[%s3] sm:$0xf]
  %v1403 = vpack.c.bf16 %v1401, %v1401
  %v1404 = vld [vmem:[%s2] sm:$0xff]
  %v1405 = vld [vmem:[%s2 + $0x8] sm:$0xff]
  %v1406 = vld [vmem:[%s2 + $0x10] sm:$0xff]
  %v1407 = vld [vmem:[%s2 + $0x18] sm:$0xff]
  %v1408 = vld [vmem:[%s2 + $0x20] sm:$0xff]
  %v1409 = vld [vmem:[%s2 + $0x28] sm:$0xff]
  %v1410 = vld [vmem:[%s2 + $0x30] sm:$0xff]
  %v1411 = vld [vmem:[%s2 + $0x38] sm:$0xff]
  %v1412 = vld [vmem:[%s2 + $0x40] sm:$0xff]
  %v1413 = vld [vmem:[%s2 + $0x48] sm:$0xff]
  %v1414 = vld [vmem:[%s2 + $0x50] sm:$0xff]
  %v1415 = vld [vmem:[%s2 + $0x58] sm:$0xff]
  %v1416 = vld [vmem:[%s2 + $0x60] sm:$0xff]
  %v1417 = vld [vmem:[%s2 + $0x68] sm:$0xff]
  %v1418 = vld [vmem:[%s2 + $0x70] sm:$0xff]
  %v1419 = vld [vmem:[%s2 + $0x78] sm:$0xff]
  %v1420 = vld [vmem:[%s2 + $0x80] sm:$0xff]
  %v1421 = vld [vmem:[%s2 + $0x88] sm:$0xff]
  %v1422 = vld [vmem:[%s2 + $0x90] sm:$0xff]
  %v1423 = vld [vmem:[%s2 + $0x98] sm:$0xff]
  %v1424 = vld [vmem:[%s2 + $0xa0] sm:$0xff]
  %v1425 = vld [vmem:[%s2 + $0xa8] sm:$0xff]
  %v1426 = vld [vmem:[%s2 + $0xb0] sm:$0xff]
  %v1427 = vld [vmem:[%s2 + $0xb8] sm:$0xff]
  %v1428 = vld [vmem:[%s2 + $0xc0] sm:$0xff]
  %v1429 = vld [vmem:[%s2 + $0xc8] sm:$0xff]
  %v1430 = vld [vmem:[%s2 + $0xd0] sm:$0xff]
  %v1431 = vld [vmem:[%s2 + $0xd8] sm:$0xff]
  %v1432 = vld [vmem:[%s2 + $0xe0] sm:$0xff]
  %v1433 = vld [vmem:[%s2 + $0xe8] sm:$0xff]
  %v1434 = vld [vmem:[%s2 + $0xf0] sm:$0xff]
  %v1435 = vld [vmem:[%s2 + $0xf8] sm:$0xff]
  %v1468 = vunpack.c.l.b16 %v1404
  %v1469 = vunpack.c.h.b16 %v1404
  %v1470 = vunpack.c.l.b16 %v1405
  %v1471 = vunpack.c.h.b16 %v1405
  %v1472 = vunpack.c.l.b16 %v1406
  %v1473 = vunpack.c.h.b16 %v1406
  %v1474 = vunpack.c.l.b16 %v1407
  %v1475 = vunpack.c.h.b16 %v1407
  %v1476 = vunpack.c.l.b16 %v1408
  %v1477 = vunpack.c.h.b16 %v1408
  %v1478 = vunpack.c.l.b16 %v1409
  %v1479 = vunpack.c.h.b16 %v1409
  %v1480 = vunpack.c.l.b16 %v1410
  %v1481 = vunpack.c.h.b16 %v1410
  %v1482 = vunpack.c.l.b16 %v1411
  %v1483 = vunpack.c.h.b16 %v1411
  %v1484 = vunpack.c.l.b16 %v1412
  %v1485 = vunpack.c.h.b16 %v1412
  %v1486 = vunpack.c.l.b16 %v1413
  %v1487 = vunpack.c.h.b16 %v1413
  %v1488 = vunpack.c.l.b16 %v1414
  %v1489 = vunpack.c.h.b16 %v1414
  %v1490 = vunpack.c.l.b16 %v1415
  %v1491 = vunpack.c.h.b16 %v1415
  %v1492 = vunpack.c.l.b16 %v1416
  %v1493 = vunpack.c.h.b16 %v1416
  %v1494 = vunpack.c.l.b16 %v1417
  %v1495 = vunpack.c.h.b16 %v1417
  %v1496 = vunpack.c.l.b16 %v1418
  %v1497 = vunpack.c.h.b16 %v1418
  %v1498 = vunpack.c.l.b16 %v1419
  %v1499 = vunpack.c.h.b16 %v1419
  %v1500 = vunpack.c.l.b16 %v1420
  %v1501 = vunpack.c.h.b16 %v1420
  %v1502 = vunpack.c.l.b16 %v1421
  %v1503 = vunpack.c.h.b16 %v1421
  %v1504 = vunpack.c.l.b16 %v1422
  %v1505 = vunpack.c.h.b16 %v1422
  %v1506 = vunpack.c.l.b16 %v1423
  %v1507 = vunpack.c.h.b16 %v1423
  %v1508 = vunpack.c.l.b16 %v1424
  %v1509 = vunpack.c.h.b16 %v1424
  %v1510 = vunpack.c.l.b16 %v1425
  %v1511 = vunpack.c.h.b16 %v1425
  %v1512 = vunpack.c.l.b16 %v1426
  %v1513 = vunpack.c.h.b16 %v1426
  %v1514 = vunpack.c.l.b16 %v1427
  %v1515 = vunpack.c.h.b16 %v1427
  %v1516 = vunpack.c.l.b16 %v1428
  %v1517 = vunpack.c.h.b16 %v1428
  %v1518 = vunpack.c.l.b16 %v1429
  %v1519 = vunpack.c.h.b16 %v1429
  %v1520 = vunpack.c.l.b16 %v1430
  %v1521 = vunpack.c.h.b16 %v1430
  %v1522 = vunpack.c.l.b16 %v1431
  %v1523 = vunpack.c.h.b16 %v1431
  %v1524 = vunpack.c.l.b16 %v1432
  %v1525 = vunpack.c.h.b16 %v1432
  %v1526 = vunpack.c.l.b16 %v1433
  %v1527 = vunpack.c.h.b16 %v1433
  %v1528 = vunpack.c.l.b16 %v1434
  %v1529 = vunpack.c.h.b16 %v1434
  %v1530 = vunpack.c.l.b16 %v1435
  %v1531 = vunpack.c.h.b16 %v1435
  %v1532 = vpack.c.b16 %v1472, %v1468
  %v1533 = vpack.c.b16 %v1473, %v1469
  %v1534 = vpack.c.b16 %v1474, %v1470
  %v1535 = vpack.c.b16 %v1475, %v1471
  %v1536 = vpack.c.b16 %v1480, %v1476
  %v1537 = vpack.c.b16 %v1481, %v1477
  %v1538 = vpack.c.b16 %v1482, %v1478
  %v1539 = vpack.c.b16 %v1483, %v1479
  %v1540 = vpack.c.b16 %v1488, %v1484
  %v1541 = vpack.c.b16 %v1489, %v1485
  %v1542 = vpack.c.b16 %v1490, %v1486
  %v1543 = vpack.c.b16 %v1491, %v1487
  %v1544 = vpack.c.b16 %v1496, %v1492
  %v1545 = vpack.c.b16 %v1497, %v1493
  %v1546 = vpack.c.b16 %v1498, %v1494
  %v1547 = vpack.c.b16 %v1499, %v1495
  %v1548 = vpack.c.b16 %v1504, %v1500
  %v1549 = vpack.c.b16 %v1505, %v1501
  %v1550 = vpack.c.b16 %v1506, %v1502
  %v1551 = vpack.c.b16 %v1507, %v1503
  %v1552 = vpack.c.b16 %v1512, %v1508
  %v1553 = vpack.c.b16 %v1513, %v1509
  %v1554 = vpack.c.b16 %v1514, %v1510
  %v1555 = vpack.c.b16 %v1515, %v1511
  %v1556 = vpack.c.b16 %v1520, %v1516
  %v1557 = vpack.c.b16 %v1521, %v1517
  %v1558 = vpack.c.b16 %v1522, %v1518
  %v1559 = vpack.c.b16 %v1523, %v1519
  %v1560 = vpack.c.b16 %v1528, %v1524
  %v1561 = vpack.c.b16 %v1529, %v1525
  %v1562 = vpack.c.b16 %v1530, %v1526
  %v1563 = vpack.c.b16 %v1531, %v1527
  %1596 = vmatprep.subr.bf16.mxu0 %v1533
  %1597 = vmatpush1.bf16.msra.mxu0 %v1532
  %1598 = vmatprep.subr.bf16.mxu0 %v1537
  %1599 = vmatpush1.bf16.msra.mxu0 %v1536
  %1600 = vmatprep.subr.bf16.mxu0 %v1541
  %1601 = vmatpush1.bf16.msra.mxu0 %v1540
  %1602 = vmatprep.subr.bf16.mxu0 %v1545
  %1603 = vmatpush1.bf16.msra.mxu0 %v1544
  %1604 = vmatprep.subr.bf16.mxu0 %v1549
  %1605 = vmatpush1.bf16.msra.mxu0 %v1548
  %1606 = vmatprep.subr.bf16.mxu0 %v1553
  %1607 = vmatpush1.bf16.msra.mxu0 %v1552
  %1608 = vmatprep.subr.bf16.mxu0 %v1557
  %1609 = vmatpush1.bf16.msra.mxu0 %v1556
  %1610 = vmatprep.subr.bf16.mxu0 %v1561
  %1611 = vmatpush1.bf16.msra.mxu0 %v1560
  %1612 = vmatprep.subr.bf16.mxu0 0
  %1613 = vmatpush1.bf16.msra.mxu0 0
  %1614 = vmatprep.subr.bf16.mxu0 0
  %1615 = vmatpush1.bf16.msra.mxu0 0
  %1616 = vmatprep.subr.bf16.mxu0 0
  %1617 = vmatpush1.bf16.msra.mxu0 0
  %1618 = vmatprep.subr.bf16.mxu0 0
  %1619 = vmatpush1.bf16.msra.mxu0 0
  %1620 = vmatprep.subr.bf16.mxu0 0
  %1621 = vmatpush1.bf16.msra.mxu0 0
  %1622 = vmatprep.subr.bf16.mxu0 0
  %1623 = vmatpush1.bf16.msra.mxu0 0
  %1624 = vmatprep.subr.bf16.mxu0 0
  %1625 = vmatpush1.bf16.msra.mxu0 0
  %1626 = vmatprep.subr.bf16.mxu0 0
  %1627 = vmatpush1.bf16.msra.mxu0 0
  %1628 = vmatprep.mubr.bf16.mxu0 0
  %1629 = vmatmul.mubr.bf16.gmra.mrb[0].mxu0 %v1403
  %v1630 = vpop.f32.mrb[0].mxu0
  %v1631 = vadd.f32 0.0, %v1630
  %v1632 = vpop.f32.mrb[0].mxu0
  %v1633 = vadd.f32 0.0, %v1632
  %v1634 = vpop.f32.mrb[0].mxu0
  %v1635 = vpop.f32.mrb[0].mxu0
  %1636 = vdwg.mxu0
  %1637 = vmatprep.subr.bf16.mxu0 %v1535
  %1638 = vmatpush1.bf16.msra.mxu0 %v1534
  %1639 = vmatprep.subr.bf16.mxu0 %v1539
  %1640 = vmatpush1.bf16.msra.mxu0 %v1538
  %1641 = vmatprep.subr.bf16.mxu0 %v1543
  %1642 = vmatpush1.bf16.msra.mxu0 %v1542
  %1643 = vmatprep.subr.bf16.mxu0 %v1547
  %1644 = vmatpush1.bf16.msra.mxu0 %v1546
  %1645 = vmatprep.subr.bf16.mxu0 %v1551
  %1646 = vmatpush1.bf16.msra.mxu0 %v1550
  %1647 = vmatprep.subr.bf16.mxu0 %v1555
  %1648 = vmatpush1.bf16.msra.mxu0 %v1554
  %1649 = vmatprep.subr.bf16.mxu0 %v1559
  %1650 = vmatpush1.bf16.msra.mxu0 %v1558
  %1651 = vmatprep.subr.bf16.mxu0 %v1563
  %1652 = vmatpush1.bf16.msra.mxu0 %v1562
  %1653 = vmatprep.subr.bf16.mxu0 0
  %1654 = vmatpush1.bf16.msra.mxu0 0
  %1655 = vmatprep.subr.bf16.mxu0 0
  %1656 = vmatpush1.bf16.msra.mxu0 0
  %1657 = vmatprep.subr.bf16.mxu0 0
  %1658 = vmatpush1.bf16.msra.mxu0 0
  %1659 = vmatprep.subr.bf16.mxu0 0
  %1660 = vmatpush1.bf16.msra.mxu0 0
  %1661 = vmatprep.subr.bf16.mxu0 0
  %1662 = vmatpush1.bf16.msra.mxu0 0
  %1663 = vmatprep.subr.bf16.mxu0 0
  %1664 = vmatpush1.bf16.msra.mxu0 0
  %1665 = vmatprep.subr.bf16.mxu0 0
  %1666 = vmatpush1.bf16.msra.mxu0 0
  %1667 = vmatprep.subr.bf16.mxu0 0
  %1668 = vmatpush1.bf16.msra.mxu0 0
  %1669 = vmatprep.mubr.bf16.mxu0 0
  %1670 = vmatmul.mubr.bf16.gmra.mrb[0].mxu0 %v1403
  %v1671 = vpop.f32.mrb[0].mxu0
  %v1672 = vadd.f32 0.0, %v1671
  %v1673 = vpop.f32.mrb[0].mxu0
  %v1674 = vadd.f32 0.0, %v1673
  %v1675 = vpop.f32.mrb[0].mxu0
  %v1676 = vpop.f32.mrb[0].mxu0
  %1677 = vdwg.mxu0
  %v1679 = vlaneseq
  %v1680 = vshrl.u32 %v1679, 7
  %v1681 = vsub.s32 0, %v1680
  %v1682 = vrot.slane %v1402, %v1681
  %v1683 = vlaneseq
  %v1684 = vshrl.u32 %v1683, 7
  %v1685 = vsub.s32 1, %v1684
  %v1686 = vrot.slane %v1402, %v1685
  %v1687 = vlaneseq
  %v1688 = vshrl.u32 %v1687, 7
  %v1689 = vsub.s32 2, %v1688
  %v1690 = vrot.slane %v1402, %v1689
  %v1691 = vlaneseq
  %v1692 = vshrl.u32 %v1691, 7
  %v1693 = vsub.s32 3, %v1692
  %v1694 = vrot.slane %v1402, %v1693
  %v1699 = vadd.f32 %v1682, %v1631
  %v1700 = vadd.f32 %v1686, %v1633
  %v1701 = vadd.f32 %v1690, %v1672
  %v1702 = vadd.f32 %v1694, %v1674
  %v1703 = vld [vmem:[%s4] sm:$0xff]
  %v1704 = vld [vmem:[%s4 + $0x8] sm:$0xff]
  %v1705 = vld [vmem:[%s4 + $0x10] sm:$0xff]
  %v1706 = vld [vmem:[%s4 + $0x18] sm:$0xff]
  %v1707 = vld [vmem:[%s4 + $0x20] sm:$0xff]
  %v1708 = vld [vmem:[%s4 + $0x28] sm:$0xff]
  %v1709 = vld [vmem:[%s4 + $0x30] sm:$0xff]
  %v1710 = vld [vmem:[%s4 + $0x38] sm:$0xff]
  %v1711 = vld [vmem:[%s4 + $0x40] sm:$0xff]
  %v1712 = vld [vmem:[%s4 + $0x48] sm:$0xff]
  %v1713 = vld [vmem:[%s4 + $0x50] sm:$0xff]
  %v1714 = vld [vmem:[%s4 + $0x58] sm:$0xff]
  %v1715 = vld [vmem:[%s4 + $0x60] sm:$0xff]
  %v1716 = vld [vmem:[%s4 + $0x68] sm:$0xff]
  %v1717 = vld [vmem:[%s4 + $0x70] sm:$0xff]
  %v1718 = vld [vmem:[%s4 + $0x78] sm:$0xff]
  %v1719 = vld [vmem:[%s4 + $0x80] sm:$0xff]
  %v1720 = vld [vmem:[%s4 + $0x88] sm:$0xff]
  %v1721 = vld [vmem:[%s4 + $0x90] sm:$0xff]
  %v1722 = vld [vmem:[%s4 + $0x98] sm:$0xff]
  %v1723 = vld [vmem:[%s4 + $0xa0] sm:$0xff]
  %v1724 = vld [vmem:[%s4 + $0xa8] sm:$0xff]
  %v1725 = vld [vmem:[%s4 + $0xb0] sm:$0xff]
  %v1726 = vld [vmem:[%s4 + $0xb8] sm:$0xff]
  %v1727 = vld [vmem:[%s4 + $0xc0] sm:$0xff]
  %v1728 = vld [vmem:[%s4 + $0xc8] sm:$0xff]
  %v1729 = vld [vmem:[%s4 + $0xd0] sm:$0xff]
  %v1730 = vld [vmem:[%s4 + $0xd8] sm:$0xff]
  %v1731 = vld [vmem:[%s4 + $0xe0] sm:$0xff]
  %v1732 = vld [vmem:[%s4 + $0xe8] sm:$0xff]
  %v1733 = vld [vmem:[%s4 + $0xf0] sm:$0xff]
  %v1734 = vld [vmem:[%s4 + $0xf8] sm:$0xff]
  %v1767 = vunpack.c.l.b16 %v1703
  %v1768 = vunpack.c.h.b16 %v1703
  %v1769 = vunpack.c.l.b16 %v1704
  %v1770 = vunpack.c.h.b16 %v1704
  %v1771 = vunpack.c.l.b16 %v1705
  %v1772 = vunpack.c.h.b16 %v1705
  %v1773 = vunpack.c.l.b16 %v1706
  %v1774 = vunpack.c.h.b16 %v1706
  %v1775 = vunpack.c.l.b16 %v1707
  %v1776 = vunpack.c.h.b16 %v1707
  %v1777 = vunpack.c.l.b16 %v1708
  %v1778 = vunpack.c.h.b16 %v1708
  %v1779 = vunpack.c.l.b16 %v1709
  %v1780 = vunpack.c.h.b16 %v1709
  %v1781 = vunpack.c.l.b16 %v1710
  %v1782 = vunpack.c.h.b16 %v1710
  %v1783 = vunpack.c.l.b16 %v1711
  %v1784 = vunpack.c.h.b16 %v1711
  %v1785 = vunpack.c.l.b16 %v1712
  %v1786 = vunpack.c.h.b16 %v1712
  %v1787 = vunpack.c.l.b16 %v1713
  %v1788 = vunpack.c.h.b16 %v1713
  %v1789 = vunpack.c.l.b16 %v1714
  %v1790 = vunpack.c.h.b16 %v1714
  %v1791 = vunpack.c.l.b16 %v1715
  %v1792 = vunpack.c.h.b16 %v1715
  %v1793 = vunpack.c.l.b16 %v1716
  %v1794 = vunpack.c.h.b16 %v1716
  %v1795 = vunpack.c.l.b16 %v1717
  %v1796 = vunpack.c.h.b16 %v1717
  %v1797 = vunpack.c.l.b16 %v1718
  %v1798 = vunpack.c.h.b16 %v1718
  %v1799 = vunpack.c.l.b16 %v1719
  %v1800 = vunpack.c.h.b16 %v1719
  %v1801 = vunpack.c.l.b16 %v1720
  %v1802 = vunpack.c.h.b16 %v1720
  %v1803 = vunpack.c.l.b16 %v1721
  %v1804 = vunpack.c.h.b16 %v1721
  %v1805 = vunpack.c.l.b16 %v1722
  %v1806 = vunpack.c.h.b16 %v1722
  %v1807 = vunpack.c.l.b16 %v1723
  %v1808 = vunpack.c.h.b16 %v1723
  %v1809 = vunpack.c.l.b16 %v1724
  %v1810 = vunpack.c.h.b16 %v1724
  %v1811 = vunpack.c.l.b16 %v1725
  %v1812 = vunpack.c.h.b16 %v1725
  %v1813 = vunpack.c.l.b16 %v1726
  %v1814 = vunpack.c.h.b16 %v1726
  %v1815 = vunpack.c.l.b16 %v1727
  %v1816 = vunpack.c.h.b16 %v1727
  %v1817 = vunpack.c.l.b16 %v1728
  %v1818 = vunpack.c.h.b16 %v1728
  %v1819 = vunpack.c.l.b16 %v1729
  %v1820 = vunpack.c.h.b16 %v1729
  %v1821 = vunpack.c.l.b16 %v1730
  %v1822 = vunpack.c.h.b16 %v1730
  %v1823 = vunpack.c.l.b16 %v1731
  %v1824 = vunpack.c.h.b16 %v1731
  %v1825 = vunpack.c.l.b16 %v1732
  %v1826 = vunpack.c.h.b16 %v1732
  %v1827 = vunpack.c.l.b16 %v1733
  %v1828 = vunpack.c.h.b16 %v1733
  %v1829 = vunpack.c.l.b16 %v1734
  %v1830 = vunpack.c.h.b16 %v1734
  %v1831 = vpack.c.b16 %v1771, %v1767
  %v1832 = vpack.c.b16 %v1772, %v1768
  %v1833 = vpack.c.b16 %v1773, %v1769
  %v1834 = vpack.c.b16 %v1774, %v1770
  %v1835 = vpack.c.b16 %v1779, %v1775
  %v1836 = vpack.c.b16 %v1780, %v1776
  %v1837 = vpack.c.b16 %v1781, %v1777
  %v1838 = vpack.c.b16 %v1782, %v1778
  %v1839 = vpack.c.b16 %v1787, %v1783
  %v1840 = vpack.c.b16 %v1788, %v1784
  %v1841 = vpack.c.b16 %v1789, %v1785
  %v1842 = vpack.c.b16 %v1790, %v1786
  %v1843 = vpack.c.b16 %v1795, %v1791
  %v1844 = vpack.c.b16 %v1796, %v1792
  %v1845 = vpack.c.b16 %v1797, %v1793
  %v1846 = vpack.c.b16 %v1798, %v1794
  %v1847 = vpack.c.b16 %v1803, %v1799
  %v1848 = vpack.c.b16 %v1804, %v1800
  %v1849 = vpack.c.b16 %v1805, %v1801
  %v1850 = vpack.c.b16 %v1806, %v1802
  %v1851 = vpack.c.b16 %v1811, %v1807
  %v1852 = vpack.c.b16 %v1812, %v1808
  %v1853 = vpack.c.b16 %v1813, %v1809
  %v1854 = vpack.c.b16 %v1814, %v1810
  %v1855 = vpack.c.b16 %v1819, %v1815
  %v1856 = vpack.c.b16 %v1820, %v1816
  %v1857 = vpack.c.b16 %v1821, %v1817
  %v1858 = vpack.c.b16 %v1822, %v1818
  %v1859 = vpack.c.b16 %v1827, %v1823
  %v1860 = vpack.c.b16 %v1828, %v1824
  %v1861 = vpack.c.b16 %v1829, %v1825
  %v1862 = vpack.c.b16 %v1830, %v1826
  %1895 = vmatprep.subr.bf16.mxu0 %v1832
  %1896 = vmatpush1.bf16.msra.mxu0 %v1831
  %1897 = vmatprep.subr.bf16.mxu0 %v1836
  %1898 = vmatpush1.bf16.msra.mxu0 %v1835
  %1899 = vmatprep.subr.bf16.mxu0 %v1840
  %1900 = vmatpush1.bf16.msra.mxu0 %v1839
  %1901 = vmatprep.subr.bf16.mxu0 %v1844
  %1902 = vmatpush1.bf16.msra.mxu0 %v1843
  %1903 = vmatprep.subr.bf16.mxu0 %v1848
  %1904 = vmatpush1.bf16.msra.mxu0 %v1847
  %1905 = vmatprep.subr.bf16.mxu0 %v1852
  %1906 = vmatpush1.bf16.msra.mxu0 %v1851
  %1907 = vmatprep.subr.bf16.mxu0 %v1856
  %1908 = vmatpush1.bf16.msra.mxu0 %v1855
  %1909 = vmatprep.subr.bf16.mxu0 %v1860
  %1910 = vmatpush1.bf16.msra.mxu0 %v1859
  %1911 = vmatprep.subr.bf16.mxu0 0
  %1912 = vmatpush1.bf16.msra.mxu0 0
  %1913 = vmatprep.subr.bf16.mxu0 0
  %1914 = vmatpush1.bf16.msra.mxu0 0
  %1915 = vmatprep.subr.bf16.mxu0 0
  %1916 = vmatpush1.bf16.msra.mxu0 0
  %1917 = vmatprep.subr.bf16.mxu0 0
  %1918 = vmatpush1.bf16.msra.mxu0 0
  %1919 = vmatprep.subr.bf16.mxu0 0
  %1920 = vmatpush1.bf16.msra.mxu0 0
  %1921 = vmatprep.subr.bf16.mxu0 0
  %1922 = vmatpush1.bf16.msra.mxu0 0
  %1923 = vmatprep.subr.bf16.mxu0 0
  %1924 = vmatpush1.bf16.msra.mxu0 0
  %1925 = vmatprep.subr.bf16.mxu0 0
  %1926 = vmatpush1.bf16.msra.mxu0 0
  %1927 = vmatprep.mubr.bf16.mxu0 0
  %1928 = vmatmul.mubr.bf16.gmra.mrb[0].mxu0 %v959
  %v1929 = vpop.f32.mrb[0].mxu0
  %v1930 = vadd.f32 0.0, %v1929
  %v1931 = vpop.f32.mrb[0].mxu0
  %v1932 = vadd.f32 0.0, %v1931
  %v1933 = vpop.f32.mrb[0].mxu0
  %v1934 = vpop.f32.mrb[0].mxu0
  %1935 = vdwg.mxu0
  %1936 = vmatprep.subr.bf16.mxu0 %v1834
  %1937 = vmatpush1.bf16.msra.mxu0 %v1833
  %1938 = vmatprep.subr.bf16.mxu0 %v1838
  %1939 = vmatpush1.bf16.msra.mxu0 %v1837
  %1940 = vmatprep.subr.bf16.mxu0 %v1842
  %1941 = vmatpush1.bf16.msra.mxu0 %v1841
  %1942 = vmatprep.subr.bf16.mxu0 %v1846
  %1943 = vmatpush1.bf16.msra.mxu0 %v1845
  %1944 = vmatprep.subr.bf16.mxu0 %v1850
  %1945 = vmatpush1.bf16.msra.mxu0 %v1849
  %1946 = vmatprep.subr.bf16.mxu0 %v1854
  %1947 = vmatpush1.bf16.msra.mxu0 %v1853
  %1948 = vmatprep.subr.bf16.mxu0 %v1858
  %1949 = vmatpush1.bf16.msra.mxu0 %v1857
  %1950 = vmatprep.subr.bf16.mxu0 %v1862
  %1951 = vmatpush1.bf16.msra.mxu0 %v1861
  %1952 = vmatprep.subr.bf16.mxu0 0
  %1953 = vmatpush1.bf16.msra.mxu0 0
  %1954 = vmatprep.subr.bf16.mxu0 0
  %1955 = vmatpush1.bf16.msra.mxu0 0
  %1956 = vmatprep.subr.bf16.mxu0 0
  %1957 = vmatpush1.bf16.msra.mxu0 0
  %1958 = vmatprep.subr.bf16.mxu0 0
  %1959 = vmatpush1.bf16.msra.mxu0 0
  %1960 = vmatprep.subr.bf16.mxu0 0
  %1961 = vmatpush1.bf16.msra.mxu0 0
  %1962 = vmatprep.subr.bf16.mxu0 0
  %1963 = vmatpush1.bf16.msra.mxu0 0
  %1964 = vmatprep.subr.bf16.mxu0 0
  %1965 = vmatpush1.bf16.msra.mxu0 0
  %1966 = vmatprep.subr.bf16.mxu0 0
  %1967 = vmatpush1.bf16.msra.mxu0 0
  %1968 = vmatprep.mubr.bf16.mxu0 0
  %1969 = vmatmul.mubr.bf16.gmra.mrb[0].mxu0 %v959
  %v1970 = vpop.f32.mrb[0].mxu0
  %v1971 = vadd.f32 0.0, %v1970
  %v1972 = vpop.f32.mrb[0].mxu0
  %v1973 = vadd.f32 0.0, %v1972
  %v1974 = vpop.f32.mrb[0].mxu0
  %v1975 = vpop.f32.mrb[0].mxu0
  %1976 = vdwg.mxu0
  %v1977 = vadd.f32 %v1699, %v1930
  %v1978 = vadd.f32 %v1700, %v1932
  %v1979 = vadd.f32 %v1701, %v1971
  %v1980 = vadd.f32 %v1702, %v1973
  %v1981 = vxor.u32 %v1977, 2147483648
  %v1982 = vmul.f32 %v1981, 1.442695
  %v1983 = vpow.pop %v1982
  %v1984 = vadd.f32 %v1983, 1.0
  %v1985 = vrcp.pop %v1984
  %v1986 = vmul.f32 1.0, %v1985
  %v1987 = vxor.u32 %v1978, 2147483648
  %v1988 = vmul.f32 %v1987, 1.442695
  %v1989 = vpow.pop %v1988
  %v1990 = vadd.f32 %v1989, 1.0
  %v1991 = vrcp.pop %v1990
  %v1992 = vmul.f32 1.0, %v1991
  %v1993 = vtanh.pop %v1979
  %v1994 = vxor.u32 %v1980, 2147483648
  %v1995 = vmul.f32 %v1994, 1.442695
  %v1996 = vpow.pop %v1995
  %v1997 = vadd.f32 %v1996, 1.0
  %v1998 = vrcp.pop %v1997
  %v1999 = vmul.f32 1.0, %v1998
  %v2000 = vmul.f32 %v1992, %v956
  %v2001 = vmul.f32 %v1986, %v1993
  %v2002 = vadd.f32 %v2000, %v2001
  %v2003 = vtanh.pop %v2002
  %v2004 = vmul.f32 %v1999, %v2003
  %v2005 = vpack.c.bf16 %v2004, %v2004
  %v2006 = vld [vmem:[%s5] sm:$0xf]
  %v2007 = vld [vmem:[%s5 + $0x4] sm:$0xf]
  %v2008 = vld [vmem:[%s5 + $0x8] sm:$0xf]
  %v2009 = vld [vmem:[%s5 + $0xc] sm:$0xf]
  %v2010 = vld [vmem:[%s5 + $0x10] sm:$0xf]
  %v2011 = vld [vmem:[%s5 + $0x14] sm:$0xf]
  %v2012 = vld [vmem:[%s5 + $0x18] sm:$0xf]
  %v2013 = vld [vmem:[%s5 + $0x1c] sm:$0xf]
  %v2014 = vld [vmem:[%s5 + $0x20] sm:$0xf]
  %v2015 = vld [vmem:[%s5 + $0x24] sm:$0xf]
  %v2016 = vld [vmem:[%s5 + $0x28] sm:$0xf]
  %v2017 = vld [vmem:[%s5 + $0x2c] sm:$0xf]
  %v2018 = vld [vmem:[%s5 + $0x30] sm:$0xf]
  %v2019 = vld [vmem:[%s5 + $0x34] sm:$0xf]
  %v2020 = vld [vmem:[%s5 + $0x38] sm:$0xf]
  %v2021 = vld [vmem:[%s5 + $0x3c] sm:$0xf]
  %v2022 = vld [vmem:[%s6] sm:$0x1]
  %v2024 = vlaneseq
  %v2025 = vshrl.u32 %v2024, 7
  %v2026 = vsub.s32 0, %v2025
  %v2027 = vrot.slane %v2022, %v2026
  %v2045 = vunpack.c.l.b16 %v2006
  %v2046 = vunpack.c.l.b16 %v2007
  %v2047 = vunpack.c.l.b16 %v2008
  %v2048 = vunpack.c.l.b16 %v2009
  %v2049 = vunpack.c.l.b16 %v2010
  %v2050 = vunpack.c.l.b16 %v2011
  %v2051 = vunpack.c.l.b16 %v2012
  %v2052 = vunpack.c.l.b16 %v2013
  %v2053 = vunpack.c.l.b16 %v2014
  %v2054 = vunpack.c.l.b16 %v2015
  %v2055 = vunpack.c.l.b16 %v2016
  %v2056 = vunpack.c.l.b16 %v2017
  %v2057 = vunpack.c.l.b16 %v2018
  %v2058 = vunpack.c.l.b16 %v2019
  %v2059 = vunpack.c.l.b16 %v2020
  %v2060 = vunpack.c.l.b16 %v2021
  %v2061 = vpack.c.b16 %v2046, %v2045
  %v2062 = vpack.c.b16 %v2048, %v2047
  %v2063 = vpack.c.b16 %v2050, %v2049
  %v2064 = vpack.c.b16 %v2052, %v2051
  %v2065 = vpack.c.b16 %v2054, %v2053
  %v2066 = vpack.c.b16 %v2056, %v2055
  %v2067 = vpack.c.b16 %v2058, %v2057
  %v2068 = vpack.c.b16 %v2060, %v2059
  %2077 = vmatprep.subr.bf16.mxu0 0
  %2078 = vmatpush1.bf16.msra.mxu0 %v2061
  %2079 = vmatprep.subr.bf16.mxu0 0
  %2080 = vmatpush1.bf16.msra.mxu0 %v2062
  %2081 = vmatprep.subr.bf16.mxu0 0
  %2082 = vmatpush1.bf16.msra.mxu0 %v2063
  %2083 = vmatprep.subr.bf16.mxu0 0
  %2084 = vmatpush1.bf16.msra.mxu0 %v2064
  %2085 = vmatprep.subr.bf16.mxu0 0
  %2086 = vmatpush1.bf16.msra.mxu0 %v2065
  %2087 = vmatprep.subr.bf16.mxu0 0
  %2088 = vmatpush1.bf16.msra.mxu0 %v2066
  %2089 = vmatprep.subr.bf16.mxu0 0
  %2090 = vmatpush1.bf16.msra.mxu0 %v2067
  %2091 = vmatprep.subr.bf16.mxu0 0
  %2092 = vmatpush1.bf16.msra.mxu0 %v2068
  %2093 = vmatprep.subr.bf16.mxu0 0
  %2094 = vmatpush1.bf16.msra.mxu0 0
  %2095 = vmatprep.subr.bf16.mxu0 0
  %2096 = vmatpush1.bf16.msra.mxu0 0
  %2097 = vmatprep.subr.bf16.mxu0 0
  %2098 = vmatpush1.bf16.msra.mxu0 0
  %2099 = vmatprep.subr.bf16.mxu0 0
  %2100 = vmatpush1.bf16.msra.mxu0 0
  %2101 = vmatprep.subr.bf16.mxu0 0
  %2102 = vmatpush1.bf16.msra.mxu0 0
  %2103 = vmatprep.subr.bf16.mxu0 0
  %2104 = vmatpush1.bf16.msra.mxu0 0
  %2105 = vmatprep.subr.bf16.mxu0 0
  %2106 = vmatpush1.bf16.msra.mxu0 0
  %2107 = vmatprep.subr.bf16.mxu0 0
  %2108 = vmatpush1.bf16.msra.mxu0 0
  %2109 = vmatprep.mubr.bf16.mxu0 0
  %2110 = vmatmul.mubr.bf16.gmra.mrb[0].mxu0 %v2005
  %v2111 = vpop.f32.mrb[0].mxu0
  %v2112 = vadd.f32 %v2027, %v2111
  %v2113 = vpop.f32.mrb[0].mxu0
  %v2114 = vpop.f32.mrb[0].mxu0
  %v2115 = vpop.f32.mrb[0].mxu0
  %2116 = vdwg.mxu0
  %s2117 = scalar_lea.vmem %s7, 2
  %2118 = vst [vmem:[%s2117] sm:$0x3] %v2112
  %s2119 = scalar_lea.vmem %s0, 16
  %v2120 = vld [vmem:[%s2119] sm:$0xff]
  %v2121 = vld [vmem:[%s1] sm:$0xff]
  %v2122 = vld [vmem:[%s1 + $0x8] sm:$0xff]
  %v2123 = vld [vmem:[%s1 + $0x10] sm:$0xff]
  %v2124 = vld [vmem:[%s1 + $0x18] sm:$0xff]
  %v2125 = vld [vmem:[%s1 + $0x20] sm:$0xff]
  %v2126 = vld [vmem:[%s1 + $0x28] sm:$0xff]
  %v2127 = vld [vmem:[%s1 + $0x30] sm:$0xff]
  %v2128 = vld [vmem:[%s1 + $0x38] sm:$0xff]
  %v2129 = vld [vmem:[%s1 + $0x40] sm:$0xff]
  %v2130 = vld [vmem:[%s1 + $0x48] sm:$0xff]
  %v2131 = vld [vmem:[%s1 + $0x50] sm:$0xff]
  %v2132 = vld [vmem:[%s1 + $0x58] sm:$0xff]
  %v2133 = vld [vmem:[%s1 + $0x60] sm:$0xff]
  %v2134 = vld [vmem:[%s1 + $0x68] sm:$0xff]
  %v2135 = vld [vmem:[%s1 + $0x70] sm:$0xff]
  %v2136 = vld [vmem:[%s1 + $0x78] sm:$0xff]
  %v2137 = vld [vmem:[%s1 + $0x80] sm:$0xff]
  %v2138 = vld [vmem:[%s1 + $0x88] sm:$0xff]
  %v2139 = vld [vmem:[%s1 + $0x90] sm:$0xff]
  %v2140 = vld [vmem:[%s1 + $0x98] sm:$0xff]
  %v2141 = vld [vmem:[%s1 + $0xa0] sm:$0xff]
  %v2142 = vld [vmem:[%s1 + $0xa8] sm:$0xff]
  %v2143 = vld [vmem:[%s1 + $0xb0] sm:$0xff]
  %v2144 = vld [vmem:[%s1 + $0xb8] sm:$0xff]
  %v2145 = vld [vmem:[%s1 + $0xc0] sm:$0xff]
  %v2146 = vld [vmem:[%s1 + $0xc8] sm:$0xff]
  %v2147 = vld [vmem:[%s1 + $0xd0] sm:$0xff]
  %v2148 = vld [vmem:[%s1 + $0xd8] sm:$0xff]
  %v2149 = vld [vmem:[%s1 + $0xe0] sm:$0xff]
  %v2150 = vld [vmem:[%s1 + $0xe8] sm:$0xff]
  %v2151 = vld [vmem:[%s1 + $0xf0] sm:$0xff]
  %v2152 = vld [vmem:[%s1 + $0xf8] sm:$0xff]
  %v2185 = vunpack.c.l.b16 %v2121
  %v2186 = vunpack.c.h.b16 %v2121
  %v2187 = vunpack.c.l.b16 %v2122
  %v2188 = vunpack.c.h.b16 %v2122
  %v2189 = vunpack.c.l.b16 %v2123
  %v2190 = vunpack.c.h.b16 %v2123
  %v2191 = vunpack.c.l.b16 %v2124
  %v2192 = vunpack.c.h.b16 %v2124
  %v2193 = vunpack.c.l.b16 %v2125
  %v2194 = vunpack.c.h.b16 %v2125
  %v2195 = vunpack.c.l.b16 %v2126
  %v2196 = vunpack.c.h.b16 %v2126
  %v2197 = vunpack.c.l.b16 %v2127
  %v2198 = vunpack.c.h.b16 %v2127
  %v2199 = vunpack.c.l.b16 %v2128
  %v2200 = vunpack.c.h.b16 %v2128
  %v2201 = vunpack.c.l.b16 %v2129
  %v2202 = vunpack.c.h.b16 %v2129
  %v2203 = vunpack.c.l.b16 %v2130
  %v2204 = vunpack.c.h.b16 %v2130
  %v2205 = vunpack.c.l.b16 %v2131
  %v2206 = vunpack.c.h.b16 %v2131
  %v2207 = vunpack.c.l.b16 %v2132
  %v2208 = vunpack.c.h.b16 %v2132
  %v2209 = vunpack.c.l.b16 %v2133
  %v2210 = vunpack.c.h.b16 %v2133
  %v2211 = vunpack.c.l.b16 %v2134
  %v2212 = vunpack.c.h.b16 %v2134
  %v2213 = vunpack.c.l.b16 %v2135
  %v2214 = vunpack.c.h.b16 %v2135
  %v2215 = vunpack.c.l.b16 %v2136
  %v2216 = vunpack.c.h.b16 %v2136
  %v2217 = vunpack.c.l.b16 %v2137
  %v2218 = vunpack.c.h.b16 %v2137
  %v2219 = vunpack.c.l.b16 %v2138
  %v2220 = vunpack.c.h.b16 %v2138
  %v2221 = vunpack.c.l.b16 %v2139
  %v2222 = vunpack.c.h.b16 %v2139
  %v2223 = vunpack.c.l.b16 %v2140
  %v2224 = vunpack.c.h.b16 %v2140
  %v2225 = vunpack.c.l.b16 %v2141
  %v2226 = vunpack.c.h.b16 %v2141
  %v2227 = vunpack.c.l.b16 %v2142
  %v2228 = vunpack.c.h.b16 %v2142
  %v2229 = vunpack.c.l.b16 %v2143
  %v2230 = vunpack.c.h.b16 %v2143
  %v2231 = vunpack.c.l.b16 %v2144
  %v2232 = vunpack.c.h.b16 %v2144
  %v2233 = vunpack.c.l.b16 %v2145
  %v2234 = vunpack.c.h.b16 %v2145
  %v2235 = vunpack.c.l.b16 %v2146
  %v2236 = vunpack.c.h.b16 %v2146
  %v2237 = vunpack.c.l.b16 %v2147
  %v2238 = vunpack.c.h.b16 %v2147
  %v2239 = vunpack.c.l.b16 %v2148
  %v2240 = vunpack.c.h.b16 %v2148
  %v2241 = vunpack.c.l.b16 %v2149
  %v2242 = vunpack.c.h.b16 %v2149
  %v2243 = vunpack.c.l.b16 %v2150
  %v2244 = vunpack.c.h.b16 %v2150
  %v2245 = vunpack.c.l.b16 %v2151
  %v2246 = vunpack.c.h.b16 %v2151
  %v2247 = vunpack.c.l.b16 %v2152
  %v2248 = vunpack.c.h.b16 %v2152
  %v2249 = vpack.c.b16 %v2189, %v2185
  %v2250 = vpack.c.b16 %v2190, %v2186
  %v2251 = vpack.c.b16 %v2191, %v2187
  %v2252 = vpack.c.b16 %v2192, %v2188
  %v2253 = vpack.c.b16 %v2197, %v2193
  %v2254 = vpack.c.b16 %v2198, %v2194
  %v2255 = vpack.c.b16 %v2199, %v2195
  %v2256 = vpack.c.b16 %v2200, %v2196
  %v2257 = vpack.c.b16 %v2205, %v2201
  %v2258 = vpack.c.b16 %v2206, %v2202
  %v2259 = vpack.c.b16 %v2207, %v2203
  %v2260 = vpack.c.b16 %v2208, %v2204
  %v2261 = vpack.c.b16 %v2213, %v2209
  %v2262 = vpack.c.b16 %v2214, %v2210
  %v2263 = vpack.c.b16 %v2215, %v2211
  %v2264 = vpack.c.b16 %v2216, %v2212
  %v2265 = vpack.c.b16 %v2221, %v2217
  %v2266 = vpack.c.b16 %v2222, %v2218
  %v2267 = vpack.c.b16 %v2223, %v2219
  %v2268 = vpack.c.b16 %v2224, %v2220
  %v2269 = vpack.c.b16 %v2229, %v2225
  %v2270 = vpack.c.b16 %v2230, %v2226
  %v2271 = vpack.c.b16 %v2231, %v2227
  %v2272 = vpack.c.b16 %v2232, %v2228
  %v2273 = vpack.c.b16 %v2237, %v2233
  %v2274 = vpack.c.b16 %v2238, %v2234
  %v2275 = vpack.c.b16 %v2239, %v2235
  %v2276 = vpack.c.b16 %v2240, %v2236
  %v2277 = vpack.c.b16 %v2245, %v2241
  %v2278 = vpack.c.b16 %v2246, %v2242
  %v2279 = vpack.c.b16 %v2247, %v2243
  %v2280 = vpack.c.b16 %v2248, %v2244
  %2313 = vmatprep.subr.bf16.mxu0 %v2250
  %2314 = vmatpush1.bf16.msra.mxu0 %v2249
  %2315 = vmatprep.subr.bf16.mxu0 %v2254
  %2316 = vmatpush1.bf16.msra.mxu0 %v2253
  %2317 = vmatprep.subr.bf16.mxu0 %v2258
  %2318 = vmatpush1.bf16.msra.mxu0 %v2257
  %2319 = vmatprep.subr.bf16.mxu0 %v2262
  %2320 = vmatpush1.bf16.msra.mxu0 %v2261
  %2321 = vmatprep.subr.bf16.mxu0 %v2266
  %2322 = vmatpush1.bf16.msra.mxu0 %v2265
  %2323 = vmatprep.subr.bf16.mxu0 %v2270
  %2324 = vmatpush1.bf16.msra.mxu0 %v2269
  %2325 = vmatprep.subr.bf16.mxu0 %v2274
  %2326 = vmatpush1.bf16.msra.mxu0 %v2273
  %2327 = vmatprep.subr.bf16.mxu0 %v2278
  %2328 = vmatpush1.bf16.msra.mxu0 %v2277
  %2329 = vmatprep.subr.bf16.mxu0 0
  %2330 = vmatpush1.bf16.msra.mxu0 0
  %2331 = vmatprep.subr.bf16.mxu0 0
  %2332 = vmatpush1.bf16.msra.mxu0 0
  %2333 = vmatprep.subr.bf16.mxu0 0
  %2334 = vmatpush1.bf16.msra.mxu0 0
  %2335 = vmatprep.subr.bf16.mxu0 0
  %2336 = vmatpush1.bf16.msra.mxu0 0
  %2337 = vmatprep.subr.bf16.mxu0 0
  %2338 = vmatpush1.bf16.msra.mxu0 0
  %2339 = vmatprep.subr.bf16.mxu0 0
  %2340 = vmatpush1.bf16.msra.mxu0 0
  %2341 = vmatprep.subr.bf16.mxu0 0
  %2342 = vmatpush1.bf16.msra.mxu0 0
  %2343 = vmatprep.subr.bf16.mxu0 0
  %2344 = vmatpush1.bf16.msra.mxu0 0
  %2345 = vmatprep.mubr.bf16.mxu0 0
  %2346 = vmatmul.mubr.bf16.gmra.mrb[0].mxu0 %v1403
  %v2347 = vpop.f32.mrb[0].mxu0
  %v2348 = vadd.f32 0.0, %v2347
  %v2349 = vpop.f32.mrb[0].mxu0
  %v2350 = vadd.f32 0.0, %v2349
  %v2351 = vpop.f32.mrb[0].mxu0
  %v2352 = vpop.f32.mrb[0].mxu0
  %2353 = vdwg.mxu0
  %2354 = vmatprep.subr.bf16.mxu0 %v2252
  %2355 = vmatpush1.bf16.msra.mxu0 %v2251
  %2356 = vmatprep.subr.bf16.mxu0 %v2256
  %2357 = vmatpush1.bf16.msra.mxu0 %v2255
  %2358 = vmatprep.subr.bf16.mxu0 %v2260
  %2359 = vmatpush1.bf16.msra.mxu0 %v2259
  %2360 = vmatprep.subr.bf16.mxu0 %v2264
  %2361 = vmatpush1.bf16.msra.mxu0 %v2263
  %2362 = vmatprep.subr.bf16.mxu0 %v2268
  %2363 = vmatpush1.bf16.msra.mxu0 %v2267
  %2364 = vmatprep.subr.bf16.mxu0 %v2272
  %2365 = vmatpush1.bf16.msra.mxu0 %v2271
  %2366 = vmatprep.subr.bf16.mxu0 %v2276
  %2367 = vmatpush1.bf16.msra.mxu0 %v2275
  %2368 = vmatprep.subr.bf16.mxu0 %v2280
  %2369 = vmatpush1.bf16.msra.mxu0 %v2279
  %2370 = vmatprep.subr.bf16.mxu0 0
  %2371 = vmatpush1.bf16.msra.mxu0 0
  %2372 = vmatprep.subr.bf16.mxu0 0
  %2373 = vmatpush1.bf16.msra.mxu0 0
  %2374 = vmatprep.subr.bf16.mxu0 0
  %2375 = vmatpush1.bf16.msra.mxu0 0
  %2376 = vmatprep.subr.bf16.mxu0 0
  %2377 = vmatpush1.bf16.msra.mxu0 0
  %2378 = vmatprep.subr.bf16.mxu0 0
  %2379 = vmatpush1.bf16.msra.mxu0 0
  %2380 = vmatprep.subr.bf16.mxu0 0
  %2381 = vmatpush1.bf16.msra.mxu0 0
  %2382 = vmatprep.subr.bf16.mxu0 0
  %2383 = vmatpush1.bf16.msra.mxu0 0
  %2384 = vmatprep.subr.bf16.mxu0 0
  %2385 = vmatpush1.bf16.msra.mxu0 0
  %2386 = vmatprep.mubr.bf16.mxu0 0
  %2387 = vmatmul.mubr.bf16.gmra.mrb[0].mxu0 %v1403
  %v2388 = vpop.f32.mrb[0].mxu0
  %v2389 = vadd.f32 0.0, %v2388
  %v2390 = vpop.f32.mrb[0].mxu0
  %v2391 = vadd.f32 0.0, %v2390
  %v2392 = vpop.f32.mrb[0].mxu0
  %v2393 = vpop.f32.mrb[0].mxu0
  %2394 = vdwg.mxu0
  %v2399 = vcombine.low %v2348, %v2350
  %v2400 = vcombine.low %v2389, %v2391
  %v2402 = vunpack.c.l.s4 1983009808
  %v2403 = vunpack.c.0.s8 %v2402
  %v2404 = vlaneseq
  %v2405 = vshrl.u32 %v2404, 7
  %v2406 = vsub.s32 %v2403, %v2405
  %v2407 = vrot.slane %v2399, %v2406
  %v2409 = vunpack.c.l.s4 1983009808
  %v2410 = vunpack.c.0.s8 %v2409
  %v2411 = vlaneseq
  %v2412 = vshrl.u32 %v2411, 7
  %v2413 = vsub.s32 %v2410, %v2412
  %v2414 = vrot.slane %v2400, %v2413
  %v2415 = vcombine.low %v2407, %v2414
  %v2417 = vadd.f32 %v2120, %v2415
  %v2418 = vxor.u32 %v2417, 2147483648
  %v2419 = vmul.f32 %v2418, 1.442695
  %v2420 = vpow.pop %v2419
  %v2421 = vadd.f32 %v2420, 1.0
  %v2422 = vrcp.pop %v2421
  %v2423 = vmul.f32 1.0, %v2422
  %v2425 = vrot.slane %v2417, 2
  %v2427 = vxor.u32 %v2425, 2147483648
  %v2428 = vmul.f32 %v2427, 1.442695
  %v2429 = vpow.pop %v2428
  %v2430 = vadd.f32 %v2429, 1.0
  %v2431 = vrcp.pop %v2430
  %v2432 = vmul.f32 1.0, %v2431
  %v2433 = vrot.slane %v2417, 4
  %v2435 = vtanh.pop %v2433
  %v2436 = vrot.slane %v2417, 6
  %v2438 = vxor.u32 %v2436, 2147483648
  %v2439 = vmul.f32 %v2438, 1.442695
  %v2440 = vpow.pop %v2439
  %v2441 = vadd.f32 %v2440, 1.0
  %v2442 = vrcp.pop %v2441
  %v2443 = vmul.f32 1.0, %v2442
  %v2444 = vmul.f32 %v2432, %v1399
  %v2445 = vmul.f32 %v2423, %v2435
  %v2446 = vadd.f32 %v2444, %v2445
  %v2447 = vtanh.pop %v2446
  %v2448 = vmul.f32 %v2443, %v2447
  %v2449 = vld [vmem:[%s3] sm:$0xf]
  %v2450 = vpack.c.bf16 %v2448, %v2448
  %v2451 = vld [vmem:[%s2] sm:$0xff]
  %v2452 = vld [vmem:[%s2 + $0x8] sm:$0xff]
  %v2453 = vld [vmem:[%s2 + $0x10] sm:$0xff]
  %v2454 = vld [vmem:[%s2 + $0x18] sm:$0xff]
  %v2455 = vld [vmem:[%s2 + $0x20] sm:$0xff]
  %v2456 = vld [vmem:[%s2 + $0x28] sm:$0xff]
  %v2457 = vld [vmem:[%s2 + $0x30] sm:$0xff]
  %v2458 = vld [vmem:[%s2 + $0x38] sm:$0xff]
  %v2459 = vld [vmem:[%s2 + $0x40] sm:$0xff]
  %v2460 = vld [vmem:[%s2 + $0x48] sm:$0xff]
  %v2461 = vld [vmem:[%s2 + $0x50] sm:$0xff]
  %v2462 = vld [vmem:[%s2 + $0x58] sm:$0xff]
  %v2463 = vld [vmem:[%s2 + $0x60] sm:$0xff]
  %v2464 = vld [vmem:[%s2 + $0x68] sm:$0xff]
  %v2465 = vld [vmem:[%s2 + $0x70] sm:$0xff]
  %v2466 = vld [vmem:[%s2 + $0x78] sm:$0xff]
  %v2467 = vld [vmem:[%s2 + $0x80] sm:$0xff]
  %v2468 = vld [vmem:[%s2 + $0x88] sm:$0xff]
  %v2469 = vld [vmem:[%s2 + $0x90] sm:$0xff]
  %v2470 = vld [vmem:[%s2 + $0x98] sm:$0xff]
  %v2471 = vld [vmem:[%s2 + $0xa0] sm:$0xff]
  %v2472 = vld [vmem:[%s2 + $0xa8] sm:$0xff]
  %v2473 = vld [vmem:[%s2 + $0xb0] sm:$0xff]
  %v2474 = vld [vmem:[%s2 + $0xb8] sm:$0xff]
  %v2475 = vld [vmem:[%s2 + $0xc0] sm:$0xff]
  %v2476 = vld [vmem:[%s2 + $0xc8] sm:$0xff]
  %v2477 = vld [vmem:[%s2 + $0xd0] sm:$0xff]
  %v2478 = vld [vmem:[%s2 + $0xd8] sm:$0xff]
  %v2479 = vld [vmem:[%s2 + $0xe0] sm:$0xff]
  %v2480 = vld [vmem:[%s2 + $0xe8] sm:$0xff]
  %v2481 = vld [vmem:[%s2 + $0xf0] sm:$0xff]
  %v2482 = vld [vmem:[%s2 + $0xf8] sm:$0xff]
  %v2515 = vunpack.c.l.b16 %v2451
  %v2516 = vunpack.c.h.b16 %v2451
  %v2517 = vunpack.c.l.b16 %v2452
  %v2518 = vunpack.c.h.b16 %v2452
  %v2519 = vunpack.c.l.b16 %v2453
  %v2520 = vunpack.c.h.b16 %v2453
  %v2521 = vunpack.c.l.b16 %v2454
  %v2522 = vunpack.c.h.b16 %v2454
  %v2523 = vunpack.c.l.b16 %v2455
  %v2524 = vunpack.c.h.b16 %v2455
  %v2525 = vunpack.c.l.b16 %v2456
  %v2526 = vunpack.c.h.b16 %v2456
  %v2527 = vunpack.c.l.b16 %v2457
  %v2528 = vunpack.c.h.b16 %v2457
  %v2529 = vunpack.c.l.b16 %v2458
  %v2530 = vunpack.c.h.b16 %v2458
  %v2531 = vunpack.c.l.b16 %v2459
  %v2532 = vunpack.c.h.b16 %v2459
  %v2533 = vunpack.c.l.b16 %v2460
  %v2534 = vunpack.c.h.b16 %v2460
  %v2535 = vunpack.c.l.b16 %v2461
  %v2536 = vunpack.c.h.b16 %v2461
  %v2537 = vunpack.c.l.b16 %v2462
  %v2538 = vunpack.c.h.b16 %v2462
  %v2539 = vunpack.c.l.b16 %v2463
  %v2540 = vunpack.c.h.b16 %v2463
  %v2541 = vunpack.c.l.b16 %v2464
  %v2542 = vunpack.c.h.b16 %v2464
  %v2543 = vunpack.c.l.b16 %v2465
  %v2544 = vunpack.c.h.b16 %v2465
  %v2545 = vunpack.c.l.b16 %v2466
  %v2546 = vunpack.c.h.b16 %v2466
  %v2547 = vunpack.c.l.b16 %v2467
  %v2548 = vunpack.c.h.b16 %v2467
  %v2549 = vunpack.c.l.b16 %v2468
  %v2550 = vunpack.c.h.b16 %v2468
  %v2551 = vunpack.c.l.b16 %v2469
  %v2552 = vunpack.c.h.b16 %v2469
  %v2553 = vunpack.c.l.b16 %v2470
  %v2554 = vunpack.c.h.b16 %v2470
  %v2555 = vunpack.c.l.b16 %v2471
  %v2556 = vunpack.c.h.b16 %v2471
  %v2557 = vunpack.c.l.b16 %v2472
  %v2558 = vunpack.c.h.b16 %v2472
  %v2559 = vunpack.c.l.b16 %v2473
  %v2560 = vunpack.c.h.b16 %v2473
  %v2561 = vunpack.c.l.b16 %v2474
  %v2562 = vunpack.c.h.b16 %v2474
  %v2563 = vunpack.c.l.b16 %v2475
  %v2564 = vunpack.c.h.b16 %v2475
  %v2565 = vunpack.c.l.b16 %v2476
  %v2566 = vunpack.c.h.b16 %v2476
  %v2567 = vunpack.c.l.b16 %v2477
  %v2568 = vunpack.c.h.b16 %v2477
  %v2569 = vunpack.c.l.b16 %v2478
  %v2570 = vunpack.c.h.b16 %v2478
  %v2571 = vunpack.c.l.b16 %v2479
  %v2572 = vunpack.c.h.b16 %v2479
  %v2573 = vunpack.c.l.b16 %v2480
  %v2574 = vunpack.c.h.b16 %v2480
  %v2575 = vunpack.c.l.b16 %v2481
  %v2576 = vunpack.c.h.b16 %v2481
  %v2577 = vunpack.c.l.b16 %v2482
  %v2578 = vunpack.c.h.b16 %v2482
  %v2579 = vpack.c.b16 %v2519, %v2515
  %v2580 = vpack.c.b16 %v2520, %v2516
  %v2581 = vpack.c.b16 %v2521, %v2517
  %v2582 = vpack.c.b16 %v2522, %v2518
  %v2583 = vpack.c.b16 %v2527, %v2523
  %v2584 = vpack.c.b16 %v2528, %v2524
  %v2585 = vpack.c.b16 %v2529, %v2525
  %v2586 = vpack.c.b16 %v2530, %v2526
  %v2587 = vpack.c.b16 %v2535, %v2531
  %v2588 = vpack.c.b16 %v2536, %v2532
  %v2589 = vpack.c.b16 %v2537, %v2533
  %v2590 = vpack.c.b16 %v2538, %v2534
  %v2591 = vpack.c.b16 %v2543, %v2539
  %v2592 = vpack.c.b16 %v2544, %v2540
  %v2593 = vpack.c.b16 %v2545, %v2541
  %v2594 = vpack.c.b16 %v2546, %v2542
  %v2595 = vpack.c.b16 %v2551, %v2547
  %v2596 = vpack.c.b16 %v2552, %v2548
  %v2597 = vpack.c.b16 %v2553, %v2549
  %v2598 = vpack.c.b16 %v2554, %v2550
  %v2599 = vpack.c.b16 %v2559, %v2555
  %v2600 = vpack.c.b16 %v2560, %v2556
  %v2601 = vpack.c.b16 %v2561, %v2557
  %v2602 = vpack.c.b16 %v2562, %v2558
  %v2603 = vpack.c.b16 %v2567, %v2563
  %v2604 = vpack.c.b16 %v2568, %v2564
  %v2605 = vpack.c.b16 %v2569, %v2565
  %v2606 = vpack.c.b16 %v2570, %v2566
  %v2607 = vpack.c.b16 %v2575, %v2571
  %v2608 = vpack.c.b16 %v2576, %v2572
  %v2609 = vpack.c.b16 %v2577, %v2573
  %v2610 = vpack.c.b16 %v2578, %v2574
  %2643 = vmatprep.subr.bf16.mxu0 %v2580
  %2644 = vmatpush1.bf16.msra.mxu0 %v2579
  %2645 = vmatprep.subr.bf16.mxu0 %v2584
  %2646 = vmatpush1.bf16.msra.mxu0 %v2583
  %2647 = vmatprep.subr.bf16.mxu0 %v2588
  %2648 = vmatpush1.bf16.msra.mxu0 %v2587
  %2649 = vmatprep.subr.bf16.mxu0 %v2592
  %2650 = vmatpush1.bf16.msra.mxu0 %v2591
  %2651 = vmatprep.subr.bf16.mxu0 %v2596
  %2652 = vmatpush1.bf16.msra.mxu0 %v2595
  %2653 = vmatprep.subr.bf16.mxu0 %v2600
  %2654 = vmatpush1.bf16.msra.mxu0 %v2599
  %2655 = vmatprep.subr.bf16.mxu0 %v2604
  %2656 = vmatpush1.bf16.msra.mxu0 %v2603
  %2657 = vmatprep.subr.bf16.mxu0 %v2608
  %2658 = vmatpush1.bf16.msra.mxu0 %v2607
  %2659 = vmatprep.subr.bf16.mxu0 0
  %2660 = vmatpush1.bf16.msra.mxu0 0
  %2661 = vmatprep.subr.bf16.mxu0 0
  %2662 = vmatpush1.bf16.msra.mxu0 0
  %2663 = vmatprep.subr.bf16.mxu0 0
  %2664 = vmatpush1.bf16.msra.mxu0 0
  %2665 = vmatprep.subr.bf16.mxu0 0
  %2666 = vmatpush1.bf16.msra.mxu0 0
  %2667 = vmatprep.subr.bf16.mxu0 0
  %2668 = vmatpush1.bf16.msra.mxu0 0
  %2669 = vmatprep.subr.bf16.mxu0 0
  %2670 = vmatpush1.bf16.msra.mxu0 0
  %2671 = vmatprep.subr.bf16.mxu0 0
  %2672 = vmatpush1.bf16.msra.mxu0 0
  %2673 = vmatprep.subr.bf16.mxu0 0
  %2674 = vmatpush1.bf16.msra.mxu0 0
  %2675 = vmatprep.mubr.bf16.mxu0 0
  %2676 = vmatmul.mubr.bf16.gmra.mrb[0].mxu0 %v2450
  %v2677 = vpop.f32.mrb[0].mxu0
  %v2678 = vadd.f32 0.0, %v2677
  %v2679 = vpop.f32.mrb[0].mxu0
  %v2680 = vadd.f32 0.0, %v2679
  %v2681 = vpop.f32.mrb[0].mxu0
  %v2682 = vpop.f32.mrb[0].mxu0
  %2683 = vdwg.mxu0
  %2684 = vmatprep.subr.bf16.mxu0 %v2582
  %2685 = vmatpush1.bf16.msra.mxu0 %v2581
  %2686 = vmatprep.subr.bf16.mxu0 %v2586
  %2687 = vmatpush1.bf16.msra.mxu0 %v2585
  %2688 = vmatprep.subr.bf16.mxu0 %v2590
  %2689 = vmatpush1.bf16.msra.mxu0 %v2589
  %2690 = vmatprep.subr.bf16.mxu0 %v2594
  %2691 = vmatpush1.bf16.msra.mxu0 %v2593
  %2692 = vmatprep.subr.bf16.mxu0 %v2598
  %2693 = vmatpush1.bf16.msra.mxu0 %v2597
  %2694 = vmatprep.subr.bf16.mxu0 %v2602
  %2695 = vmatpush1.bf16.msra.mxu0 %v2601
  %2696 = vmatprep.subr.bf16.mxu0 %v2606
  %2697 = vmatpush1.bf16.msra.mxu0 %v2605
  %2698 = vmatprep.subr.bf16.mxu0 %v2610
  %2699 = vmatpush1.bf16.msra.mxu0 %v2609
  %2700 = vmatprep.subr.bf16.mxu0 0
  %2701 = vmatpush1.bf16.msra.mxu0 0
  %2702 = vmatprep.subr.bf16.mxu0 0
  %2703 = vmatpush1.bf16.msra.mxu0 0
  %2704 = vmatprep.subr.bf16.mxu0 0
  %2705 = vmatpush1.bf16.msra.mxu0 0
  %2706 = vmatprep.subr.bf16.mxu0 0
  %2707 = vmatpush1.bf16.msra.mxu0 0
  %2708 = vmatprep.subr.bf16.mxu0 0
  %2709 = vmatpush1.bf16.msra.mxu0 0
  %2710 = vmatprep.subr.bf16.mxu0 0
  %2711 = vmatpush1.bf16.msra.mxu0 0
  %2712 = vmatprep.subr.bf16.mxu0 0
  %2713 = vmatpush1.bf16.msra.mxu0 0
  %2714 = vmatprep.subr.bf16.mxu0 0
  %2715 = vmatpush1.bf16.msra.mxu0 0
  %2716 = vmatprep.mubr.bf16.mxu0 0
  %2717 = vmatmul.mubr.bf16.gmra.mrb[0].mxu0 %v2450
  %v2718 = vpop.f32.mrb[0].mxu0
  %v2719 = vadd.f32 0.0, %v2718
  %v2720 = vpop.f32.mrb[0].mxu0
  %v2721 = vadd.f32 0.0, %v2720
  %v2722 = vpop.f32.mrb[0].mxu0
  %v2723 = vpop.f32.mrb[0].mxu0
  %2724 = vdwg.mxu0
  %v2726 = vlaneseq
  %v2727 = vshrl.u32 %v2726, 7
  %v2728 = vsub.s32 0, %v2727
  %v2729 = vrot.slane %v2449, %v2728
  %v2730 = vlaneseq
  %v2731 = vshrl.u32 %v2730, 7
  %v2732 = vsub.s32 1, %v2731
  %v2733 = vrot.slane %v2449, %v2732
  %v2734 = vlaneseq
  %v2735 = vshrl.u32 %v2734, 7
  %v2736 = vsub.s32 2, %v2735
  %v2737 = vrot.slane %v2449, %v2736
  %v2738 = vlaneseq
  %v2739 = vshrl.u32 %v2738, 7
  %v2740 = vsub.s32 3, %v2739
  %v2741 = vrot.slane %v2449, %v2740
  %v2746 = vadd.f32 %v2729, %v2678
  %v2747 = vadd.f32 %v2733, %v2680
  %v2748 = vadd.f32 %v2737, %v2719
  %v2749 = vadd.f32 %v2741, %v2721
  %v2750 = vld [vmem:[%s4] sm:$0xff]
  %v2751 = vld [vmem:[%s4 + $0x8] sm:$0xff]
  %v2752 = vld [vmem:[%s4 + $0x10] sm:$0xff]
  %v2753 = vld [vmem:[%s4 + $0x18] sm:$0xff]
  %v2754 = vld [vmem:[%s4 + $0x20] sm:$0xff]
  %v2755 = vld [vmem:[%s4 + $0x28] sm:$0xff]
  %v2756 = vld [vmem:[%s4 + $0x30] sm:$0xff]
  %v2757 = vld [vmem:[%s4 + $0x38] sm:$0xff]
  %v2758 = vld [vmem:[%s4 + $0x40] sm:$0xff]
  %v2759 = vld [vmem:[%s4 + $0x48] sm:$0xff]
  %v2760 = vld [vmem:[%s4 + $0x50] sm:$0xff]
  %v2761 = vld [vmem:[%s4 + $0x58] sm:$0xff]
  %v2762 = vld [vmem:[%s4 + $0x60] sm:$0xff]
  %v2763 = vld [vmem:[%s4 + $0x68] sm:$0xff]
  %v2764 = vld [vmem:[%s4 + $0x70] sm:$0xff]
  %v2765 = vld [vmem:[%s4 + $0x78] sm:$0xff]
  %v2766 = vld [vmem:[%s4 + $0x80] sm:$0xff]
  %v2767 = vld [vmem:[%s4 + $0x88] sm:$0xff]
  %v2768 = vld [vmem:[%s4 + $0x90] sm:$0xff]
  %v2769 = vld [vmem:[%s4 + $0x98] sm:$0xff]
  %v2770 = vld [vmem:[%s4 + $0xa0] sm:$0xff]
  %v2771 = vld [vmem:[%s4 + $0xa8] sm:$0xff]
  %v2772 = vld [vmem:[%s4 + $0xb0] sm:$0xff]
  %v2773 = vld [vmem:[%s4 + $0xb8] sm:$0xff]
  %v2774 = vld [vmem:[%s4 + $0xc0] sm:$0xff]
  %v2775 = vld [vmem:[%s4 + $0xc8] sm:$0xff]
  %v2776 = vld [vmem:[%s4 + $0xd0] sm:$0xff]
  %v2777 = vld [vmem:[%s4 + $0xd8] sm:$0xff]
  %v2778 = vld [vmem:[%s4 + $0xe0] sm:$0xff]
  %v2779 = vld [vmem:[%s4 + $0xe8] sm:$0xff]
  %v2780 = vld [vmem:[%s4 + $0xf0] sm:$0xff]
  %v2781 = vld [vmem:[%s4 + $0xf8] sm:$0xff]
  %v2814 = vunpack.c.l.b16 %v2750
  %v2815 = vunpack.c.h.b16 %v2750
  %v2816 = vunpack.c.l.b16 %v2751
  %v2817 = vunpack.c.h.b16 %v2751
  %v2818 = vunpack.c.l.b16 %v2752
  %v2819 = vunpack.c.h.b16 %v2752
  %v2820 = vunpack.c.l.b16 %v2753
  %v2821 = vunpack.c.h.b16 %v2753
  %v2822 = vunpack.c.l.b16 %v2754
  %v2823 = vunpack.c.h.b16 %v2754
  %v2824 = vunpack.c.l.b16 %v2755
  %v2825 = vunpack.c.h.b16 %v2755
  %v2826 = vunpack.c.l.b16 %v2756
  %v2827 = vunpack.c.h.b16 %v2756
  %v2828 = vunpack.c.l.b16 %v2757
  %v2829 = vunpack.c.h.b16 %v2757
  %v2830 = vunpack.c.l.b16 %v2758
  %v2831 = vunpack.c.h.b16 %v2758
  %v2832 = vunpack.c.l.b16 %v2759
  %v2833 = vunpack.c.h.b16 %v2759
  %v2834 = vunpack.c.l.b16 %v2760
  %v2835 = vunpack.c.h.b16 %v2760
  %v2836 = vunpack.c.l.b16 %v2761
  %v2837 = vunpack.c.h.b16 %v2761
  %v2838 = vunpack.c.l.b16 %v2762
  %v2839 = vunpack.c.h.b16 %v2762
  %v2840 = vunpack.c.l.b16 %v2763
  %v2841 = vunpack.c.h.b16 %v2763
  %v2842 = vunpack.c.l.b16 %v2764
  %v2843 = vunpack.c.h.b16 %v2764
  %v2844 = vunpack.c.l.b16 %v2765
  %v2845 = vunpack.c.h.b16 %v2765
  %v2846 = vunpack.c.l.b16 %v2766
  %v2847 = vunpack.c.h.b16 %v2766
  %v2848 = vunpack.c.l.b16 %v2767
  %v2849 = vunpack.c.h.b16 %v2767
  %v2850 = vunpack.c.l.b16 %v2768
  %v2851 = vunpack.c.h.b16 %v2768
  %v2852 = vunpack.c.l.b16 %v2769
  %v2853 = vunpack.c.h.b16 %v2769
  %v2854 = vunpack.c.l.b16 %v2770
  %v2855 = vunpack.c.h.b16 %v2770
  %v2856 = vunpack.c.l.b16 %v2771
  %v2857 = vunpack.c.h.b16 %v2771
  %v2858 = vunpack.c.l.b16 %v2772
  %v2859 = vunpack.c.h.b16 %v2772
  %v2860 = vunpack.c.l.b16 %v2773
  %v2861 = vunpack.c.h.b16 %v2773
  %v2862 = vunpack.c.l.b16 %v2774
  %v2863 = vunpack.c.h.b16 %v2774
  %v2864 = vunpack.c.l.b16 %v2775
  %v2865 = vunpack.c.h.b16 %v2775
  %v2866 = vunpack.c.l.b16 %v2776
  %v2867 = vunpack.c.h.b16 %v2776
  %v2868 = vunpack.c.l.b16 %v2777
  %v2869 = vunpack.c.h.b16 %v2777
  %v2870 = vunpack.c.l.b16 %v2778
  %v2871 = vunpack.c.h.b16 %v2778
  %v2872 = vunpack.c.l.b16 %v2779
  %v2873 = vunpack.c.h.b16 %v2779
  %v2874 = vunpack.c.l.b16 %v2780
  %v2875 = vunpack.c.h.b16 %v2780
  %v2876 = vunpack.c.l.b16 %v2781
  %v2877 = vunpack.c.h.b16 %v2781
  %v2878 = vpack.c.b16 %v2818, %v2814
  %v2879 = vpack.c.b16 %v2819, %v2815
  %v2880 = vpack.c.b16 %v2820, %v2816
  %v2881 = vpack.c.b16 %v2821, %v2817
  %v2882 = vpack.c.b16 %v2826, %v2822
  %v2883 = vpack.c.b16 %v2827, %v2823
  %v2884 = vpack.c.b16 %v2828, %v2824
  %v2885 = vpack.c.b16 %v2829, %v2825
  %v2886 = vpack.c.b16 %v2834, %v2830
  %v2887 = vpack.c.b16 %v2835, %v2831
  %v2888 = vpack.c.b16 %v2836, %v2832
  %v2889 = vpack.c.b16 %v2837, %v2833
  %v2890 = vpack.c.b16 %v2842, %v2838
  %v2891 = vpack.c.b16 %v2843, %v2839
  %v2892 = vpack.c.b16 %v2844, %v2840
  %v2893 = vpack.c.b16 %v2845, %v2841
  %v2894 = vpack.c.b16 %v2850, %v2846
  %v2895 = vpack.c.b16 %v2851, %v2847
  %v2896 = vpack.c.b16 %v2852, %v2848
  %v2897 = vpack.c.b16 %v2853, %v2849
  %v2898 = vpack.c.b16 %v2858, %v2854
  %v2899 = vpack.c.b16 %v2859, %v2855
  %v2900 = vpack.c.b16 %v2860, %v2856
  %v2901 = vpack.c.b16 %v2861, %v2857
  %v2902 = vpack.c.b16 %v2866, %v2862
  %v2903 = vpack.c.b16 %v2867, %v2863
  %v2904 = vpack.c.b16 %v2868, %v2864
  %v2905 = vpack.c.b16 %v2869, %v2865
  %v2906 = vpack.c.b16 %v2874, %v2870
  %v2907 = vpack.c.b16 %v2875, %v2871
  %v2908 = vpack.c.b16 %v2876, %v2872
  %v2909 = vpack.c.b16 %v2877, %v2873
  %2942 = vmatprep.subr.bf16.mxu0 %v2879
  %2943 = vmatpush1.bf16.msra.mxu0 %v2878
  %2944 = vmatprep.subr.bf16.mxu0 %v2883
  %2945 = vmatpush1.bf16.msra.mxu0 %v2882
  %2946 = vmatprep.subr.bf16.mxu0 %v2887
  %2947 = vmatpush1.bf16.msra.mxu0 %v2886
  %2948 = vmatprep.subr.bf16.mxu0 %v2891
  %2949 = vmatpush1.bf16.msra.mxu0 %v2890
  %2950 = vmatprep.subr.bf16.mxu0 %v2895
  %2951 = vmatpush1.bf16.msra.mxu0 %v2894
  %2952 = vmatprep.subr.bf16.mxu0 %v2899
  %2953 = vmatpush1.bf16.msra.mxu0 %v2898
  %2954 = vmatprep.subr.bf16.mxu0 %v2903
  %2955 = vmatpush1.bf16.msra.mxu0 %v2902
  %2956 = vmatprep.subr.bf16.mxu0 %v2907
  %2957 = vmatpush1.bf16.msra.mxu0 %v2906
  %2958 = vmatprep.subr.bf16.mxu0 0
  %2959 = vmatpush1.bf16.msra.mxu0 0
  %2960 = vmatprep.subr.bf16.mxu0 0
  %2961 = vmatpush1.bf16.msra.mxu0 0
  %2962 = vmatprep.subr.bf16.mxu0 0
  %2963 = vmatpush1.bf16.msra.mxu0 0
  %2964 = vmatprep.subr.bf16.mxu0 0
  %2965 = vmatpush1.bf16.msra.mxu0 0
  %2966 = vmatprep.subr.bf16.mxu0 0
  %2967 = vmatpush1.bf16.msra.mxu0 0
  %2968 = vmatprep.subr.bf16.mxu0 0
  %2969 = vmatpush1.bf16.msra.mxu0 0
  %2970 = vmatprep.subr.bf16.mxu0 0
  %2971 = vmatpush1.bf16.msra.mxu0 0
  %2972 = vmatprep.subr.bf16.mxu0 0
  %2973 = vmatpush1.bf16.msra.mxu0 0
  %2974 = vmatprep.mubr.bf16.mxu0 0
  %2975 = vmatmul.mubr.bf16.gmra.mrb[0].mxu0 %v2005
  %v2976 = vpop.f32.mrb[0].mxu0
  %v2977 = vadd.f32 0.0, %v2976
  %v2978 = vpop.f32.mrb[0].mxu0
  %v2979 = vadd.f32 0.0, %v2978
  %v2980 = vpop.f32.mrb[0].mxu0
  %v2981 = vpop.f32.mrb[0].mxu0
  %2982 = vdwg.mxu0
  %2983 = vmatprep.subr.bf16.mxu0 %v2881
  %2984 = vmatpush1.bf16.msra.mxu0 %v2880
  %2985 = vmatprep.subr.bf16.mxu0 %v2885
  %2986 = vmatpush1.bf16.msra.mxu0 %v2884
  %2987 = vmatprep.subr.bf16.mxu0 %v2889
  %2988 = vmatpush1.bf16.msra.mxu0 %v2888
  %2989 = vmatprep.subr.bf16.mxu0 %v2893
  %2990 = vmatpush1.bf16.msra.mxu0 %v2892
  %2991 = vmatprep.subr.bf16.mxu0 %v2897
  %2992 = vmatpush1.bf16.msra.mxu0 %v2896
  %2993 = vmatprep.subr.bf16.mxu0 %v2901
  %2994 = vmatpush1.bf16.msra.mxu0 %v2900
  %2995 = vmatprep.subr.bf16.mxu0 %v2905
  %2996 = vmatpush1.bf16.msra.mxu0 %v2904
  %2997 = vmatprep.subr.bf16.mxu0 %v2909
  %2998 = vmatpush1.bf16.msra.mxu0 %v2908
  %2999 = vmatprep.subr.bf16.mxu0 0
  %3000 = vmatpush1.bf16.msra.mxu0 0
  %3001 = vmatprep.subr.bf16.mxu0 0
  %3002 = vmatpush1.bf16.msra.mxu0 0
  %3003 = vmatprep.subr.bf16.mxu0 0
  %3004 = vmatpush1.bf16.msra.mxu0 0
  %3005 = vmatprep.subr.bf16.mxu0 0
  %3006 = vmatpush1.bf16.msra.mxu0 0
  %3007 = vmatprep.subr.bf16.mxu0 0
  %3008 = vmatpush1.bf16.msra.mxu0 0
  %3009 = vmatprep.subr.bf16.mxu0 0
  %3010 = vmatpush1.bf16.msra.mxu0 0
  %3011 = vmatprep.subr.bf16.mxu0 0
  %3012 = vmatpush1.bf16.msra.mxu0 0
  %3013 = vmatprep.subr.bf16.mxu0 0
  %3014 = vmatpush1.bf16.msra.mxu0 0
  %3015 = vmatprep.mubr.bf16.mxu0 0
  %3016 = vmatmul.mubr.bf16.gmra.mrb[0].mxu0 %v2005
  %v3017 = vpop.f32.mrb[0].mxu0
  %v3018 = vadd.f32 0.0, %v3017
  %v3019 = vpop.f32.mrb[0].mxu0
  %v3020 = vadd.f32 0.0, %v3019
  %v3021 = vpop.f32.mrb[0].mxu0
  %v3022 = vpop.f32.mrb[0].mxu0
  %3023 = vdwg.mxu0
  %v3024 = vadd.f32 %v2746, %v2977
  %v3025 = vadd.f32 %v2747, %v2979
  %v3026 = vadd.f32 %v2748, %v3018
  %v3027 = vadd.f32 %v2749, %v3020
  %v3028 = vxor.u32 %v3024, 2147483648
  %v3029 = vmul.f32 %v3028, 1.442695
  %v3030 = vpow.pop %v3029
  %v3031 = vadd.f32 %v3030, 1.0
  %v3032 = vrcp.pop %v3031
  %v3033 = vmul.f32 1.0, %v3032
  %v3034 = vxor.u32 %v3025, 2147483648
  %v3035 = vmul.f32 %v3034, 1.442695
  %v3036 = vpow.pop %v3035
  %v3037 = vadd.f32 %v3036, 1.0
  %v3038 = vrcp.pop %v3037
  %v3039 = vmul.f32 1.0, %v3038
  %v3040 = vtanh.pop %v3026
  %v3041 = vxor.u32 %v3027, 2147483648
  %v3042 = vmul.f32 %v3041, 1.442695
  %v3043 = vpow.pop %v3042
  %v3044 = vadd.f32 %v3043, 1.0
  %v3045 = vrcp.pop %v3044
  %v3046 = vmul.f32 1.0, %v3045
  %v3047 = vmul.f32 %v3039, %v2002
  %v3048 = vmul.f32 %v3033, %v3040
  %v3049 = vadd.f32 %v3047, %v3048
  %v3050 = vtanh.pop %v3049
  %v3051 = vmul.f32 %v3046, %v3050
  %v3052 = vpack.c.bf16 %v3051, %v3051
  %v3053 = vld [vmem:[%s5] sm:$0xf]
  %v3054 = vld [vmem:[%s5 + $0x4] sm:$0xf]
  %v3055 = vld [vmem:[%s5 + $0x8] sm:$0xf]
  %v3056 = vld [vmem:[%s5 + $0xc] sm:$0xf]
  %v3057 = vld [vmem:[%s5 + $0x10] sm:$0xf]
  %v3058 = vld [vmem:[%s5 + $0x14] sm:$0xf]
  %v3059 = vld [vmem:[%s5 + $0x18] sm:$0xf]
  %v3060 = vld [vmem:[%s5 + $0x1c] sm:$0xf]
  %v3061 = vld [vmem:[%s5 + $0x20] sm:$0xf]
  %v3062 = vld [vmem:[%s5 + $0x24] sm:$0xf]
  %v3063 = vld [vmem:[%s5 + $0x28] sm:$0xf]
  %v3064 = vld [vmem:[%s5 + $0x2c] sm:$0xf]
  %v3065 = vld [vmem:[%s5 + $0x30] sm:$0xf]
  %v3066 = vld [vmem:[%s5 + $0x34] sm:$0xf]
  %v3067 = vld [vmem:[%s5 + $0x38] sm:$0xf]
  %v3068 = vld [vmem:[%s5 + $0x3c] sm:$0xf]
  %v3069 = vld [vmem:[%s6] sm:$0x1]
  %v3071 = vlaneseq
  %v3072 = vshrl.u32 %v3071, 7
  %v3073 = vsub.s32 0, %v3072
  %v3074 = vrot.slane %v3069, %v3073
  %v3092 = vunpack.c.l.b16 %v3053
  %v3093 = vunpack.c.l.b16 %v3054
  %v3094 = vunpack.c.l.b16 %v3055
  %v3095 = vunpack.c.l.b16 %v3056
  %v3096 = vunpack.c.l.b16 %v3057
  %v3097 = vunpack.c.l.b16 %v3058
  %v3098 = vunpack.c.l.b16 %v3059
  %v3099 = vunpack.c.l.b16 %v3060
  %v3100 = vunpack.c.l.b16 %v3061
  %v3101 = vunpack.c.l.b16 %v3062
  %v3102 = vunpack.c.l.b16 %v3063
  %v3103 = vunpack.c.l.b16 %v3064
  %v3104 = vunpack.c.l.b16 %v3065
  %v3105 = vunpack.c.l.b16 %v3066
  %v3106 = vunpack.c.l.b16 %v3067
  %v3107 = vunpack.c.l.b16 %v3068
  %v3108 = vpack.c.b16 %v3093, %v3092
  %v3109 = vpack.c.b16 %v3095, %v3094
  %v3110 = vpack.c.b16 %v3097, %v3096
  %v3111 = vpack.c.b16 %v3099, %v3098
  %v3112 = vpack.c.b16 %v3101, %v3100
  %v3113 = vpack.c.b16 %v3103, %v3102
  %v3114 = vpack.c.b16 %v3105, %v3104
  %v3115 = vpack.c.b16 %v3107, %v3106
  %3124 = vmatprep.subr.bf16.mxu0 0
  %3125 = vmatpush1.bf16.msra.mxu0 %v3108
  %3126 = vmatprep.subr.bf16.mxu0 0
  %3127 = vmatpush1.bf16.msra.mxu0 %v3109
  %3128 = vmatprep.subr.bf16.mxu0 0
  %3129 = vmatpush1.bf16.msra.mxu0 %v3110
  %3130 = vmatprep.subr.bf16.mxu0 0
  %3131 = vmatpush1.bf16.msra.mxu0 %v3111
  %3132 = vmatprep.subr.bf16.mxu0 0
  %3133 = vmatpush1.bf16.msra.mxu0 %v3112
  %3134 = vmatprep.subr.bf16.mxu0 0
  %3135 = vmatpush1.bf16.msra.mxu0 %v3113
  %3136 = vmatprep.subr.bf16.mxu0 0
  %3137 = vmatpush1.bf16.msra.mxu0 %v3114
  %3138 = vmatprep.subr.bf16.mxu0 0
  %3139 = vmatpush1.bf16.msra.mxu0 %v3115
  %3140 = vmatprep.subr.bf16.mxu0 0
  %3141 = vmatpush1.bf16.msra.mxu0 0
  %3142 = vmatprep.subr.bf16.mxu0 0
  %3143 = vmatpush1.bf16.msra.mxu0 0
  %3144 = vmatprep.subr.bf16.mxu0 0
  %3145 = vmatpush1.bf16.msra.mxu0 0
  %3146 = vmatprep.subr.bf16.mxu0 0
  %3147 = vmatpush1.bf16.msra.mxu0 0
  %3148 = vmatprep.subr.bf16.mxu0 0
  %3149 = vmatpush1.bf16.msra.mxu0 0
  %3150 = vmatprep.subr.bf16.mxu0 0
  %3151 = vmatpush1.bf16.msra.mxu0 0
  %3152 = vmatprep.subr.bf16.mxu0 0
  %3153 = vmatpush1.bf16.msra.mxu0 0
  %3154 = vmatprep.subr.bf16.mxu0 0
  %3155 = vmatpush1.bf16.msra.mxu0 0
  %3156 = vmatprep.mubr.bf16.mxu0 0
  %3157 = vmatmul.mubr.bf16.gmra.mrb[0].mxu0 %v3052
  %v3158 = vpop.f32.mrb[0].mxu0
  %v3159 = vadd.f32 %v3074, %v3158
  %v3160 = vpop.f32.mrb[0].mxu0
  %v3161 = vpop.f32.mrb[0].mxu0
  %v3162 = vpop.f32.mrb[0].mxu0
  %3163 = vdwg.mxu0
  %s3164 = scalar_lea.vmem %s7, 4
  %3165 = vst [vmem:[%s3164] sm:$0x3] %v3159
  %s3166 = scalar_lea.vmem %s0, 24
  %v3167 = vld [vmem:[%s3166] sm:$0xff]
  %v3168 = vld [vmem:[%s1] sm:$0xff]
  %v3169 = vld [vmem:[%s1 + $0x8] sm:$0xff]
  %v3170 = vld [vmem:[%s1 + $0x10] sm:$0xff]
  %v3171 = vld [vmem:[%s1 + $0x18] sm:$0xff]
  %v3172 = vld [vmem:[%s1 + $0x20] sm:$0xff]
  %v3173 = vld [vmem:[%s1 + $0x28] sm:$0xff]
  %v3174 = vld [vmem:[%s1 + $0x30] sm:$0xff]
  %v3175 = vld [vmem:[%s1 + $0x38] sm:$0xff]
  %v3176 = vld [vmem:[%s1 + $0x40] sm:$0xff]
  %v3177 = vld [vmem:[%s1 + $0x48] sm:$0xff]
  %v3178 = vld [vmem:[%s1 + $0x50] sm:$0xff]
  %v3179 = vld [vmem:[%s1 + $0x58] sm:$0xff]
  %v3180 = vld [vmem:[%s1 + $0x60] sm:$0xff]
  %v3181 = vld [vmem:[%s1 + $0x68] sm:$0xff]
  %v3182 = vld [vmem:[%s1 + $0x70] sm:$0xff]
  %v3183 = vld [vmem:[%s1 + $0x78] sm:$0xff]
  %v3184 = vld [vmem:[%s1 + $0x80] sm:$0xff]
  %v3185 = vld [vmem:[%s1 + $0x88] sm:$0xff]
  %v3186 = vld [vmem:[%s1 + $0x90] sm:$0xff]
  %v3187 = vld [vmem:[%s1 + $0x98] sm:$0xff]
  %v3188 = vld [vmem:[%s1 + $0xa0] sm:$0xff]
  %v3189 = vld [vmem:[%s1 + $0xa8] sm:$0xff]
  %v3190 = vld [vmem:[%s1 + $0xb0] sm:$0xff]
  %v3191 = vld [vmem:[%s1 + $0xb8] sm:$0xff]
  %v3192 = vld [vmem:[%s1 + $0xc0] sm:$0xff]
  %v3193 = vld [vmem:[%s1 + $0xc8] sm:$0xff]
  %v3194 = vld [vmem:[%s1 + $0xd0] sm:$0xff]
  %v3195 = vld [vmem:[%s1 + $0xd8] sm:$0xff]
  %v3196 = vld [vmem:[%s1 + $0xe0] sm:$0xff]
  %v3197 = vld [vmem:[%s1 + $0xe8] sm:$0xff]
  %v3198 = vld [vmem:[%s1 + $0xf0] sm:$0xff]
  %v3199 = vld [vmem:[%s1 + $0xf8] sm:$0xff]
  %v3232 = vunpack.c.l.b16 %v3168
  %v3233 = vunpack.c.h.b16 %v3168
  %v3234 = vunpack.c.l.b16 %v3169
  %v3235 = vunpack.c.h.b16 %v3169
  %v3236 = vunpack.c.l.b16 %v3170
  %v3237 = vunpack.c.h.b16 %v3170
  %v3238 = vunpack.c.l.b16 %v3171
  %v3239 = vunpack.c.h.b16 %v3171
  %v3240 = vunpack.c.l.b16 %v3172
  %v3241 = vunpack.c.h.b16 %v3172
  %v3242 = vunpack.c.l.b16 %v3173
  %v3243 = vunpack.c.h.b16 %v3173
  %v3244 = vunpack.c.l.b16 %v3174
  %v3245 = vunpack.c.h.b16 %v3174
  %v3246 = vunpack.c.l.b16 %v3175
  %v3247 = vunpack.c.h.b16 %v3175
  %v3248 = vunpack.c.l.b16 %v3176
  %v3249 = vunpack.c.h.b16 %v3176
  %v3250 = vunpack.c.l.b16 %v3177
  %v3251 = vunpack.c.h.b16 %v3177
  %v3252 = vunpack.c.l.b16 %v3178
  %v3253 = vunpack.c.h.b16 %v3178
  %v3254 = vunpack.c.l.b16 %v3179
  %v3255 = vunpack.c.h.b16 %v3179
  %v3256 = vunpack.c.l.b16 %v3180
  %v3257 = vunpack.c.h.b16 %v3180
  %v3258 = vunpack.c.l.b16 %v3181
  %v3259 = vunpack.c.h.b16 %v3181
  %v3260 = vunpack.c.l.b16 %v3182
  %v3261 = vunpack.c.h.b16 %v3182
  %v3262 = vunpack.c.l.b16 %v3183
  %v3263 = vunpack.c.h.b16 %v3183
  %v3264 = vunpack.c.l.b16 %v3184
  %v3265 = vunpack.c.h.b16 %v3184
  %v3266 = vunpack.c.l.b16 %v3185
  %v3267 = vunpack.c.h.b16 %v3185
  %v3268 = vunpack.c.l.b16 %v3186
  %v3269 = vunpack.c.h.b16 %v3186
  %v3270 = vunpack.c.l.b16 %v3187
  %v3271 = vunpack.c.h.b16 %v3187
  %v3272 = vunpack.c.l.b16 %v3188
  %v3273 = vunpack.c.h.b16 %v3188
  %v3274 = vunpack.c.l.b16 %v3189
  %v3275 = vunpack.c.h.b16 %v3189
  %v3276 = vunpack.c.l.b16 %v3190
  %v3277 = vunpack.c.h.b16 %v3190
  %v3278 = vunpack.c.l.b16 %v3191
  %v3279 = vunpack.c.h.b16 %v3191
  %v3280 = vunpack.c.l.b16 %v3192
  %v3281 = vunpack.c.h.b16 %v3192
  %v3282 = vunpack.c.l.b16 %v3193
  %v3283 = vunpack.c.h.b16 %v3193
  %v3284 = vunpack.c.l.b16 %v3194
  %v3285 = vunpack.c.h.b16 %v3194
  %v3286 = vunpack.c.l.b16 %v3195
  %v3287 = vunpack.c.h.b16 %v3195
  %v3288 = vunpack.c.l.b16 %v3196
  %v3289 = vunpack.c.h.b16 %v3196
  %v3290 = vunpack.c.l.b16 %v3197
  %v3291 = vunpack.c.h.b16 %v3197
  %v3292 = vunpack.c.l.b16 %v3198
  %v3293 = vunpack.c.h.b16 %v3198
  %v3294 = vunpack.c.l.b16 %v3199
  %v3295 = vunpack.c.h.b16 %v3199
  %v3296 = vpack.c.b16 %v3236, %v3232
  %v3297 = vpack.c.b16 %v3237, %v3233
  %v3298 = vpack.c.b16 %v3238, %v3234
  %v3299 = vpack.c.b16 %v3239, %v3235
  %v3300 = vpack.c.b16 %v3244, %v3240
  %v3301 = vpack.c.b16 %v3245, %v3241
  %v3302 = vpack.c.b16 %v3246, %v3242
  %v3303 = vpack.c.b16 %v3247, %v3243
  %v3304 = vpack.c.b16 %v3252, %v3248
  %v3305 = vpack.c.b16 %v3253, %v3249
  %v3306 = vpack.c.b16 %v3254, %v3250
  %v3307 = vpack.c.b16 %v3255, %v3251
  %v3308 = vpack.c.b16 %v3260, %v3256
  %v3309 = vpack.c.b16 %v3261, %v3257
  %v3310 = vpack.c.b16 %v3262, %v3258
  %v3311 = vpack.c.b16 %v3263, %v3259
  %v3312 = vpack.c.b16 %v3268, %v3264
  %v3313 = vpack.c.b16 %v3269, %v3265
  %v3314 = vpack.c.b16 %v3270, %v3266
  %v3315 = vpack.c.b16 %v3271, %v3267
  %v3316 = vpack.c.b16 %v3276, %v3272
  %v3317 = vpack.c.b16 %v3277, %v3273
  %v3318 = vpack.c.b16 %v3278, %v3274
  %v3319 = vpack.c.b16 %v3279, %v3275
  %v3320 = vpack.c.b16 %v3284, %v3280
  %v3321 = vpack.c.b16 %v3285, %v3281
  %v3322 = vpack.c.b16 %v3286, %v3282
  %v3323 = vpack.c.b16 %v3287, %v3283
  %v3324 = vpack.c.b16 %v3292, %v3288
  %v3325 = vpack.c.b16 %v3293, %v3289
  %v3326 = vpack.c.b16 %v3294, %v3290
  %v3327 = vpack.c.b16 %v3295, %v3291
  %3360 = vmatprep.subr.bf16.mxu0 %v3297
  %3361 = vmatpush1.bf16.msra.mxu0 %v3296
  %3362 = vmatprep.subr.bf16.mxu0 %v3301
  %3363 = vmatpush1.bf16.msra.mxu0 %v3300
  %3364 = vmatprep.subr.bf16.mxu0 %v3305
  %3365 = vmatpush1.bf16.msra.mxu0 %v3304
  %3366 = vmatprep.subr.bf16.mxu0 %v3309
  %3367 = vmatpush1.bf16.msra.mxu0 %v3308
  %3368 = vmatprep.subr.bf16.mxu0 %v3313
  %3369 = vmatpush1.bf16.msra.mxu0 %v3312
  %3370 = vmatprep.subr.bf16.mxu0 %v3317
  %3371 = vmatpush1.bf16.msra.mxu0 %v3316
  %3372 = vmatprep.subr.bf16.mxu0 %v3321
  %3373 = vmatpush1.bf16.msra.mxu0 %v3320
  %3374 = vmatprep.subr.bf16.mxu0 %v3325
  %3375 = vmatpush1.bf16.msra.mxu0 %v3324
  %3376 = vmatprep.subr.bf16.mxu0 0
  %3377 = vmatpush1.bf16.msra.mxu0 0
  %3378 = vmatprep.subr.bf16.mxu0 0
  %3379 = vmatpush1.bf16.msra.mxu0 0
  %3380 = vmatprep.subr.bf16.mxu0 0
  %3381 = vmatpush1.bf16.msra.mxu0 0
  %3382 = vmatprep.subr.bf16.mxu0 0
  %3383 = vmatpush1.bf16.msra.mxu0 0
  %3384 = vmatprep.subr.bf16.mxu0 0
  %3385 = vmatpush1.bf16.msra.mxu0 0
  %3386 = vmatprep.subr.bf16.mxu0 0
  %3387 = vmatpush1.bf16.msra.mxu0 0
  %3388 = vmatprep.subr.bf16.mxu0 0
  %3389 = vmatpush1.bf16.msra.mxu0 0
  %3390 = vmatprep.subr.bf16.mxu0 0
  %3391 = vmatpush1.bf16.msra.mxu0 0
  %3392 = vmatprep.mubr.bf16.mxu0 0
  %3393 = vmatmul.mubr.bf16.gmra.mrb[0].mxu0 %v2450
  %v3394 = vpop.f32.mrb[0].mxu0
  %v3395 = vadd.f32 0.0, %v3394
  %v3396 = vpop.f32.mrb[0].mxu0
  %v3397 = vadd.f32 0.0, %v3396
  %v3398 = vpop.f32.mrb[0].mxu0
  %v3399 = vpop.f32.mrb[0].mxu0
  %3400 = vdwg.mxu0
  %3401 = vmatprep.subr.bf16.mxu0 %v3299
  %3402 = vmatpush1.bf16.msra.mxu0 %v3298
  %3403 = vmatprep.subr.bf16.mxu0 %v3303
  %3404 = vmatpush1.bf16.msra.mxu0 %v3302
  %3405 = vmatprep.subr.bf16.mxu0 %v3307
  %3406 = vmatpush1.bf16.msra.mxu0 %v3306
  %3407 = vmatprep.subr.bf16.mxu0 %v3311
  %3408 = vmatpush1.bf16.msra.mxu0 %v3310
  %3409 = vmatprep.subr.bf16.mxu0 %v3315
  %3410 = vmatpush1.bf16.msra.mxu0 %v3314
  %3411 = vmatprep.subr.bf16.mxu0 %v3319
  %3412 = vmatpush1.bf16.msra.mxu0 %v3318
  %3413 = vmatprep.subr.bf16.mxu0 %v3323
  %3414 = vmatpush1.bf16.msra.mxu0 %v3322
  %3415 = vmatprep.subr.bf16.mxu0 %v3327
  %3416 = vmatpush1.bf16.msra.mxu0 %v3326
  %3417 = vmatprep.subr.bf16.mxu0 0
  %3418 = vmatpush1.bf16.msra.mxu0 0
  %3419 = vmatprep.subr.bf16.mxu0 0
  %3420 = vmatpush1.bf16.msra.mxu0 0
  %3421 = vmatprep.subr.bf16.mxu0 0
  %3422 = vmatpush1.bf16.msra.mxu0 0
  %3423 = vmatprep.subr.bf16.mxu0 0
  %3424 = vmatpush1.bf16.msra.mxu0 0
  %3425 = vmatprep.subr.bf16.mxu0 0
  %3426 = vmatpush1.bf16.msra.mxu0 0
  %3427 = vmatprep.subr.bf16.mxu0 0
  %3428 = vmatpush1.bf16.msra.mxu0 0
  %3429 = vmatprep.subr.bf16.mxu0 0
  %3430 = vmatpush1.bf16.msra.mxu0 0
  %3431 = vmatprep.subr.bf16.mxu0 0
  %3432 = vmatpush1.bf16.msra.mxu0 0
  %3433 = vmatprep.mubr.bf16.mxu0 0
  %3434 = vmatmul.mubr.bf16.gmra.mrb[0].mxu0 %v2450
  %v3435 = vpop.f32.mrb[0].mxu0
  %v3436 = vadd.f32 0.0, %v3435
  %v3437 = vpop.f32.mrb[0].mxu0
  %v3438 = vadd.f32 0.0, %v3437
  %v3439 = vpop.f32.mrb[0].mxu0
  %v3440 = vpop.f32.mrb[0].mxu0
  %3441 = vdwg.mxu0
  %v3446 = vcombine.low %v3395, %v3397
  %v3447 = vcombine.low %v3436, %v3438
  %v3449 = vunpack.c.l.s4 1983009808
  %v3450 = vunpack.c.0.s8 %v3449
  %v3451 = vlaneseq
  %v3452 = vshrl.u32 %v3451, 7
  %v3453 = vsub.s32 %v3450, %v3452
  %v3454 = vrot.slane %v3446, %v3453
  %v3456 = vunpack.c.l.s4 1983009808
  %v3457 = vunpack.c.0.s8 %v3456
  %v3458 = vlaneseq
  %v3459 = vshrl.u32 %v3458, 7
  %v3460 = vsub.s32 %v3457, %v3459
  %v3461 = vrot.slane %v3447, %v3460
  %v3462 = vcombine.low %v3454, %v3461
  %v3464 = vadd.f32 %v3167, %v3462
  %v3465 = vxor.u32 %v3464, 2147483648
  %v3466 = vmul.f32 %v3465, 1.442695
  %v3467 = vpow.pop %v3466
  %v3468 = vadd.f32 %v3467, 1.0
  %v3469 = vrcp.pop %v3468
  %v3470 = vmul.f32 1.0, %v3469
  %v3472 = vrot.slane %v3464, 2
  %v3474 = vxor.u32 %v3472, 2147483648
  %v3475 = vmul.f32 %v3474, 1.442695
  %v3476 = vpow.pop %v3475
  %v3477 = vadd.f32 %v3476, 1.0
  %v3478 = vrcp.pop %v3477
  %v3479 = vmul.f32 1.0, %v3478
  %v3480 = vrot.slane %v3464, 4
  %v3482 = vtanh.pop %v3480
  %v3483 = vrot.slane %v3464, 6
  %v3485 = vxor.u32 %v3483, 2147483648
  %v3486 = vmul.f32 %v3485, 1.442695
  %v3487 = vpow.pop %v3486
  %v3488 = vadd.f32 %v3487, 1.0
  %v3489 = vrcp.pop %v3488
  %v3490 = vmul.f32 1.0, %v3489
  %v3491 = vmul.f32 %v3479, %v2446
  %v3492 = vmul.f32 %v3470, %v3482
  %v3493 = vadd.f32 %v3491, %v3492
  %v3494 = vtanh.pop %v3493
  %v3495 = vmul.f32 %v3490, %v3494
  %v3496 = vld [vmem:[%s3] sm:$0xf]
  %v3497 = vpack.c.bf16 %v3495, %v3495
  %v3498 = vld [vmem:[%s2] sm:$0xff]
  %v3499 = vld [vmem:[%s2 + $0x8] sm:$0xff]
  %v3500 = vld [vmem:[%s2 + $0x10] sm:$0xff]
  %v3501 = vld [vmem:[%s2 + $0x18] sm:$0xff]
  %v3502 = vld [vmem:[%s2 + $0x20] sm:$0xff]
  %v3503 = vld [vmem:[%s2 + $0x28] sm:$0xff]
  %v3504 = vld [vmem:[%s2 + $0x30] sm:$0xff]
  %v3505 = vld [vmem:[%s2 + $0x38] sm:$0xff]
  %v3506 = vld [vmem:[%s2 + $0x40] sm:$0xff]
  %v3507 = vld [vmem:[%s2 + $0x48] sm:$0xff]
  %v3508 = vld [vmem:[%s2 + $0x50] sm:$0xff]
  %v3509 = vld [vmem:[%s2 + $0x58] sm:$0xff]
  %v3510 = vld [vmem:[%s2 + $0x60] sm:$0xff]
  %v3511 = vld [vmem:[%s2 + $0x68] sm:$0xff]
  %v3512 = vld [vmem:[%s2 + $0x70] sm:$0xff]
  %v3513 = vld [vmem:[%s2 + $0x78] sm:$0xff]
  %v3514 = vld [vmem:[%s2 + $0x80] sm:$0xff]
  %v3515 = vld [vmem:[%s2 + $0x88] sm:$0xff]
  %v3516 = vld [vmem:[%s2 + $0x90] sm:$0xff]
  %v3517 = vld [vmem:[%s2 + $0x98] sm:$0xff]
  %v3518 = vld [vmem:[%s2 + $0xa0] sm:$0xff]
  %v3519 = vld [vmem:[%s2 + $0xa8] sm:$0xff]
  %v3520 = vld [vmem:[%s2 + $0xb0] sm:$0xff]
  %v3521 = vld [vmem:[%s2 + $0xb8] sm:$0xff]
  %v3522 = vld [vmem:[%s2 + $0xc0] sm:$0xff]
  %v3523 = vld [vmem:[%s2 + $0xc8] sm:$0xff]
  %v3524 = vld [vmem:[%s2 + $0xd0] sm:$0xff]
  %v3525 = vld [vmem:[%s2 + $0xd8] sm:$0xff]
  %v3526 = vld [vmem:[%s2 + $0xe0] sm:$0xff]
  %v3527 = vld [vmem:[%s2 + $0xe8] sm:$0xff]
  %v3528 = vld [vmem:[%s2 + $0xf0] sm:$0xff]
  %v3529 = vld [vmem:[%s2 + $0xf8] sm:$0xff]
  %v3562 = vunpack.c.l.b16 %v3498
  %v3563 = vunpack.c.h.b16 %v3498
  %v3564 = vunpack.c.l.b16 %v3499
  %v3565 = vunpack.c.h.b16 %v3499
  %v3566 = vunpack.c.l.b16 %v3500
  %v3567 = vunpack.c.h.b16 %v3500
  %v3568 = vunpack.c.l.b16 %v3501
  %v3569 = vunpack.c.h.b16 %v3501
  %v3570 = vunpack.c.l.b16 %v3502
  %v3571 = vunpack.c.h.b16 %v3502
  %v3572 = vunpack.c.l.b16 %v3503
  %v3573 = vunpack.c.h.b16 %v3503
  %v3574 = vunpack.c.l.b16 %v3504
  %v3575 = vunpack.c.h.b16 %v3504
  %v3576 = vunpack.c.l.b16 %v3505
  %v3577 = vunpack.c.h.b16 %v3505
  %v3578 = vunpack.c.l.b16 %v3506
  %v3579 = vunpack.c.h.b16 %v3506
  %v3580 = vunpack.c.l.b16 %v3507
  %v3581 = vunpack.c.h.b16 %v3507
  %v3582 = vunpack.c.l.b16 %v3508
  %v3583 = vunpack.c.h.b16 %v3508
  %v3584 = vunpack.c.l.b16 %v3509
  %v3585 = vunpack.c.h.b16 %v3509
  %v3586 = vunpack.c.l.b16 %v3510
  %v3587 = vunpack.c.h.b16 %v3510
  %v3588 = vunpack.c.l.b16 %v3511
  %v3589 = vunpack.c.h.b16 %v3511
  %v3590 = vunpack.c.l.b16 %v3512
  %v3591 = vunpack.c.h.b16 %v3512
  %v3592 = vunpack.c.l.b16 %v3513
  %v3593 = vunpack.c.h.b16 %v3513
  %v3594 = vunpack.c.l.b16 %v3514
  %v3595 = vunpack.c.h.b16 %v3514
  %v3596 = vunpack.c.l.b16 %v3515
  %v3597 = vunpack.c.h.b16 %v3515
  %v3598 = vunpack.c.l.b16 %v3516
  %v3599 = vunpack.c.h.b16 %v3516
  %v3600 = vunpack.c.l.b16 %v3517
  %v3601 = vunpack.c.h.b16 %v3517
  %v3602 = vunpack.c.l.b16 %v3518
  %v3603 = vunpack.c.h.b16 %v3518
  %v3604 = vunpack.c.l.b16 %v3519
  %v3605 = vunpack.c.h.b16 %v3519
  %v3606 = vunpack.c.l.b16 %v3520
  %v3607 = vunpack.c.h.b16 %v3520
  %v3608 = vunpack.c.l.b16 %v3521
  %v3609 = vunpack.c.h.b16 %v3521
  %v3610 = vunpack.c.l.b16 %v3522
  %v3611 = vunpack.c.h.b16 %v3522
  %v3612 = vunpack.c.l.b16 %v3523
  %v3613 = vunpack.c.h.b16 %v3523
  %v3614 = vunpack.c.l.b16 %v3524
  %v3615 = vunpack.c.h.b16 %v3524
  %v3616 = vunpack.c.l.b16 %v3525
  %v3617 = vunpack.c.h.b16 %v3525
  %v3618 = vunpack.c.l.b16 %v3526
  %v3619 = vunpack.c.h.b16 %v3526
  %v3620 = vunpack.c.l.b16 %v3527
  %v3621 = vunpack.c.h.b16 %v3527
  %v3622 = vunpack.c.l.b16 %v3528
  %v3623 = vunpack.c.h.b16 %v3528
  %v3624 = vunpack.c.l.b16 %v3529
  %v3625 = vunpack.c.h.b16 %v3529
  %v3626 = vpack.c.b16 %v3566, %v3562
  %v3627 = vpack.c.b16 %v3567, %v3563
  %v3628 = vpack.c.b16 %v3568, %v3564
  %v3629 = vpack.c.b16 %v3569, %v3565
  %v3630 = vpack.c.b16 %v3574, %v3570
  %v3631 = vpack.c.b16 %v3575, %v3571
  %v3632 = vpack.c.b16 %v3576, %v3572
  %v3633 = vpack.c.b16 %v3577, %v3573
  %v3634 = vpack.c.b16 %v3582, %v3578
  %v3635 = vpack.c.b16 %v3583, %v3579
  %v3636 = vpack.c.b16 %v3584, %v3580
  %v3637 = vpack.c.b16 %v3585, %v3581
  %v3638 = vpack.c.b16 %v3590, %v3586
  %v3639 = vpack.c.b16 %v3591, %v3587
  %v3640 = vpack.c.b16 %v3592, %v3588
  %v3641 = vpack.c.b16 %v3593, %v3589
  %v3642 = vpack.c.b16 %v3598, %v3594
  %v3643 = vpack.c.b16 %v3599, %v3595
  %v3644 = vpack.c.b16 %v3600, %v3596
  %v3645 = vpack.c.b16 %v3601, %v3597
  %v3646 = vpack.c.b16 %v3606, %v3602
  %v3647 = vpack.c.b16 %v3607, %v3603
  %v3648 = vpack.c.b16 %v3608, %v3604
  %v3649 = vpack.c.b16 %v3609, %v3605
  %v3650 = vpack.c.b16 %v3614, %v3610
  %v3651 = vpack.c.b16 %v3615, %v3611
  %v3652 = vpack.c.b16 %v3616, %v3612
  %v3653 = vpack.c.b16 %v3617, %v3613
  %v3654 = vpack.c.b16 %v3622, %v3618
  %v3655 = vpack.c.b16 %v3623, %v3619
  %v3656 = vpack.c.b16 %v3624, %v3620
  %v3657 = vpack.c.b16 %v3625, %v3621
  %3690 = vmatprep.subr.bf16.mxu0 %v3627
  %3691 = vmatpush1.bf16.msra.mxu0 %v3626
  %3692 = vmatprep.subr.bf16.mxu0 %v3631
  %3693 = vmatpush1.bf16.msra.mxu0 %v3630
  %3694 = vmatprep.subr.bf16.mxu0 %v3635
  %3695 = vmatpush1.bf16.msra.mxu0 %v3634
  %3696 = vmatprep.subr.bf16.mxu0 %v3639
  %3697 = vmatpush1.bf16.msra.mxu0 %v3638
  %3698 = vmatprep.subr.bf16.mxu0 %v3643
  %3699 = vmatpush1.bf16.msra.mxu0 %v3642
  %3700 = vmatprep.subr.bf16.mxu0 %v3647
  %3701 = vmatpush1.bf16.msra.mxu0 %v3646
  %3702 = vmatprep.subr.bf16.mxu0 %v3651
  %3703 = vmatpush1.bf16.msra.mxu0 %v3650
  %3704 = vmatprep.subr.bf16.mxu0 %v3655
  %3705 = vmatpush1.bf16.msra.mxu0 %v3654
  %3706 = vmatprep.subr.bf16.mxu0 0
  %3707 = vmatpush1.bf16.msra.mxu0 0
  %3708 = vmatprep.subr.bf16.mxu0 0
  %3709 = vmatpush1.bf16.msra.mxu0 0
  %3710 = vmatprep.subr.bf16.mxu0 0
  %3711 = vmatpush1.bf16.msra.mxu0 0
  %3712 = vmatprep.subr.bf16.mxu0 0
  %3713 = vmatpush1.bf16.msra.mxu0 0
  %3714 = vmatprep.subr.bf16.mxu0 0
  %3715 = vmatpush1.bf16.msra.mxu0 0
  %3716 = vmatprep.subr.bf16.mxu0 0
  %3717 = vmatpush1.bf16.msra.mxu0 0
  %3718 = vmatprep.subr.bf16.mxu0 0
  %3719 = vmatpush1.bf16.msra.mxu0 0
  %3720 = vmatprep.subr.bf16.mxu0 0
  %3721 = vmatpush1.bf16.msra.mxu0 0
  %3722 = vmatprep.mubr.bf16.mxu0 0
  %3723 = vmatmul.mubr.bf16.gmra.mrb[0].mxu0 %v3497
  %v3724 = vpop.f32.mrb[0].mxu0
  %v3725 = vadd.f32 0.0, %v3724
  %v3726 = vpop.f32.mrb[0].mxu0
  %v3727 = vadd.f32 0.0, %v3726
  %v3728 = vpop.f32.mrb[0].mxu0
  %v3729 = vpop.f32.mrb[0].mxu0
  %3730 = vdwg.mxu0
  %3731 = vmatprep.subr.bf16.mxu0 %v3629
  %3732 = vmatpush1.bf16.msra.mxu0 %v3628
  %3733 = vmatprep.subr.bf16.mxu0 %v3633
  %3734 = vmatpush1.bf16.msra.mxu0 %v3632
  %3735 = vmatprep.subr.bf16.mxu0 %v3637
  %3736 = vmatpush1.bf16.msra.mxu0 %v3636
  %3737 = vmatprep.subr.bf16.mxu0 %v3641
  %3738 = vmatpush1.bf16.msra.mxu0 %v3640
  %3739 = vmatprep.subr.bf16.mxu0 %v3645
  %3740 = vmatpush1.bf16.msra.mxu0 %v3644
  %3741 = vmatprep.subr.bf16.mxu0 %v3649
  %3742 = vmatpush1.bf16.msra.mxu0 %v3648
  %3743 = vmatprep.subr.bf16.mxu0 %v3653
  %3744 = vmatpush1.bf16.msra.mxu0 %v3652
  %3745 = vmatprep.subr.bf16.mxu0 %v3657
  %3746 = vmatpush1.bf16.msra.mxu0 %v3656
  %3747 = vmatprep.subr.bf16.mxu0 0
  %3748 = vmatpush1.bf16.msra.mxu0 0
  %3749 = vmatprep.subr.bf16.mxu0 0
  %3750 = vmatpush1.bf16.msra.mxu0 0
  %3751 = vmatprep.subr.bf16.mxu0 0
  %3752 = vmatpush1.bf16.msra.mxu0 0
  %3753 = vmatprep.subr.bf16.mxu0 0
  %3754 = vmatpush1.bf16.msra.mxu0 0
  %3755 = vmatprep.subr.bf16.mxu0 0
  %3756 = vmatpush1.bf16.msra.mxu0 0
  %3757 = vmatprep.subr.bf16.mxu0 0
  %3758 = vmatpush1.bf16.msra.mxu0 0
  %3759 = vmatprep.subr.bf16.mxu0 0
  %3760 = vmatpush1.bf16.msra.mxu0 0
  %3761 = vmatprep.subr.bf16.mxu0 0
  %3762 = vmatpush1.bf16.msra.mxu0 0
  %3763 = vmatprep.mubr.bf16.mxu0 0
  %3764 = vmatmul.mubr.bf16.gmra.mrb[0].mxu0 %v3497
  %v3765 = vpop.f32.mrb[0].mxu0
  %v3766 = vadd.f32 0.0, %v3765
  %v3767 = vpop.f32.mrb[0].mxu0
  %v3768 = vadd.f32 0.0, %v3767
  %v3769 = vpop.f32.mrb[0].mxu0
  %v3770 = vpop.f32.mrb[0].mxu0
  %3771 = vdwg.mxu0
  %v3773 = vlaneseq
  %v3774 = vshrl.u32 %v3773, 7
  %v3775 = vsub.s32 0, %v3774
  %v3776 = vrot.slane %v3496, %v3775
  %v3777 = vlaneseq
  %v3778 = vshrl.u32 %v3777, 7
  %v3779 = vsub.s32 1, %v3778
  %v3780 = vrot.slane %v3496, %v3779
  %v3781 = vlaneseq
  %v3782 = vshrl.u32 %v3781, 7
  %v3783 = vsub.s32 2, %v3782
  %v3784 = vrot.slane %v3496, %v3783
  %v3785 = vlaneseq
  %v3786 = vshrl.u32 %v3785, 7
  %v3787 = vsub.s32 3, %v3786
  %v3788 = vrot.slane %v3496, %v3787
  %v3793 = vadd.f32 %v3776, %v3725
  %v3794 = vadd.f32 %v3780, %v3727
  %v3795 = vadd.f32 %v3784, %v3766
  %v3796 = vadd.f32 %v3788, %v3768
  %v3797 = vld [vmem:[%s4] sm:$0xff]
  %v3798 = vld [vmem:[%s4 + $0x8] sm:$0xff]
  %v3799 = vld [vmem:[%s4 + $0x10] sm:$0xff]
  %v3800 = vld [vmem:[%s4 + $0x18] sm:$0xff]
  %v3801 = vld [vmem:[%s4 + $0x20] sm:$0xff]
  %v3802 = vld [vmem:[%s4 + $0x28] sm:$0xff]
  %v3803 = vld [vmem:[%s4 + $0x30] sm:$0xff]
  %v3804 = vld [vmem:[%s4 + $0x38] sm:$0xff]
  %v3805 = vld [vmem:[%s4 + $0x40] sm:$0xff]
  %v3806 = vld [vmem:[%s4 + $0x48] sm:$0xff]
  %v3807 = vld [vmem:[%s4 + $0x50] sm:$0xff]
  %v3808 = vld [vmem:[%s4 + $0x58] sm:$0xff]
  %v3809 = vld [vmem:[%s4 + $0x60] sm:$0xff]
  %v3810 = vld [vmem:[%s4 + $0x68] sm:$0xff]
  %v3811 = vld [vmem:[%s4 + $0x70] sm:$0xff]
  %v3812 = vld [vmem:[%s4 + $0x78] sm:$0xff]
  %v3813 = vld [vmem:[%s4 + $0x80] sm:$0xff]
  %v3814 = vld [vmem:[%s4 + $0x88] sm:$0xff]
  %v3815 = vld [vmem:[%s4 + $0x90] sm:$0xff]
  %v3816 = vld [vmem:[%s4 + $0x98] sm:$0xff]
  %v3817 = vld [vmem:[%s4 + $0xa0] sm:$0xff]
  %v3818 = vld [vmem:[%s4 + $0xa8] sm:$0xff]
  %v3819 = vld [vmem:[%s4 + $0xb0] sm:$0xff]
  %v3820 = vld [vmem:[%s4 + $0xb8] sm:$0xff]
  %v3821 = vld [vmem:[%s4 + $0xc0] sm:$0xff]
  %v3822 = vld [vmem:[%s4 + $0xc8] sm:$0xff]
  %v3823 = vld [vmem:[%s4 + $0xd0] sm:$0xff]
  %v3824 = vld [vmem:[%s4 + $0xd8] sm:$0xff]
  %v3825 = vld [vmem:[%s4 + $0xe0] sm:$0xff]
  %v3826 = vld [vmem:[%s4 + $0xe8] sm:$0xff]
  %v3827 = vld [vmem:[%s4 + $0xf0] sm:$0xff]
  %v3828 = vld [vmem:[%s4 + $0xf8] sm:$0xff]
  %v3861 = vunpack.c.l.b16 %v3797
  %v3862 = vunpack.c.h.b16 %v3797
  %v3863 = vunpack.c.l.b16 %v3798
  %v3864 = vunpack.c.h.b16 %v3798
  %v3865 = vunpack.c.l.b16 %v3799
  %v3866 = vunpack.c.h.b16 %v3799
  %v3867 = vunpack.c.l.b16 %v3800
  %v3868 = vunpack.c.h.b16 %v3800
  %v3869 = vunpack.c.l.b16 %v3801
  %v3870 = vunpack.c.h.b16 %v3801
  %v3871 = vunpack.c.l.b16 %v3802
  %v3872 = vunpack.c.h.b16 %v3802
  %v3873 = vunpack.c.l.b16 %v3803
  %v3874 = vunpack.c.h.b16 %v3803
  %v3875 = vunpack.c.l.b16 %v3804
  %v3876 = vunpack.c.h.b16 %v3804
  %v3877 = vunpack.c.l.b16 %v3805
  %v3878 = vunpack.c.h.b16 %v3805
  %v3879 = vunpack.c.l.b16 %v3806
  %v3880 = vunpack.c.h.b16 %v3806
  %v3881 = vunpack.c.l.b16 %v3807
  %v3882 = vunpack.c.h.b16 %v3807
  %v3883 = vunpack.c.l.b16 %v3808
  %v3884 = vunpack.c.h.b16 %v3808
  %v3885 = vunpack.c.l.b16 %v3809
  %v3886 = vunpack.c.h.b16 %v3809
  %v3887 = vunpack.c.l.b16 %v3810
  %v3888 = vunpack.c.h.b16 %v3810
  %v3889 = vunpack.c.l.b16 %v3811
  %v3890 = vunpack.c.h.b16 %v3811
  %v3891 = vunpack.c.l.b16 %v3812
  %v3892 = vunpack.c.h.b16 %v3812
  %v3893 = vunpack.c.l.b16 %v3813
  %v3894 = vunpack.c.h.b16 %v3813
  %v3895 = vunpack.c.l.b16 %v3814
  %v3896 = vunpack.c.h.b16 %v3814
  %v3897 = vunpack.c.l.b16 %v3815
  %v3898 = vunpack.c.h.b16 %v3815
  %v3899 = vunpack.c.l.b16 %v3816
  %v3900 = vunpack.c.h.b16 %v3816
  %v3901 = vunpack.c.l.b16 %v3817
  %v3902 = vunpack.c.h.b16 %v3817
  %v3903 = vunpack.c.l.b16 %v3818
  %v3904 = vunpack.c.h.b16 %v3818
  %v3905 = vunpack.c.l.b16 %v3819
  %v3906 = vunpack.c.h.b16 %v3819
  %v3907 = vunpack.c.l.b16 %v3820
  %v3908 = vunpack.c.h.b16 %v3820
  %v3909 = vunpack.c.l.b16 %v3821
  %v3910 = vunpack.c.h.b16 %v3821
  %v3911 = vunpack.c.l.b16 %v3822
  %v3912 = vunpack.c.h.b16 %v3822
  %v3913 = vunpack.c.l.b16 %v3823
  %v3914 = vunpack.c.h.b16 %v3823
  %v3915 = vunpack.c.l.b16 %v3824
  %v3916 = vunpack.c.h.b16 %v3824
  %v3917 = vunpack.c.l.b16 %v3825
  %v3918 = vunpack.c.h.b16 %v3825
  %v3919 = vunpack.c.l.b16 %v3826
  %v3920 = vunpack.c.h.b16 %v3826
  %v3921 = vunpack.c.l.b16 %v3827
  %v3922 = vunpack.c.h.b16 %v3827
  %v3923 = vunpack.c.l.b16 %v3828
  %v3924 = vunpack.c.h.b16 %v3828
  %v3925 = vpack.c.b16 %v3865, %v3861
  %v3926 = vpack.c.b16 %v3866, %v3862
  %v3927 = vpack.c.b16 %v3867, %v3863
  %v3928 = vpack.c.b16 %v3868, %v3864
  %v3929 = vpack.c.b16 %v3873, %v3869
  %v3930 = vpack.c.b16 %v3874, %v3870
  %v3931 = vpack.c.b16 %v3875, %v3871
  %v3932 = vpack.c.b16 %v3876, %v3872
  %v3933 = vpack.c.b16 %v3881, %v3877
  %v3934 = vpack.c.b16 %v3882, %v3878
  %v3935 = vpack.c.b16 %v3883, %v3879
  %v3936 = vpack.c.b16 %v3884, %v3880
  %v3937 = vpack.c.b16 %v3889, %v3885
  %v3938 = vpack.c.b16 %v3890, %v3886
  %v3939 = vpack.c.b16 %v3891, %v3887
  %v3940 = vpack.c.b16 %v3892, %v3888
  %v3941 = vpack.c.b16 %v3897, %v3893
  %v3942 = vpack.c.b16 %v3898, %v3894
  %v3943 = vpack.c.b16 %v3899, %v3895
  %v3944 = vpack.c.b16 %v3900, %v3896
  %v3945 = vpack.c.b16 %v3905, %v3901
  %v3946 = vpack.c.b16 %v3906, %v3902
  %v3947 = vpack.c.b16 %v3907, %v3903
  %v3948 = vpack.c.b16 %v3908, %v3904
  %v3949 = vpack.c.b16 %v3913, %v3909
  %v3950 = vpack.c.b16 %v3914, %v3910
  %v3951 = vpack.c.b16 %v3915, %v3911
  %v3952 = vpack.c.b16 %v3916, %v3912
  %v3953 = vpack.c.b16 %v3921, %v3917
  %v3954 = vpack.c.b16 %v3922, %v3918
  %v3955 = vpack.c.b16 %v3923, %v3919
  %v3956 = vpack.c.b16 %v3924, %v3920
  %3989 = vmatprep.subr.bf16.mxu0 %v3926
  %3990 = vmatpush1.bf16.msra.mxu0 %v3925
  %3991 = vmatprep.subr.bf16.mxu0 %v3930
  %3992 = vmatpush1.bf16.msra.mxu0 %v3929
  %3993 = vmatprep.subr.bf16.mxu0 %v3934
  %3994 = vmatpush1.bf16.msra.mxu0 %v3933
  %3995 = vmatprep.subr.bf16.mxu0 %v3938
  %3996 = vmatpush1.bf16.msra.mxu0 %v3937
  %3997 = vmatprep.subr.bf16.mxu0 %v3942
  %3998 = vmatpush1.bf16.msra.mxu0 %v3941
  %3999 = vmatprep.subr.bf16.mxu0 %v3946
  %4000 = vmatpush1.bf16.msra.mxu0 %v3945
  %4001 = vmatprep.subr.bf16.mxu0 %v3950
  %4002 = vmatpush1.bf16.msra.mxu0 %v3949
  %4003 = vmatprep.subr.bf16.mxu0 %v3954
  %4004 = vmatpush1.bf16.msra.mxu0 %v3953
  %4005 = vmatprep.subr.bf16.mxu0 0
  %4006 = vmatpush1.bf16.msra.mxu0 0
  %4007 = vmatprep.subr.bf16.mxu0 0
  %4008 = vmatpush1.bf16.msra.mxu0 0
  %4009 = vmatprep.subr.bf16.mxu0 0
  %4010 = vmatpush1.bf16.msra.mxu0 0
  %4011 = vmatprep.subr.bf16.mxu0 0
  %4012 = vmatpush1.bf16.msra.mxu0 0
  %4013 = vmatprep.subr.bf16.mxu0 0
  %4014 = vmatpush1.bf16.msra.mxu0 0
  %4015 = vmatprep.subr.bf16.mxu0 0
  %4016 = vmatpush1.bf16.msra.mxu0 0
  %4017 = vmatprep.subr.bf16.mxu0 0
  %4018 = vmatpush1.bf16.msra.mxu0 0
  %4019 = vmatprep.subr.bf16.mxu0 0
  %4020 = vmatpush1.bf16.msra.mxu0 0
  %4021 = vmatprep.mubr.bf16.mxu0 0
  %4022 = vmatmul.mubr.bf16.gmra.mrb[0].mxu0 %v3052
  %v4023 = vpop.f32.mrb[0].mxu0
  %v4024 = vadd.f32 0.0, %v4023
  %v4025 = vpop.f32.mrb[0].mxu0
  %v4026 = vadd.f32 0.0, %v4025
  %v4027 = vpop.f32.mrb[0].mxu0
  %v4028 = vpop.f32.mrb[0].mxu0
  %4029 = vdwg.mxu0
  %4030 = vmatprep.subr.bf16.mxu0 %v3928
  %4031 = vmatpush1.bf16.msra.mxu0 %v3927
  %4032 = vmatprep.subr.bf16.mxu0 %v3932
  %4033 = vmatpush1.bf16.msra.mxu0 %v3931
  %4034 = vmatprep.subr.bf16.mxu0 %v3936
  %4035 = vmatpush1.bf16.msra.mxu0 %v3935
  %4036 = vmatprep.subr.bf16.mxu0 %v3940
  %4037 = vmatpush1.bf16.msra.mxu0 %v3939
  %4038 = vmatprep.subr.bf16.mxu0 %v3944
  %4039 = vmatpush1.bf16.msra.mxu0 %v3943
  %4040 = vmatprep.subr.bf16.mxu0 %v3948
  %4041 = vmatpush1.bf16.msra.mxu0 %v3947
  %4042 = vmatprep.subr.bf16.mxu0 %v3952
  %4043 = vmatpush1.bf16.msra.mxu0 %v3951
  %4044 = vmatprep.subr.bf16.mxu0 %v3956
  %4045 = vmatpush1.bf16.msra.mxu0 %v3955
  %4046 = vmatprep.subr.bf16.mxu0 0
  %4047 = vmatpush1.bf16.msra.mxu0 0
  %4048 = vmatprep.subr.bf16.mxu0 0
  %4049 = vmatpush1.bf16.msra.mxu0 0
  %4050 = vmatprep.subr.bf16.mxu0 0
  %4051 = vmatpush1.bf16.msra.mxu0 0
  %4052 = vmatprep.subr.bf16.mxu0 0
  %4053 = vmatpush1.bf16.msra.mxu0 0
  %4054 = vmatprep.subr.bf16.mxu0 0
  %4055 = vmatpush1.bf16.msra.mxu0 0
  %4056 = vmatprep.subr.bf16.mxu0 0
  %4057 = vmatpush1.bf16.msra.mxu0 0
  %4058 = vmatprep.subr.bf16.mxu0 0
  %4059 = vmatpush1.bf16.msra.mxu0 0
  %4060 = vmatprep.subr.bf16.mxu0 0
  %4061 = vmatpush1.bf16.msra.mxu0 0
  %4062 = vmatprep.mubr.bf16.mxu0 0
  %4063 = vmatmul.mubr.bf16.gmra.mrb[0].mxu0 %v3052
  %v4064 = vpop.f32.mrb[0].mxu0
  %v4065 = vadd.f32 0.0, %v4064
  %v4066 = vpop.f32.mrb[0].mxu0
  %v4067 = vadd.f32 0.0, %v4066
  %v4068 = vpop.f32.mrb[0].mxu0
  %v4069 = vpop.f32.mrb[0].mxu0
  %4070 = vdwg.mxu0
  %v4071 = vadd.f32 %v3793, %v4024
  %v4072 = vadd.f32 %v3794, %v4026
  %v4073 = vadd.f32 %v3795, %v4065
  %v4074 = vadd.f32 %v3796, %v4067
  %v4075 = vxor.u32 %v4071, 2147483648
  %v4076 = vmul.f32 %v4075, 1.442695
  %v4077 = vpow.pop %v4076
  %v4078 = vadd.f32 %v4077, 1.0
  %v4079 = vrcp.pop %v4078
  %v4080 = vmul.f32 1.0, %v4079
  %v4081 = vxor.u32 %v4072, 2147483648
  %v4082 = vmul.f32 %v4081, 1.442695
  %v4083 = vpow.pop %v4082
  %v4084 = vadd.f32 %v4083, 1.0
  %v4085 = vrcp.pop %v4084
  %v4086 = vmul.f32 1.0, %v4085
  %v4087 = vtanh.pop %v4073
  %v4088 = vxor.u32 %v4074, 2147483648
  %v4089 = vmul.f32 %v4088, 1.442695
  %v4090 = vpow.pop %v4089
  %v4091 = vadd.f32 %v4090, 1.0
  %v4092 = vrcp.pop %v4091
  %v4093 = vmul.f32 1.0, %v4092
  %v4094 = vmul.f32 %v4086, %v3049
  %v4095 = vmul.f32 %v4080, %v4087
  %v4096 = vadd.f32 %v4094, %v4095
  %v4097 = vtanh.pop %v4096
  %v4098 = vmul.f32 %v4093, %v4097
  %v4099 = vpack.c.bf16 %v4098, %v4098
  %v4100 = vld [vmem:[%s5] sm:$0xf]
  %v4101 = vld [vmem:[%s5 + $0x4] sm:$0xf]
  %v4102 = vld [vmem:[%s5 + $0x8] sm:$0xf]
  %v4103 = vld [vmem:[%s5 + $0xc] sm:$0xf]
  %v4104 = vld [vmem:[%s5 + $0x10] sm:$0xf]
  %v4105 = vld [vmem:[%s5 + $0x14] sm:$0xf]
  %v4106 = vld [vmem:[%s5 + $0x18] sm:$0xf]
  %v4107 = vld [vmem:[%s5 + $0x1c] sm:$0xf]
  %v4108 = vld [vmem:[%s5 + $0x20] sm:$0xf]
  %v4109 = vld [vmem:[%s5 + $0x24] sm:$0xf]
  %v4110 = vld [vmem:[%s5 + $0x28] sm:$0xf]
  %v4111 = vld [vmem:[%s5 + $0x2c] sm:$0xf]
  %v4112 = vld [vmem:[%s5 + $0x30] sm:$0xf]
  %v4113 = vld [vmem:[%s5 + $0x34] sm:$0xf]
  %v4114 = vld [vmem:[%s5 + $0x38] sm:$0xf]
  %v4115 = vld [vmem:[%s5 + $0x3c] sm:$0xf]
  %v4116 = vld [vmem:[%s6] sm:$0x1]
  %v4118 = vlaneseq
  %v4119 = vshrl.u32 %v4118, 7
  %v4120 = vsub.s32 0, %v4119
  %v4121 = vrot.slane %v4116, %v4120
  %v4139 = vunpack.c.l.b16 %v4100
  %v4140 = vunpack.c.l.b16 %v4101
  %v4141 = vunpack.c.l.b16 %v4102
  %v4142 = vunpack.c.l.b16 %v4103
  %v4143 = vunpack.c.l.b16 %v4104
  %v4144 = vunpack.c.l.b16 %v4105
  %v4145 = vunpack.c.l.b16 %v4106
  %v4146 = vunpack.c.l.b16 %v4107
  %v4147 = vunpack.c.l.b16 %v4108
  %v4148 = vunpack.c.l.b16 %v4109
  %v4149 = vunpack.c.l.b16 %v4110
  %v4150 = vunpack.c.l.b16 %v4111
  %v4151 = vunpack.c.l.b16 %v4112
  %v4152 = vunpack.c.l.b16 %v4113
  %v4153 = vunpack.c.l.b16 %v4114
  %v4154 = vunpack.c.l.b16 %v4115
  %v4155 = vpack.c.b16 %v4140, %v4139
  %v4156 = vpack.c.b16 %v4142, %v4141
  %v4157 = vpack.c.b16 %v4144, %v4143
  %v4158 = vpack.c.b16 %v4146, %v4145
  %v4159 = vpack.c.b16 %v4148, %v4147
  %v4160 = vpack.c.b16 %v4150, %v4149
  %v4161 = vpack.c.b16 %v4152, %v4151
  %v4162 = vpack.c.b16 %v4154, %v4153
  %4171 = vmatprep.subr.bf16.mxu0 0
  %4172 = vmatpush1.bf16.msra.mxu0 %v4155
  %4173 = vmatprep.subr.bf16.mxu0 0
  %4174 = vmatpush1.bf16.msra.mxu0 %v4156
  %4175 = vmatprep.subr.bf16.mxu0 0
  %4176 = vmatpush1.bf16.msra.mxu0 %v4157
  %4177 = vmatprep.subr.bf16.mxu0 0
  %4178 = vmatpush1.bf16.msra.mxu0 %v4158
  %4179 = vmatprep.subr.bf16.mxu0 0
  %4180 = vmatpush1.bf16.msra.mxu0 %v4159
  %4181 = vmatprep.subr.bf16.mxu0 0
  %4182 = vmatpush1.bf16.msra.mxu0 %v4160
  %4183 = vmatprep.subr.bf16.mxu0 0
  %4184 = vmatpush1.bf16.msra.mxu0 %v4161
  %4185 = vmatprep.subr.bf16.mxu0 0
  %4186 = vmatpush1.bf16.msra.mxu0 %v4162
  %4187 = vmatprep.subr.bf16.mxu0 0
  %4188 = vmatpush1.bf16.msra.mxu0 0
  %4189 = vmatprep.subr.bf16.mxu0 0
  %4190 = vmatpush1.bf16.msra.mxu0 0
  %4191 = vmatprep.subr.bf16.mxu0 0
  %4192 = vmatpush1.bf16.msra.mxu0 0
  %4193 = vmatprep.subr.bf16.mxu0 0
  %4194 = vmatpush1.bf16.msra.mxu0 0
  %4195 = vmatprep.subr.bf16.mxu0 0
  %4196 = vmatpush1.bf16.msra.mxu0 0
  %4197 = vmatprep.subr.bf16.mxu0 0
  %4198 = vmatpush1.bf16.msra.mxu0 0
  %4199 = vmatprep.subr.bf16.mxu0 0
  %4200 = vmatpush1.bf16.msra.mxu0 0
  %4201 = vmatprep.subr.bf16.mxu0 0
  %4202 = vmatpush1.bf16.msra.mxu0 0
  %4203 = vmatprep.mubr.bf16.mxu0 0
  %4204 = vmatmul.mubr.bf16.gmra.mrb[0].mxu0 %v4099
  %v4205 = vpop.f32.mrb[0].mxu0
  %v4206 = vadd.f32 %v4121, %v4205
  %v4207 = vpop.f32.mrb[0].mxu0
  %v4208 = vpop.f32.mrb[0].mxu0
  %v4209 = vpop.f32.mrb[0].mxu0
  %4210 = vdwg.mxu0
  %s4211 = scalar_lea.vmem %s7, 6
  %4212 = vst [vmem:[%s4211] sm:$0x3] %v4206
  // Predicated region
  $region30: #{lstm_forward.3} parent=0 // pred_check
    _
  $region31: #{lstm_forward.3} parent=0 // pred_check_branch
    %4214 = sbr.rel (0) target = $region33
  $region32: #{lstm_forward.3} parent=0 // pred_region
    _
  $region33: #{lstm_forward.3} parent=0 // pred_fallthru
    _
  // Predicated region
  $region34: #{lstm_forward.3} parent=0 // pred_check
    _
  $region35: #{lstm_forward.3} parent=0 // pred_check_branch
    %4216 = sbr.rel (0) target = $region37
  $region36: #{lstm_forward.3} parent=0 // pred_region
    _
  $region37: #{lstm_forward.3} parent=0 // pred_fallthru
    _

</llo_original>
